<compile_context>
chip_gen: v7x
topology: tpu7x:2x2x1
jax: 0.10.0
libtpu: 0.0.40
codegen_flags: <defaults>
</compile_context>

<pallas_src>
import jax
import jax.numpy as jnp
from jax.experimental import pallas as pl
from jax.experimental.pallas import tpu as pltpu

# ---------------- model config ----------------
D_IN = 9          # points(3) + view_dirs(3) + normals(3), mode="idr"
D_FEATURE = 32
D_OUT = 3
D_HIDDEN = 64
N_LAYERS = 4
N_LIN = N_LAYERS + 1            # number of Linear layers (num_layers - 1)
OUTPUT_BIAS = 0.0
OUTPUT_SCALE = 1.0
SQUEEZE_OUT = True
SQUEEZE_OUT_SCALE = 1.0

DEFAULT_TM = 4096               # rays per grid step (sweep 2048..8192 if desired)


def _round_up(x, m):
    return ((x + m - 1) // m) * m


def _choose_tm(n):
    """Pick a ray tile: big to amortize per-step overhead, but keep >=2 grid
    steps (megacore on v7x) and sublane (8) alignment."""
    if n >= 2 * DEFAULT_TM:
        return DEFAULT_TM
    return max(8, _round_up(-(-n // 2), 8))   # ceil(n/2), rounded up to 8


# ---------------- kernel ----------------
def _render_mlp_kernel(p_ref, v_ref, n_ref, f_ref,
                       w0p_ref, w0v_ref, w0n_ref, w0f_ref, b0_ref,
                       w1_ref, b1_ref, w2_ref, b2_ref,
                       w3_ref, b3_ref, w4_ref, b4_ref,
                       o_ref):
    f32 = jnp.float32
    bf16 = jnp.bfloat16

    def mm(a, w_ref):
        # bf16 MXU operands, f32 accumulation.
        return jnp.dot(a, w_ref[...], preferred_element_type=f32)

    # Layer 0: x @ W0 as a sum of partial matmuls against row-slices of W0,
    # one per (un-concatenated) input tensor.  Accumulate in f32.
    x = (mm(p_ref[...], w0p_ref) + mm(v_ref[...], w0v_ref) +
         mm(n_ref[...], w0n_ref) + mm(f_ref[...], w0f_ref) + b0_ref[...])
    x = jnp.maximum(x, 0.0)

    # Hidden layers (ReLU). Elementwise math stays f32 (v5e has no bf16 VPU);
    # only the MXU operands are recast to bf16.
    for w_ref, b_ref in ((w1_ref, b1_ref), (w2_ref, b2_ref), (w3_ref, b3_ref)):
        x = mm(x.astype(bf16), w_ref) + b_ref[...]
        x = jnp.maximum(x, 0.0)

    # Output layer + epilogue (f32).
    x = mm(x.astype(bf16), w4_ref) + b4_ref[...]
    x = OUTPUT_SCALE * (x + OUTPUT_BIAS)
    if SQUEEZE_OUT:
        x = SQUEEZE_OUT_SCALE * jax.nn.sigmoid(x)
    o_ref[...] = x.astype(o_ref.dtype)


# ---------------- wrapper ----------------
def rendering_network_forward(points, normals, view_dirs, geo_f, params):
    """params: list of (W_eff(in,out), b(out,)) per linear layer (weight-norm applied)."""
    n = points.shape[0]
    tm = _choose_tm(n)
    n_pad = _round_up(n, tm)

    def prep(a):
        a = a.astype(jnp.bfloat16)                    # halve HBM->VMEM bytes
        if n_pad != n:
            a = jnp.pad(a, ((0, n_pad - n), (0, 0)))  # pad-and-slice path
        return a

    p = prep(points)
    v = prep(view_dirs)
    nm = prep(normals)
    f = prep(geo_f)

    (w0, b0), (w1, b1), (w2, b2), (w3, b3), (w4, b4) = params
    w0 = w0.astype(jnp.bfloat16)
    # Row-slices of W0 matching the [points, view_dirs, normals, geo_f] concat order.
    w0p, w0v, w0n, w0f = w0[0:3], w0[3:6], w0[6:9], w0[9:]
    w1, w2, w3, w4 = (w.astype(jnp.bfloat16) for w in (w1, w2, w3, w4))
    b0, b1, b2, b3, b4 = (b.reshape(1, -1).astype(jnp.float32)
                          for b in (b0, b1, b2, b3, b4))

    def act_spec(d):
        return pl.BlockSpec((tm, d), lambda i: (i, 0))     # tiled over rays

    def full_spec(a):
        return pl.BlockSpec(a.shape, lambda i: (0, 0))     # resident weights/biases

    weights = (w0p, w0v, w0n, w0f, b0, w1, b1, w2, b2, w3, b3, w4, b4)
    in_specs = ([act_spec(3), act_spec(3), act_spec(3), act_spec(D_FEATURE)]
                + [full_spec(a) for a in weights])

    out = pl.pallas_call(
        _render_mlp_kernel,
        out_shape=jax.ShapeDtypeStruct((n_pad, D_OUT), jnp.float32),
        grid_spec=pltpu.PrefetchScalarGridSpec(
            num_scalar_prefetch=0,
            grid=(n_pad // tm,),
            in_specs=in_specs,
            out_specs=pl.BlockSpec((tm, D_OUT), lambda i: (i, 0)),
        ),
        compiler_params=pltpu.CompilerParams(
            dimension_semantics=("parallel",),
        ),
    )(p, v, nm, f, *weights)
    return out[:n]


# ---------------- parameter construction (deterministic, weight-norm) ----------------
def make_params(key):
    dims = [D_IN + D_FEATURE] + [D_HIDDEN] * N_LAYERS + [D_OUT]
    params = []
    for l in range(len(dims) - 1):
        in_dim, out_dim = dims[l], dims[l + 1]
        key, kv_, kg, kb = jax.random.split(key, 4)
        v = jax.random.normal(kv_, (out_dim, in_dim), jnp.float32) * 0.1    # weight_v
        g = jax.random.uniform(kg, (out_dim, 1), jnp.float32, 0.5, 1.5)     # weight_g
        b = jax.random.normal(kb, (out_dim,), jnp.float32) * 0.01
        # nn.utils.weight_norm (dim=0): W = g * v / ||v||_row
        w_eff = g * v / jnp.linalg.norm(v, axis=1, keepdims=True)
        params.append((w_eff.T, b))    # store transposed: (in_dim, out_dim)
    return params


# ---------------- references ----------------
def reference_forward_f32(points, normals, view_dirs, geo_f, params):
    x = jnp.concatenate([points, view_dirs, normals, geo_f], axis=-1)
    for l, (w, b) in enumerate(params):
        x = x @ w + b
        if l < len(params) - 1:
            x = jnp.maximum(x, 0.0)
    x = OUTPUT_SCALE * (x + OUTPUT_BIAS)
    if SQUEEZE_OUT:
        x = SQUEEZE_OUT_SCALE * jax.nn.sigmoid(x)
    return x


def reference_forward_bf16(points, normals, view_dirs, geo_f, params):
    """Emulates the kernel's mixed precision: bf16 MXU operands, f32 accumulation
    and f32 elementwise epilogue."""
    x = jnp.concatenate([points, view_dirs, normals, geo_f],
                        axis=-1).astype(jnp.bfloat16)
    y = None
    for l, (w, b) in enumerate(params):
        y = jnp.dot(x, w.astype(jnp.bfloat16),
                    preferred_element_type=jnp.float32) + b
        if l < len(params) - 1:
            x = jnp.maximum(y, 0.0).astype(jnp.bfloat16)
    y = OUTPUT_SCALE * (y + OUTPUT_BIAS)
    if SQUEEZE_OUT:
        y = SQUEEZE_OUT_SCALE * jax.nn.sigmoid(y)
    return y


if __name__ == "__main__":
    key = jax.random.PRNGKey(0)
    key, kp, kn, kv, kf = jax.random.split(key, 5)
    N = 1000  # not a multiple of the tile -> exercises pad-and-slice; grid has 2 steps

    points = jax.random.normal(kp, (N, 3), jnp.float32)
    normals = jax.random.normal(kn, (N, 3), jnp.float32)
    view_dirs = jax.random.normal(kv, (N, 3), jnp.float32)
    geo_f = jax.random.normal(kf, (N, D_FEATURE), jnp.float32)

    params = make_params(key)

    out = rendering_network_forward(points, normals, view_dirs, geo_f, params)
    out = jax.block_until_ready(out)
    assert out.shape == (N, D_OUT)
    assert jnp.all(jnp.isfinite(out)), "non-finite output"

    # Tight check against a reference doing the same mixed-precision math.
    ref_bf16 = reference_forward_bf16(points, normals, view_dirs, geo_f, params)
    assert jnp.allclose(out, ref_bf16, atol=5e-3, rtol=5e-3), \
        "Pallas output mismatch vs bf16-math JAX reference"

    # Loose check against the full-f32 module semantics (bf16 transport error).
    ref_f32 = reference_forward_f32(points, normals, view_dirs, geo_f, params)
    assert jnp.allclose(out, ref_f32, atol=5e-2, rtol=5e-2), \
        "Pallas output mismatch vs f32 JAX reference"

    print("KERNEL_OK")
</pallas_src>

<mosaic_0001>
module attributes {stable_mosaic.version = 11 : i64} {
  func.func @_render_mlp_kernel(%arg0: i32, %arg1: memref<504x3xbf16, #tpu.memory_space<vmem>>, %arg2: memref<504x3xbf16, #tpu.memory_space<vmem>>, %arg3: memref<504x3xbf16, #tpu.memory_space<vmem>>, %arg4: memref<504x32xbf16, #tpu.memory_space<vmem>>, %arg5: memref<3x64xbf16, #tpu.memory_space<vmem>>, %arg6: memref<3x64xbf16, #tpu.memory_space<vmem>>, %arg7: memref<3x64xbf16, #tpu.memory_space<vmem>>, %arg8: memref<32x64xbf16, #tpu.memory_space<vmem>>, %arg9: memref<1x64xf32, #tpu.memory_space<vmem>>, %arg10: memref<64x64xbf16, #tpu.memory_space<vmem>>, %arg11: memref<1x64xf32, #tpu.memory_space<vmem>>, %arg12: memref<64x64xbf16, #tpu.memory_space<vmem>>, %arg13: memref<1x64xf32, #tpu.memory_space<vmem>>, %arg14: memref<64x64xbf16, #tpu.memory_space<vmem>>, %arg15: memref<1x64xf32, #tpu.memory_space<vmem>>, %arg16: memref<64x3xbf16, #tpu.memory_space<vmem>>, %arg17: memref<1x3xf32, #tpu.memory_space<vmem>>, %arg18: memref<504x3xf32, #tpu.memory_space<vmem>>) attributes {dimension_semantics = [#tpu.dimension_semantics<parallel>], iteration_bounds = array<i64: 2>, scalar_prefetch = 0 : i64, scratch_operands = 0 : i64, tpu.core_type = #tpu.core_type<tc>, window_params = [{transform_indices = @transform_0, window_bounds = array<i64: 504, 3>}, {transform_indices = @transform_1, window_bounds = array<i64: 504, 3>}, {transform_indices = @transform_2, window_bounds = array<i64: 504, 3>}, {transform_indices = @transform_3, window_bounds = array<i64: 504, 32>}, {pipeline_mode = #tpu.pipeline_mode<synchronous>, transform_indices = @transform_4, window_bounds = array<i64: 3, 64>}, {pipeline_mode = #tpu.pipeline_mode<synchronous>, transform_indices = @transform_5, window_bounds = array<i64: 3, 64>}, {pipeline_mode = #tpu.pipeline_mode<synchronous>, transform_indices = @transform_6, window_bounds = array<i64: 3, 64>}, {pipeline_mode = #tpu.pipeline_mode<synchronous>, transform_indices = @transform_7, window_bounds = array<i64: 32, 64>}, {pipeline_mode = #tpu.pipeline_mode<synchronous>, transform_indices = @transform_8, window_bounds = array<i64: 1, 64>}, {pipeline_mode = #tpu.pipeline_mode<synchronous>, transform_indices = @transform_9, window_bounds = array<i64: 64, 64>}, {pipeline_mode = #tpu.pipeline_mode<synchronous>, transform_indices = @transform_10, window_bounds = array<i64: 1, 64>}, {pipeline_mode = #tpu.pipeline_mode<synchronous>, transform_indices = @transform_11, window_bounds = array<i64: 64, 64>}, {pipeline_mode = #tpu.pipeline_mode<synchronous>, transform_indices = @transform_12, window_bounds = array<i64: 1, 64>}, {pipeline_mode = #tpu.pipeline_mode<synchronous>, transform_indices = @transform_13, window_bounds = array<i64: 64, 64>}, {pipeline_mode = #tpu.pipeline_mode<synchronous>, transform_indices = @transform_14, window_bounds = array<i64: 1, 64>}, {pipeline_mode = #tpu.pipeline_mode<synchronous>, transform_indices = @transform_15, window_bounds = array<i64: 64, 3>}, {pipeline_mode = #tpu.pipeline_mode<synchronous>, transform_indices = @transform_16, window_bounds = array<i64: 1, 3>}, {transform_indices = @transform_17, window_bounds = array<i64: 504, 3>}]} {
    %c0 = arith.constant 0 : index
    %c0_0 = arith.constant 0 : index
    %0 = vector.load %arg1[%c0, %c0_0] : memref<504x3xbf16, #tpu.memory_space<vmem>>, vector<504x3xbf16>
    %c0_1 = arith.constant 0 : index
    %c0_2 = arith.constant 0 : index
    %1 = vector.load %arg5[%c0_1, %c0_2] : memref<3x64xbf16, #tpu.memory_space<vmem>>, vector<3x64xbf16>
    %cst = arith.constant dense<0.000000e+00> : vector<504x64xf32>
    %2 = tpu.matmul %0, %1, %cst {dimension_numbers = #tpu.dot_dimension_numbers<[1], [0], [0], [1], [0, 0, 1, 1], [], []>} : vector<504x3xbf16>, vector<3x64xbf16>, vector<504x64xf32> -> vector<504x64xf32>
    %c0_3 = arith.constant 0 : index
    %c0_4 = arith.constant 0 : index
    %3 = vector.load %arg2[%c0_3, %c0_4] : memref<504x3xbf16, #tpu.memory_space<vmem>>, vector<504x3xbf16>
    %c0_5 = arith.constant 0 : index
    %c0_6 = arith.constant 0 : index
    %4 = vector.load %arg6[%c0_5, %c0_6] : memref<3x64xbf16, #tpu.memory_space<vmem>>, vector<3x64xbf16>
    %cst_7 = arith.constant dense<0.000000e+00> : vector<504x64xf32>
    %5 = tpu.matmul %3, %4, %cst_7 {dimension_numbers = #tpu.dot_dimension_numbers<[1], [0], [0], [1], [0, 0, 1, 1], [], []>} : vector<504x3xbf16>, vector<3x64xbf16>, vector<504x64xf32> -> vector<504x64xf32>
    %6 = arith.addf %2, %5 : vector<504x64xf32>
    %c0_8 = arith.constant 0 : index
    %c0_9 = arith.constant 0 : index
    %7 = vector.load %arg3[%c0_8, %c0_9] : memref<504x3xbf16, #tpu.memory_space<vmem>>, vector<504x3xbf16>
    %c0_10 = arith.constant 0 : index
    %c0_11 = arith.constant 0 : index
    %8 = vector.load %arg7[%c0_10, %c0_11] : memref<3x64xbf16, #tpu.memory_space<vmem>>, vector<3x64xbf16>
    %cst_12 = arith.constant dense<0.000000e+00> : vector<504x64xf32>
    %9 = tpu.matmul %7, %8, %cst_12 {dimension_numbers = #tpu.dot_dimension_numbers<[1], [0], [0], [1], [0, 0, 1, 1], [], []>} : vector<504x3xbf16>, vector<3x64xbf16>, vector<504x64xf32> -> vector<504x64xf32>
    %10 = arith.addf %6, %9 : vector<504x64xf32>
    %c0_13 = arith.constant 0 : index
    %c0_14 = arith.constant 0 : index
    %11 = vector.load %arg4[%c0_13, %c0_14] : memref<504x32xbf16, #tpu.memory_space<vmem>>, vector<504x32xbf16>
    %c0_15 = arith.constant 0 : index
    %c0_16 = arith.constant 0 : index
    %12 = vector.load %arg8[%c0_15, %c0_16] : memref<32x64xbf16, #tpu.memory_space<vmem>>, vector<32x64xbf16>
    %cst_17 = arith.constant dense<0.000000e+00> : vector<504x64xf32>
    %13 = tpu.matmul %11, %12, %cst_17 {dimension_numbers = #tpu.dot_dimension_numbers<[1], [0], [0], [1], [0, 0, 1, 1], [], []>} : vector<504x32xbf16>, vector<32x64xbf16>, vector<504x64xf32> -> vector<504x64xf32>
    %14 = arith.addf %10, %13 : vector<504x64xf32>
    %c0_18 = arith.constant 0 : index
    %c0_19 = arith.constant 0 : index
    %15 = vector.load %arg9[%c0_18, %c0_19] : memref<1x64xf32, #tpu.memory_space<vmem>>, vector<1x64xf32>
    %16 = vector.broadcast %15 : vector<1x64xf32> to vector<504x64xf32>
    %17 = arith.addf %14, %16 : vector<504x64xf32>
    %cst_20 = arith.constant 0.000000e+00 : f32
    %18 = vector.broadcast %cst_20 : f32 to vector<504x64xf32>
    %19 = arith.maximumf %17, %18 : vector<504x64xf32>
    %20 = arith.truncf %19 : vector<504x64xf32> to vector<504x64xbf16>
    %c0_21 = arith.constant 0 : index
    %c0_22 = arith.constant 0 : index
    %21 = vector.load %arg10[%c0_21, %c0_22] : memref<64x64xbf16, #tpu.memory_space<vmem>>, vector<64x64xbf16>
    %cst_23 = arith.constant dense<0.000000e+00> : vector<504x64xf32>
    %22 = tpu.matmul %20, %21, %cst_23 {dimension_numbers = #tpu.dot_dimension_numbers<[1], [0], [0], [1], [0, 0, 1, 1], [], []>} : vector<504x64xbf16>, vector<64x64xbf16>, vector<504x64xf32> -> vector<504x64xf32>
    %c0_24 = arith.constant 0 : index
    %c0_25 = arith.constant 0 : index
    %23 = vector.load %arg11[%c0_24, %c0_25] : memref<1x64xf32, #tpu.memory_space<vmem>>, vector<1x64xf32>
    %24 = vector.broadcast %23 : vector<1x64xf32> to vector<504x64xf32>
    %25 = arith.addf %22, %24 : vector<504x64xf32>
    %cst_26 = arith.constant 0.000000e+00 : f32
    %26 = vector.broadcast %cst_26 : f32 to vector<504x64xf32>
    %27 = arith.maximumf %25, %26 : vector<504x64xf32>
    %28 = arith.truncf %27 : vector<504x64xf32> to vector<504x64xbf16>
    %c0_27 = arith.constant 0 : index
    %c0_28 = arith.constant 0 : index
    %29 = vector.load %arg12[%c0_27, %c0_28] : memref<64x64xbf16, #tpu.memory_space<vmem>>, vector<64x64xbf16>
    %cst_29 = arith.constant dense<0.000000e+00> : vector<504x64xf32>
    %30 = tpu.matmul %28, %29, %cst_29 {dimension_numbers = #tpu.dot_dimension_numbers<[1], [0], [0], [1], [0, 0, 1, 1], [], []>} : vector<504x64xbf16>, vector<64x64xbf16>, vector<504x64xf32> -> vector<504x64xf32>
    %c0_30 = arith.constant 0 : index
    %c0_31 = arith.constant 0 : index
    %31 = vector.load %arg13[%c0_30, %c0_31] : memref<1x64xf32, #tpu.memory_space<vmem>>, vector<1x64xf32>
    %32 = vector.broadcast %31 : vector<1x64xf32> to vector<504x64xf32>
    %33 = arith.addf %30, %32 : vector<504x64xf32>
    %cst_32 = arith.constant 0.000000e+00 : f32
    %34 = vector.broadcast %cst_32 : f32 to vector<504x64xf32>
    %35 = arith.maximumf %33, %34 : vector<504x64xf32>
    %36 = arith.truncf %35 : vector<504x64xf32> to vector<504x64xbf16>
    %c0_33 = arith.constant 0 : index
    %c0_34 = arith.constant 0 : index
    %37 = vector.load %arg14[%c0_33, %c0_34] : memref<64x64xbf16, #tpu.memory_space<vmem>>, vector<64x64xbf16>
    %cst_35 = arith.constant dense<0.000000e+00> : vector<504x64xf32>
    %38 = tpu.matmul %36, %37, %cst_35 {dimension_numbers = #tpu.dot_dimension_numbers<[1], [0], [0], [1], [0, 0, 1, 1], [], []>} : vector<504x64xbf16>, vector<64x64xbf16>, vector<504x64xf32> -> vector<504x64xf32>
    %c0_36 = arith.constant 0 : index
    %c0_37 = arith.constant 0 : index
    %39 = vector.load %arg15[%c0_36, %c0_37] : memref<1x64xf32, #tpu.memory_space<vmem>>, vector<1x64xf32>
    %40 = vector.broadcast %39 : vector<1x64xf32> to vector<504x64xf32>
    %41 = arith.addf %38, %40 : vector<504x64xf32>
    %cst_38 = arith.constant 0.000000e+00 : f32
    %42 = vector.broadcast %cst_38 : f32 to vector<504x64xf32>
    %43 = arith.maximumf %41, %42 : vector<504x64xf32>
    %44 = arith.truncf %43 : vector<504x64xf32> to vector<504x64xbf16>
    %c0_39 = arith.constant 0 : index
    %c0_40 = arith.constant 0 : index
    %45 = vector.load %arg16[%c0_39, %c0_40] : memref<64x3xbf16, #tpu.memory_space<vmem>>, vector<64x3xbf16>
    %cst_41 = arith.constant dense<0.000000e+00> : vector<504x3xf32>
    %46 = tpu.matmul %44, %45, %cst_41 {dimension_numbers = #tpu.dot_dimension_numbers<[1], [0], [0], [1], [0, 0, 1, 1], [], []>} : vector<504x64xbf16>, vector<64x3xbf16>, vector<504x3xf32> -> vector<504x3xf32>
    %c0_42 = arith.constant 0 : index
    %c0_43 = arith.constant 0 : index
    %47 = vector.load %arg17[%c0_42, %c0_43] : memref<1x3xf32, #tpu.memory_space<vmem>>, vector<1x3xf32>
    %48 = vector.broadcast %47 : vector<1x3xf32> to vector<504x3xf32>
    %49 = arith.addf %46, %48 : vector<504x3xf32>
    %cst_44 = arith.constant 0.000000e+00 : f32
    %50 = vector.broadcast %cst_44 : f32 to vector<504x3xf32>
    %51 = arith.addf %49, %50 : vector<504x3xf32>
    %cst_45 = arith.constant 1.000000e+00 : f32
    %52 = vector.broadcast %cst_45 : f32 to vector<504x3xf32>
    %53 = arith.mulf %52, %51 : vector<504x3xf32>
    %54 = arith.negf %53 : vector<504x3xf32>
    %55 = math.exp %54 : vector<504x3xf32>
    %cst_46 = arith.constant 1.000000e+00 : f32
    %56 = vector.broadcast %cst_46 : f32 to vector<504x3xf32>
    %57 = arith.addf %56, %55 : vector<504x3xf32>
    %58 = arith.divf %56, %57 : vector<504x3xf32>
    %cst_47 = arith.constant 1.000000e+00 : f32
    %59 = vector.broadcast %cst_47 : f32 to vector<504x3xf32>
    %60 = arith.mulf %59, %58 : vector<504x3xf32>
    %c0_48 = arith.constant 0 : index
    %c0_49 = arith.constant 0 : index
    %61 = vector.load %arg18[%c0_48, %c0_49] : memref<504x3xf32, #tpu.memory_space<vmem>>, vector<504x3xf32>
    tpu.vector_store %arg18[%c0_48, %c0_49], %60 {strides = array<i32>} : memref<504x3xf32, #tpu.memory_space<vmem>>, vector<504x3xf32>,
    return
  }
  func.func @transform_0(%arg0: i32) -> (i32, i32) {
    %c0_i32 = arith.constant 0 : i32
    %c0_i32_0 = arith.constant 0 : i32
    return %arg0, %c0_i32 : i32, i32
  }
  func.func @transform_1(%arg0: i32) -> (i32, i32) {
    %c0_i32 = arith.constant 0 : i32
    %c0_i32_0 = arith.constant 0 : i32
    return %arg0, %c0_i32 : i32, i32
  }
  func.func @transform_2(%arg0: i32) -> (i32, i32) {
    %c0_i32 = arith.constant 0 : i32
    %c0_i32_0 = arith.constant 0 : i32
    return %arg0, %c0_i32 : i32, i32
  }
  func.func @transform_3(%arg0: i32) -> (i32, i32) {
    %c0_i32 = arith.constant 0 : i32
    %c0_i32_0 = arith.constant 0 : i32
    return %arg0, %c0_i32 : i32, i32
  }
  func.func @transform_4(%arg0: i32) -> (i32, i32) {
    %c0_i32 = arith.constant 0 : i32
    %c0_i32_0 = arith.constant 0 : i32
    %c0_i32_1 = arith.constant 0 : i32
    return %c0_i32, %c0_i32_0 : i32, i32
  }
  func.func @transform_5(%arg0: i32) -> (i32, i32) {
    %c0_i32 = arith.constant 0 : i32
    %c0_i32_0 = arith.constant 0 : i32
    %c0_i32_1 = arith.constant 0 : i32
    return %c0_i32, %c0_i32_0 : i32, i32
  }
  func.func @transform_6(%arg0: i32) -> (i32, i32) {
    %c0_i32 = arith.constant 0 : i32
    %c0_i32_0 = arith.constant 0 : i32
    %c0_i32_1 = arith.constant 0 : i32
    return %c0_i32, %c0_i32_0 : i32, i32
  }
  func.func @transform_7(%arg0: i32) -> (i32, i32) {
    %c0_i32 = arith.constant 0 : i32
    %c0_i32_0 = arith.constant 0 : i32
    %c0_i32_1 = arith.constant 0 : i32
    return %c0_i32, %c0_i32_0 : i32, i32
  }
  func.func @transform_8(%arg0: i32) -> (i32, i32) {
    %c0_i32 = arith.constant 0 : i32
    %c0_i32_0 = arith.constant 0 : i32
    %c0_i32_1 = arith.constant 0 : i32
    return %c0_i32, %c0_i32_0 : i32, i32
  }
  func.func @transform_9(%arg0: i32) -> (i32, i32) {
    %c0_i32 = arith.constant 0 : i32
    %c0_i32_0 = arith.constant 0 : i32
    %c0_i32_1 = arith.constant 0 : i32
    return %c0_i32, %c0_i32_0 : i32, i32
  }
  func.func @transform_10(%arg0: i32) -> (i32, i32) {
    %c0_i32 = arith.constant 0 : i32
    %c0_i32_0 = arith.constant 0 : i32
    %c0_i32_1 = arith.constant 0 : i32
    return %c0_i32, %c0_i32_0 : i32, i32
  }
  func.func @transform_11(%arg0: i32) -> (i32, i32) {
    %c0_i32 = arith.constant 0 : i32
    %c0_i32_0 = arith.constant 0 : i32
    %c0_i32_1 = arith.constant 0 : i32
    return %c0_i32, %c0_i32_0 : i32, i32
  }
  func.func @transform_12(%arg0: i32) -> (i32, i32) {
    %c0_i32 = arith.constant 0 : i32
    %c0_i32_0 = arith.constant 0 : i32
    %c0_i32_1 = arith.constant 0 : i32
    return %c0_i32, %c0_i32_0 : i32, i32
  }
  func.func @transform_13(%arg0: i32) -> (i32, i32) {
    %c0_i32 = arith.constant 0 : i32
    %c0_i32_0 = arith.constant 0 : i32
    %c0_i32_1 = arith.constant 0 : i32
    return %c0_i32, %c0_i32_0 : i32, i32
  }
  func.func @transform_14(%arg0: i32) -> (i32, i32) {
    %c0_i32 = arith.constant 0 : i32
    %c0_i32_0 = arith.constant 0 : i32
    %c0_i32_1 = arith.constant 0 : i32
    return %c0_i32, %c0_i32_0 : i32, i32
  }
  func.func @transform_15(%arg0: i32) -> (i32, i32) {
    %c0_i32 = arith.constant 0 : i32
    %c0_i32_0 = arith.constant 0 : i32
    %c0_i32_1 = arith.constant 0 : i32
    return %c0_i32, %c0_i32_0 : i32, i32
  }
  func.func @transform_16(%arg0: i32) -> (i32, i32) {
    %c0_i32 = arith.constant 0 : i32
    %c0_i32_0 = arith.constant 0 : i32
    %c0_i32_1 = arith.constant 0 : i32
    return %c0_i32, %c0_i32_0 : i32, i32
  }
  func.func @transform_17(%arg0: i32) -> (i32, i32) {
    %c0_i32 = arith.constant 0 : i32
    %c0_i32_0 = arith.constant 0 : i32
    return %arg0, %c0_i32 : i32, i32
  }
}

</mosaic_0001>

<llo_original>
// kernel: tpu_custom_call.1
$region0: #{tpu_custom_call.1}
  #allocation0 [shape = 'u32[]', space=smem, size = 0x4, offset = 0x4, fixed_abs, tag = 'smem constant byte address 0x4 - core index']
  #allocation1 [shape = 'u32[144,128]{1,0:T(1,128)}', space=vmem, size = 0x12000, scoped, tag = 'internal scratch']
  %s0 = inlined_call_operand.vmem [shape: bf16[1008,3], index: 0, kind: input, shape index: {}]
  %s1 = inlined_call_operand.vmem [shape: bf16[1008,3], index: 1, kind: input, shape index: {}]
  %s2 = inlined_call_operand.vmem [shape: bf16[1008,3], index: 2, kind: input, shape index: {}]
  %s3 = inlined_call_operand.vmem [shape: bf16[1008,32], index: 3, kind: input, shape index: {}]
  %s4 = inlined_call_operand.vmem [shape: bf16[3,64], index: 4, kind: input, shape index: {}]
  %s5 = inlined_call_operand.vmem [shape: bf16[3,64], index: 5, kind: input, shape index: {}]
  %s6 = inlined_call_operand.vmem [shape: bf16[3,64], index: 6, kind: input, shape index: {}]
  %s7 = inlined_call_operand.vmem [shape: bf16[32,64], index: 7, kind: input, shape index: {}]
  %s8 = inlined_call_operand.vmem [shape: f32[1,64], index: 8, kind: input, shape index: {}]
  %s9 = inlined_call_operand.vmem [shape: bf16[64,64], index: 9, kind: input, shape index: {}]
  %s10 = inlined_call_operand.vmem [shape: f32[1,64], index: 10, kind: input, shape index: {}]
  %s11 = inlined_call_operand.vmem [shape: bf16[64,64], index: 11, kind: input, shape index: {}]
  %s12 = inlined_call_operand.vmem [shape: f32[1,64], index: 12, kind: input, shape index: {}]
  %s13 = inlined_call_operand.vmem [shape: bf16[64,64], index: 13, kind: input, shape index: {}]
  %s14 = inlined_call_operand.vmem [shape: f32[1,64], index: 14, kind: input, shape index: {}]
  %s15 = inlined_call_operand.vmem [shape: bf16[64,3], index: 15, kind: input, shape index: {}]
  %s16 = inlined_call_operand.vmem [shape: f32[1,3], index: 16, kind: input, shape index: {}]
  %s17 = inlined_call_operand.vmem [shape: f32[1008,3], index: 17, kind: output, shape index: {}]
  %s18 = sld [smem:[#allocation0]]
  $region101: #{tpu_custom_call.1} parent=0
    _
  %s20 = ssub.s32 1, %s18
  %s21 = scalar_select 0, %s20, %s18
  loop: start=0, step=1, limit=4
  $region2: #{tpu_custom_call.1} parent=0 // loop_pre_header
    _
  $region3: #{tpu_custom_call.1} parent=0 // loop_header
    %s23 = sphi 0, %s27
    %p24 = scmp.ge.s32.totalorder %s23, 4
    %s33 = sphi 0, %s35
    %s36 = sphi 0, %s33
    %s37 = sphi 0, %s36
    %s53 = sphi 0, %s37
    %s59 = sphi 0, %s61
    %s62 = sphi 0, %s59
    %s63 = sphi 0, %s62
    %s79 = sphi 0, %s63
    %s85 = sphi 0, %s87
    %s88 = sphi 0, %s85
    %s89 = sphi 0, %s88
    %s105 = sphi 0, %s89
    %s111 = sphi 0, %s113
    %s114 = sphi 0, %s111
    %s115 = sphi 0, %s114
    %s131 = sphi 0, %s115
    %s135 = sphi 0, %s135
    %s137 = sphi 0, %s135
    %s138 = sphi 0, %s137
    %s152 = sphi 0, %s138
    %s156 = sphi 0, %s156
    %s158 = sphi 0, %s156
    %s159 = sphi 0, %s158
    %s173 = sphi 0, %s159
    %s177 = sphi 0, %s177
    %s179 = sphi 0, %s177
    %s180 = sphi 0, %s179
    %s194 = sphi 0, %s180
    %s198 = sphi 0, %s198
    %s200 = sphi 0, %s198
    %s201 = sphi 0, %s200
    %s215 = sphi 0, %s201
    %s219 = sphi 0, %s219
    %s221 = sphi 0, %s219
    %s222 = sphi 0, %s221
    %s236 = sphi 0, %s222
    %s240 = sphi 0, %s240
    %s242 = sphi 0, %s240
    %s243 = sphi 0, %s242
    %s257 = sphi 0, %s243
    %s261 = sphi 0, %s261
    %s263 = sphi 0, %s261
    %s264 = sphi 0, %s263
    %s278 = sphi 0, %s264
    %s282 = sphi 0, %s282
    %s284 = sphi 0, %s282
    %s285 = sphi 0, %s284
    %s299 = sphi 0, %s285
    %s303 = sphi 0, %s303
    %s305 = sphi 0, %s303
    %s306 = sphi 0, %s305
    %s320 = sphi 0, %s306
    %s324 = sphi 0, %s324
    %s326 = sphi 0, %s324
    %s327 = sphi 0, %s326
    %s341 = sphi 0, %s327
    %s345 = sphi 0, %s345
    %s347 = sphi 0, %s345
    %s348 = sphi 0, %s347
    %s362 = sphi 0, %s348
    %s366 = sphi 0, %s366
    %s368 = sphi 0, %s366
    %s369 = sphi 0, %s368
    %s383 = sphi 0, %s369
    %s387 = sphi 0, %s387
    %s389 = sphi 0, %s387
    %s390 = sphi 0, %s389
    %s404 = sphi 0, %s390
    %s410 = sphi 0, %s412
    %s413 = sphi 0, %s410
    %s414 = sphi 0, %s413
    %s430 = sphi 0, %s414
  $region4: #{tpu_custom_call.1} parent=0 // loop_header_branch
    %26 = sbr.rel (%p24) target = $region8
  $region5: #{tpu_custom_call.1} parent=0 // loop_body
    %s28 = ssub.s32 %s23, 1
    %s29 = ssub.s32 %s23, 2
    %s30 = sadd.s32 %s23, 1
    %s31 = ssub.s32 %s23, %s30
    %p32 = scmp.eq.s32.totalorder %s31, 0
    %s34 = sadd.s32 %s33, 1
    %s35 = scalar_select %p32, %s33, %s34
    %p38 = pneg %p32
    %p39 = scmp.eq.s32.totalorder %s23, 1
    %p40 = por %p38, %p39
    %p41 = scmp.ne.s32.totalorder %s33, %s36
    %p42 = scmp.eq.s32.totalorder %s23, 0
    %p43 = por %p41, %p42
    %p44 = scmp.ne.s32.totalorder %s33, %s36
    %p45 = scmp.eq.s32.totalorder %s28, 1
    %p46 = por %p44, %p45
    %p47 = scmp.ne.s32.totalorder %s36, %s37
    %p48 = scmp.eq.s32.totalorder %s28, 0
    %p49 = por %p47, %p48
    %p50 = scmp.ne.s32.totalorder %s36, %s37
    %p51 = scmp.eq.s32.totalorder %s29, 1
    %p52 = por %p50, %p51
    %p54 = scmp.ne.s32.totalorder %s37, %s53
    %p55 = scmp.eq.s32.totalorder %s29, 0
    %p56 = por %p54, %p55
    %s57 = ssub.s32 %s23, %s30
    %p58 = scmp.eq.s32.totalorder %s57, 0
    %s60 = sadd.s32 %s59, 1
    %s61 = scalar_select %p58, %s59, %s60
    %p64 = pneg %p58
    %p65 = scmp.eq.s32.totalorder %s23, 1
    %p66 = por %p64, %p65
    %p67 = scmp.ne.s32.totalorder %s59, %s62
    %p68 = scmp.eq.s32.totalorder %s23, 0
    %p69 = por %p67, %p68
    %p70 = scmp.ne.s32.totalorder %s59, %s62
    %p71 = scmp.eq.s32.totalorder %s28, 1
    %p72 = por %p70, %p71
    %p73 = scmp.ne.s32.totalorder %s62, %s63
    %p74 = scmp.eq.s32.totalorder %s28, 0
    %p75 = por %p73, %p74
    %p76 = scmp.ne.s32.totalorder %s62, %s63
    %p77 = scmp.eq.s32.totalorder %s29, 1
    %p78 = por %p76, %p77
    %p80 = scmp.ne.s32.totalorder %s63, %s79
    %p81 = scmp.eq.s32.totalorder %s29, 0
    %p82 = por %p80, %p81
    %s83 = ssub.s32 %s23, %s30
    %p84 = scmp.eq.s32.totalorder %s83, 0
    %s86 = sadd.s32 %s85, 1
    %s87 = scalar_select %p84, %s85, %s86
    %p90 = pneg %p84
    %p91 = scmp.eq.s32.totalorder %s23, 1
    %p92 = por %p90, %p91
    %p93 = scmp.ne.s32.totalorder %s85, %s88
    %p94 = scmp.eq.s32.totalorder %s23, 0
    %p95 = por %p93, %p94
    %p96 = scmp.ne.s32.totalorder %s85, %s88
    %p97 = scmp.eq.s32.totalorder %s28, 1
    %p98 = por %p96, %p97
    %p99 = scmp.ne.s32.totalorder %s88, %s89
    %p100 = scmp.eq.s32.totalorder %s28, 0
    %p101 = por %p99, %p100
    %p102 = scmp.ne.s32.totalorder %s88, %s89
    %p103 = scmp.eq.s32.totalorder %s29, 1
    %p104 = por %p102, %p103
    %p106 = scmp.ne.s32.totalorder %s89, %s105
    %p107 = scmp.eq.s32.totalorder %s29, 0
    %p108 = por %p106, %p107
    %s109 = ssub.s32 %s23, %s30
    %p110 = scmp.eq.s32.totalorder %s109, 0
    %s112 = sadd.s32 %s111, 1
    %s113 = scalar_select %p110, %s111, %s112
    %p116 = pneg %p110
    %p117 = scmp.eq.s32.totalorder %s23, 1
    %p118 = por %p116, %p117
    %p119 = scmp.ne.s32.totalorder %s111, %s114
    %p120 = scmp.eq.s32.totalorder %s23, 0
    %p121 = por %p119, %p120
    %p122 = scmp.ne.s32.totalorder %s111, %s114
    %p123 = scmp.eq.s32.totalorder %s28, 1
    %p124 = por %p122, %p123
    %p125 = scmp.ne.s32.totalorder %s114, %s115
    %p126 = scmp.eq.s32.totalorder %s28, 0
    %p127 = por %p125, %p126
    %p128 = scmp.ne.s32.totalorder %s114, %s115
    %p129 = scmp.eq.s32.totalorder %s29, 1
    %p130 = por %p128, %p129
    %p132 = scmp.ne.s32.totalorder %s115, %s131
    %p133 = scmp.eq.s32.totalorder %s29, 0
    %p134 = por %p132, %p133
    %s136 = sadd.s32 %s135, 1
    %p139 = scmp.eq.s32.totalorder %s23, 1
    %p140 = scmp.ne.s32.totalorder %s135, %s137
    %p141 = scmp.eq.s32.totalorder %s23, 0
    %p142 = por %p140, %p141
    %p143 = scmp.ne.s32.totalorder %s135, %s137
    %p144 = scmp.eq.s32.totalorder %s28, 1
    %p145 = por %p143, %p144
    %p146 = scmp.ne.s32.totalorder %s137, %s138
    %p147 = scmp.eq.s32.totalorder %s28, 0
    %p148 = por %p146, %p147
    %p149 = scmp.ne.s32.totalorder %s137, %s138
    %p150 = scmp.eq.s32.totalorder %s29, 1
    %p151 = por %p149, %p150
    %p153 = scmp.ne.s32.totalorder %s138, %s152
    %p154 = scmp.eq.s32.totalorder %s29, 0
    %p155 = por %p153, %p154
    %s157 = sadd.s32 %s156, 1
    %p160 = scmp.eq.s32.totalorder %s23, 1
    %p161 = scmp.ne.s32.totalorder %s156, %s158
    %p162 = scmp.eq.s32.totalorder %s23, 0
    %p163 = por %p161, %p162
    %p164 = scmp.ne.s32.totalorder %s156, %s158
    %p165 = scmp.eq.s32.totalorder %s28, 1
    %p166 = por %p164, %p165
    %p167 = scmp.ne.s32.totalorder %s158, %s159
    %p168 = scmp.eq.s32.totalorder %s28, 0
    %p169 = por %p167, %p168
    %p170 = scmp.ne.s32.totalorder %s158, %s159
    %p171 = scmp.eq.s32.totalorder %s29, 1
    %p172 = por %p170, %p171
    %p174 = scmp.ne.s32.totalorder %s159, %s173
    %p175 = scmp.eq.s32.totalorder %s29, 0
    %p176 = por %p174, %p175
    %s178 = sadd.s32 %s177, 1
    %p181 = scmp.eq.s32.totalorder %s23, 1
    %p182 = scmp.ne.s32.totalorder %s177, %s179
    %p183 = scmp.eq.s32.totalorder %s23, 0
    %p184 = por %p182, %p183
    %p185 = scmp.ne.s32.totalorder %s177, %s179
    %p186 = scmp.eq.s32.totalorder %s28, 1
    %p187 = por %p185, %p186
    %p188 = scmp.ne.s32.totalorder %s179, %s180
    %p189 = scmp.eq.s32.totalorder %s28, 0
    %p190 = por %p188, %p189
    %p191 = scmp.ne.s32.totalorder %s179, %s180
    %p192 = scmp.eq.s32.totalorder %s29, 1
    %p193 = por %p191, %p192
    %p195 = scmp.ne.s32.totalorder %s180, %s194
    %p196 = scmp.eq.s32.totalorder %s29, 0
    %p197 = por %p195, %p196
    %s199 = sadd.s32 %s198, 1
    %p202 = scmp.eq.s32.totalorder %s23, 1
    %p203 = scmp.ne.s32.totalorder %s198, %s200
    %p204 = scmp.eq.s32.totalorder %s23, 0
    %p205 = por %p203, %p204
    %p206 = scmp.ne.s32.totalorder %s198, %s200
    %p207 = scmp.eq.s32.totalorder %s28, 1
    %p208 = por %p206, %p207
    %p209 = scmp.ne.s32.totalorder %s200, %s201
    %p210 = scmp.eq.s32.totalorder %s28, 0
    %p211 = por %p209, %p210
    %p212 = scmp.ne.s32.totalorder %s200, %s201
    %p213 = scmp.eq.s32.totalorder %s29, 1
    %p214 = por %p212, %p213
    %p216 = scmp.ne.s32.totalorder %s201, %s215
    %p217 = scmp.eq.s32.totalorder %s29, 0
    %p218 = por %p216, %p217
    %s220 = sadd.s32 %s219, 1
    %p223 = scmp.eq.s32.totalorder %s23, 1
    %p224 = scmp.ne.s32.totalorder %s219, %s221
    %p225 = scmp.eq.s32.totalorder %s23, 0
    %p226 = por %p224, %p225
    %p227 = scmp.ne.s32.totalorder %s219, %s221
    %p228 = scmp.eq.s32.totalorder %s28, 1
    %p229 = por %p227, %p228
    %p230 = scmp.ne.s32.totalorder %s221, %s222
    %p231 = scmp.eq.s32.totalorder %s28, 0
    %p232 = por %p230, %p231
    %p233 = scmp.ne.s32.totalorder %s221, %s222
    %p234 = scmp.eq.s32.totalorder %s29, 1
    %p235 = por %p233, %p234
    %p237 = scmp.ne.s32.totalorder %s222, %s236
    %p238 = scmp.eq.s32.totalorder %s29, 0
    %p239 = por %p237, %p238
    %s241 = sadd.s32 %s240, 1
    %p244 = scmp.eq.s32.totalorder %s23, 1
    %p245 = scmp.ne.s32.totalorder %s240, %s242
    %p246 = scmp.eq.s32.totalorder %s23, 0
    %p247 = por %p245, %p246
    %p248 = scmp.ne.s32.totalorder %s240, %s242
    %p249 = scmp.eq.s32.totalorder %s28, 1
    %p250 = por %p248, %p249
    %p251 = scmp.ne.s32.totalorder %s242, %s243
    %p252 = scmp.eq.s32.totalorder %s28, 0
    %p253 = por %p251, %p252
    %p254 = scmp.ne.s32.totalorder %s242, %s243
    %p255 = scmp.eq.s32.totalorder %s29, 1
    %p256 = por %p254, %p255
    %p258 = scmp.ne.s32.totalorder %s243, %s257
    %p259 = scmp.eq.s32.totalorder %s29, 0
    %p260 = por %p258, %p259
    %s262 = sadd.s32 %s261, 1
    %p265 = scmp.eq.s32.totalorder %s23, 1
    %p266 = scmp.ne.s32.totalorder %s261, %s263
    %p267 = scmp.eq.s32.totalorder %s23, 0
    %p268 = por %p266, %p267
    %p269 = scmp.ne.s32.totalorder %s261, %s263
    %p270 = scmp.eq.s32.totalorder %s28, 1
    %p271 = por %p269, %p270
    %p272 = scmp.ne.s32.totalorder %s263, %s264
    %p273 = scmp.eq.s32.totalorder %s28, 0
    %p274 = por %p272, %p273
    %p275 = scmp.ne.s32.totalorder %s263, %s264
    %p276 = scmp.eq.s32.totalorder %s29, 1
    %p277 = por %p275, %p276
    %p279 = scmp.ne.s32.totalorder %s264, %s278
    %p280 = scmp.eq.s32.totalorder %s29, 0
    %p281 = por %p279, %p280
    %s283 = sadd.s32 %s282, 1
    %p286 = scmp.eq.s32.totalorder %s23, 1
    %p287 = scmp.ne.s32.totalorder %s282, %s284
    %p288 = scmp.eq.s32.totalorder %s23, 0
    %p289 = por %p287, %p288
    %p290 = scmp.ne.s32.totalorder %s282, %s284
    %p291 = scmp.eq.s32.totalorder %s28, 1
    %p292 = por %p290, %p291
    %p293 = scmp.ne.s32.totalorder %s284, %s285
    %p294 = scmp.eq.s32.totalorder %s28, 0
    %p295 = por %p293, %p294
    %p296 = scmp.ne.s32.totalorder %s284, %s285
    %p297 = scmp.eq.s32.totalorder %s29, 1
    %p298 = por %p296, %p297
    %p300 = scmp.ne.s32.totalorder %s285, %s299
    %p301 = scmp.eq.s32.totalorder %s29, 0
    %p302 = por %p300, %p301
    %s304 = sadd.s32 %s303, 1
    %p307 = scmp.eq.s32.totalorder %s23, 1
    %p308 = scmp.ne.s32.totalorder %s303, %s305
    %p309 = scmp.eq.s32.totalorder %s23, 0
    %p310 = por %p308, %p309
    %p311 = scmp.ne.s32.totalorder %s303, %s305
    %p312 = scmp.eq.s32.totalorder %s28, 1
    %p313 = por %p311, %p312
    %p314 = scmp.ne.s32.totalorder %s305, %s306
    %p315 = scmp.eq.s32.totalorder %s28, 0
    %p316 = por %p314, %p315
    %p317 = scmp.ne.s32.totalorder %s305, %s306
    %p318 = scmp.eq.s32.totalorder %s29, 1
    %p319 = por %p317, %p318
    %p321 = scmp.ne.s32.totalorder %s306, %s320
    %p322 = scmp.eq.s32.totalorder %s29, 0
    %p323 = por %p321, %p322
    %s325 = sadd.s32 %s324, 1
    %p328 = scmp.eq.s32.totalorder %s23, 1
    %p329 = scmp.ne.s32.totalorder %s324, %s326
    %p330 = scmp.eq.s32.totalorder %s23, 0
    %p331 = por %p329, %p330
    %p332 = scmp.ne.s32.totalorder %s324, %s326
    %p333 = scmp.eq.s32.totalorder %s28, 1
    %p334 = por %p332, %p333
    %p335 = scmp.ne.s32.totalorder %s326, %s327
    %p336 = scmp.eq.s32.totalorder %s28, 0
    %p337 = por %p335, %p336
    %p338 = scmp.ne.s32.totalorder %s326, %s327
    %p339 = scmp.eq.s32.totalorder %s29, 1
    %p340 = por %p338, %p339
    %p342 = scmp.ne.s32.totalorder %s327, %s341
    %p343 = scmp.eq.s32.totalorder %s29, 0
    %p344 = por %p342, %p343
    %s346 = sadd.s32 %s345, 1
    %p349 = scmp.eq.s32.totalorder %s23, 1
    %p350 = scmp.ne.s32.totalorder %s345, %s347
    %p351 = scmp.eq.s32.totalorder %s23, 0
    %p352 = por %p350, %p351
    %p353 = scmp.ne.s32.totalorder %s345, %s347
    %p354 = scmp.eq.s32.totalorder %s28, 1
    %p355 = por %p353, %p354
    %p356 = scmp.ne.s32.totalorder %s347, %s348
    %p357 = scmp.eq.s32.totalorder %s28, 0
    %p358 = por %p356, %p357
    %p359 = scmp.ne.s32.totalorder %s347, %s348
    %p360 = scmp.eq.s32.totalorder %s29, 1
    %p361 = por %p359, %p360
    %p363 = scmp.ne.s32.totalorder %s348, %s362
    %p364 = scmp.eq.s32.totalorder %s29, 0
    %p365 = por %p363, %p364
    %s367 = sadd.s32 %s366, 1
    %p370 = scmp.eq.s32.totalorder %s23, 1
    %p371 = scmp.ne.s32.totalorder %s366, %s368
    %p372 = scmp.eq.s32.totalorder %s23, 0
    %p373 = por %p371, %p372
    %p374 = scmp.ne.s32.totalorder %s366, %s368
    %p375 = scmp.eq.s32.totalorder %s28, 1
    %p376 = por %p374, %p375
    %p377 = scmp.ne.s32.totalorder %s368, %s369
    %p378 = scmp.eq.s32.totalorder %s28, 0
    %p379 = por %p377, %p378
    %p380 = scmp.ne.s32.totalorder %s368, %s369
    %p381 = scmp.eq.s32.totalorder %s29, 1
    %p382 = por %p380, %p381
    %p384 = scmp.ne.s32.totalorder %s369, %s383
    %p385 = scmp.eq.s32.totalorder %s29, 0
    %p386 = por %p384, %p385
    %s388 = sadd.s32 %s387, 1
    %p391 = scmp.eq.s32.totalorder %s23, 1
    %p392 = scmp.ne.s32.totalorder %s387, %s389
    %p393 = scmp.eq.s32.totalorder %s23, 0
    %p394 = por %p392, %p393
    %p395 = scmp.ne.s32.totalorder %s387, %s389
    %p396 = scmp.eq.s32.totalorder %s28, 1
    %p397 = por %p395, %p396
    %p398 = scmp.ne.s32.totalorder %s389, %s390
    %p399 = scmp.eq.s32.totalorder %s28, 0
    %p400 = por %p398, %p399
    %p401 = scmp.ne.s32.totalorder %s389, %s390
    %p402 = scmp.eq.s32.totalorder %s29, 1
    %p403 = por %p401, %p402
    %p405 = scmp.ne.s32.totalorder %s390, %s404
    %p406 = scmp.eq.s32.totalorder %s29, 0
    %p407 = por %p405, %p406
    %s408 = ssub.s32 %s23, %s30
    %p409 = scmp.eq.s32.totalorder %s408, 0
    %s411 = sadd.s32 %s410, 1
    %s412 = scalar_select %p409, %s410, %s411
    %p415 = pneg %p409
    %p416 = scmp.eq.s32.totalorder %s23, 1
    %p417 = por %p415, %p416
    %p418 = scmp.ne.s32.totalorder %s410, %s413
    %p419 = scmp.eq.s32.totalorder %s23, 0
    %p420 = por %p418, %p419
    %p421 = scmp.ne.s32.totalorder %s410, %s413
    %p422 = scmp.eq.s32.totalorder %s28, 1
    %p423 = por %p421, %p422
    %p424 = scmp.ne.s32.totalorder %s413, %s414
    %p425 = scmp.eq.s32.totalorder %s28, 0
    %p426 = por %p424, %p425
    %p427 = scmp.ne.s32.totalorder %s413, %s414
    %p428 = scmp.eq.s32.totalorder %s29, 1
    %p429 = por %p427, %p428
    %p431 = scmp.ne.s32.totalorder %s414, %s430
    %p432 = scmp.eq.s32.totalorder %s29, 0
    %p433 = por %p431, %p432
    %p434 = scmp.le.s32.totalorder 1, %s23
    %p435 = scmp.lt.s32.totalorder %s23, 3
    %p436 = pnand %p434, %p435
    %p437 = pneg %p436
    // Predicated region
    $region9: #{tpu_custom_call.1} parent=5 // pred_check
      _
    $region10: #{tpu_custom_call.1} parent=5 // pred_check_branch
      %439 = sbr.rel (%p436) target = $region12
    $region11: #{tpu_custom_call.1} parent=5 // pred_region
      %s440 = ssub.s32 %s23, 1
      // Predicated region
      $region13: #{tpu_custom_call.1} parent=11 // pred_check
        %p441 = pneg %p148
      $region14: #{tpu_custom_call.1} parent=11 // pred_check_branch
        %443 = sbr.rel (%p441) target = $region16
      $region15: #{tpu_custom_call.1} parent=11 // pred_region
        _
      $region16: #{tpu_custom_call.1} parent=11 // pred_fallthru
        _
      // Predicated region
      $region17: #{tpu_custom_call.1} parent=11 // pred_check
        %p444 = pneg %p169
      $region18: #{tpu_custom_call.1} parent=11 // pred_check_branch
        %446 = sbr.rel (%p444) target = $region20
      $region19: #{tpu_custom_call.1} parent=11 // pred_region
        _
      $region20: #{tpu_custom_call.1} parent=11 // pred_fallthru
        _
      // Predicated region
      $region21: #{tpu_custom_call.1} parent=11 // pred_check
        %p447 = pneg %p190
      $region22: #{tpu_custom_call.1} parent=11 // pred_check_branch
        %449 = sbr.rel (%p447) target = $region24
      $region23: #{tpu_custom_call.1} parent=11 // pred_region
        _
      $region24: #{tpu_custom_call.1} parent=11 // pred_fallthru
        _
      // Predicated region
      $region25: #{tpu_custom_call.1} parent=11 // pred_check
        %p450 = pneg %p211
      $region26: #{tpu_custom_call.1} parent=11 // pred_check_branch
        %452 = sbr.rel (%p450) target = $region28
      $region27: #{tpu_custom_call.1} parent=11 // pred_region
        _
      $region28: #{tpu_custom_call.1} parent=11 // pred_fallthru
        _
      // Predicated region
      $region29: #{tpu_custom_call.1} parent=11 // pred_check
        %p453 = pneg %p232
      $region30: #{tpu_custom_call.1} parent=11 // pred_check_branch
        %455 = sbr.rel (%p453) target = $region32
      $region31: #{tpu_custom_call.1} parent=11 // pred_region
        _
      $region32: #{tpu_custom_call.1} parent=11 // pred_fallthru
        _
      // Predicated region
      $region33: #{tpu_custom_call.1} parent=11 // pred_check
        %p456 = pneg %p253
      $region34: #{tpu_custom_call.1} parent=11 // pred_check_branch
        %458 = sbr.rel (%p456) target = $region36
      $region35: #{tpu_custom_call.1} parent=11 // pred_region
        _
      $region36: #{tpu_custom_call.1} parent=11 // pred_fallthru
        _
      // Predicated region
      $region37: #{tpu_custom_call.1} parent=11 // pred_check
        %p459 = pneg %p274
      $region38: #{tpu_custom_call.1} parent=11 // pred_check_branch
        %461 = sbr.rel (%p459) target = $region40
      $region39: #{tpu_custom_call.1} parent=11 // pred_region
        _
      $region40: #{tpu_custom_call.1} parent=11 // pred_fallthru
        _
      // Predicated region
      $region41: #{tpu_custom_call.1} parent=11 // pred_check
        %p462 = pneg %p295
      $region42: #{tpu_custom_call.1} parent=11 // pred_check_branch
        %464 = sbr.rel (%p462) target = $region44
      $region43: #{tpu_custom_call.1} parent=11 // pred_region
        _
      $region44: #{tpu_custom_call.1} parent=11 // pred_fallthru
        _
      // Predicated region
      $region45: #{tpu_custom_call.1} parent=11 // pred_check
        %p465 = pneg %p316
      $region46: #{tpu_custom_call.1} parent=11 // pred_check_branch
        %467 = sbr.rel (%p465) target = $region48
      $region47: #{tpu_custom_call.1} parent=11 // pred_region
        _
      $region48: #{tpu_custom_call.1} parent=11 // pred_fallthru
        _
      // Predicated region
      $region49: #{tpu_custom_call.1} parent=11 // pred_check
        %p468 = pneg %p337
      $region50: #{tpu_custom_call.1} parent=11 // pred_check_branch
        %470 = sbr.rel (%p468) target = $region52
      $region51: #{tpu_custom_call.1} parent=11 // pred_region
        _
      $region52: #{tpu_custom_call.1} parent=11 // pred_fallthru
        _
      // Predicated region
      $region53: #{tpu_custom_call.1} parent=11 // pred_check
        %p471 = pneg %p358
      $region54: #{tpu_custom_call.1} parent=11 // pred_check_branch
        %473 = sbr.rel (%p471) target = $region56
      $region55: #{tpu_custom_call.1} parent=11 // pred_region
        _
      $region56: #{tpu_custom_call.1} parent=11 // pred_fallthru
        _
      // Predicated region
      $region57: #{tpu_custom_call.1} parent=11 // pred_check
        %p474 = pneg %p379
      $region58: #{tpu_custom_call.1} parent=11 // pred_check_branch
        %476 = sbr.rel (%p474) target = $region60
      $region59: #{tpu_custom_call.1} parent=11 // pred_region
        _
      $region60: #{tpu_custom_call.1} parent=11 // pred_fallthru
        _
      // Predicated region
      $region61: #{tpu_custom_call.1} parent=11 // pred_check
        %p477 = pneg %p400
      $region62: #{tpu_custom_call.1} parent=11 // pred_check_branch
        %479 = sbr.rel (%p477) target = $region64
      $region63: #{tpu_custom_call.1} parent=11 // pred_region
        _
      $region64: #{tpu_custom_call.1} parent=11 // pred_fallthru
        _
    $region12: #{tpu_custom_call.1} parent=5 // pred_fallthru
      _
    %p480 = scmp.lt.s32.totalorder %s23, 2
    // Predicated region
    $region65: #{tpu_custom_call.1} parent=5 // pred_check
      %p481 = pneg %p480
    $region66: #{tpu_custom_call.1} parent=5 // pred_check_branch
      %483 = sbr.rel (%p481) target = $region68
    $region67: #{tpu_custom_call.1} parent=5 // pred_region
      // Predicated region
      $region69: #{tpu_custom_call.1} parent=67 // pred_check
        %p484 = pneg %p43
      $region70: #{tpu_custom_call.1} parent=67 // pred_check_branch
        %486 = sbr.rel (%p484) target = $region72
      $region71: #{tpu_custom_call.1} parent=67 // pred_region
        %s487 = smul.u32 63, %s23
        %p488 = scmp.lt.s32.totalorder %s487, 125
        %s489 = scalar_select %p488, %s487, 125
        %s490 = smul.addr %s489, 4
        %s491 = scalar_lea.vmem %s0, %s490
        %s492 = smul.u32 63, %s23
      $region72: #{tpu_custom_call.1} parent=67 // pred_fallthru
        _
      // Predicated region
      $region73: #{tpu_custom_call.1} parent=67 // pred_check
        %p493 = pneg %p69
      $region74: #{tpu_custom_call.1} parent=67 // pred_check_branch
        %495 = sbr.rel (%p493) target = $region76
      $region75: #{tpu_custom_call.1} parent=67 // pred_region
        %s496 = smul.u32 63, %s23
        %p497 = scmp.lt.s32.totalorder %s496, 125
        %s498 = scalar_select %p497, %s496, 125
        %s499 = smul.addr %s498, 4
        %s500 = scalar_lea.vmem %s1, %s499
        %s501 = smul.u32 63, %s23
      $region76: #{tpu_custom_call.1} parent=67 // pred_fallthru
        _
      // Predicated region
      $region77: #{tpu_custom_call.1} parent=67 // pred_check
        %p502 = pneg %p95
      $region78: #{tpu_custom_call.1} parent=67 // pred_check_branch
        %504 = sbr.rel (%p502) target = $region80
      $region79: #{tpu_custom_call.1} parent=67 // pred_region
        %s505 = smul.u32 63, %s23
        %p506 = scmp.lt.s32.totalorder %s505, 125
        %s507 = scalar_select %p506, %s505, 125
        %s508 = smul.addr %s507, 4
        %s509 = scalar_lea.vmem %s2, %s508
        %s510 = smul.u32 63, %s23
      $region80: #{tpu_custom_call.1} parent=67 // pred_fallthru
        _
      // Predicated region
      $region81: #{tpu_custom_call.1} parent=67 // pred_check
        %p511 = pneg %p121
      $region82: #{tpu_custom_call.1} parent=67 // pred_check_branch
        %513 = sbr.rel (%p511) target = $region84
      $region83: #{tpu_custom_call.1} parent=67 // pred_region
        %s514 = smul.u32 63, %s23
        %p515 = scmp.lt.s32.totalorder %s514, 125
        %s516 = scalar_select %p515, %s514, 125
        %s517 = smul.addr %s516, 4
        %s518 = scalar_lea.vmem %s3, %s517
        %s519 = smul.u32 63, %s23
      $region84: #{tpu_custom_call.1} parent=67 // pred_fallthru
        _
    $region68: #{tpu_custom_call.1} parent=5 // pred_fallthru
      _
    %p520 = scmp.le.s32.totalorder 1, %s23
    %p521 = scmp.lt.s32.totalorder %s23, 3
    %p522 = pnand %p520, %p521
    %p523 = pneg %p522
    // Predicated region
    $region85: #{tpu_custom_call.1} parent=5 // pred_check
      _
    $region86: #{tpu_custom_call.1} parent=5 // pred_check_branch
      %525 = sbr.rel (%p522) target = $region88
    $region87: #{tpu_custom_call.1} parent=5 // pred_region
      %s526 = ssub.s32 %s23, 1
      %s527 = smul.u32 63, %s28
      %p528 = scmp.lt.s32.totalorder %s527, 125
      %s529 = scalar_select %p528, %s527, 125
      %s530 = smul.addr %s529, 4
      %s531 = scalar_lea.vmem %s0, %s530
      %p532 = pneg %p49
      %p533 = pneg %p46
      %s534 = smul.u32 63, %s28
      %p535 = scmp.lt.s32.totalorder %s534, 125
      %s536 = scalar_select %p535, %s534, 125
      %s537 = smul.addr %s536, 4
      %s538 = scalar_lea.vmem %s1, %s537
      %p539 = pneg %p75
      %p540 = pneg %p72
      %s541 = smul.u32 63, %s28
      %p542 = scmp.lt.s32.totalorder %s541, 125
      %s543 = scalar_select %p542, %s541, 125
      %s544 = smul.addr %s543, 4
      %s545 = scalar_lea.vmem %s2, %s544
      %p546 = pneg %p101
      %p547 = pneg %p98
      %s548 = smul.u32 63, %s28
      %p549 = scmp.lt.s32.totalorder %s548, 125
      %s550 = scalar_select %p549, %s548, 125
      %s551 = smul.addr %s550, 4
      %s552 = scalar_lea.vmem %s3, %s551
      %p553 = pneg %p127
      %p554 = pneg %p124
      %p555 = pneg %p148
      %p556 = pneg %p145
      %p557 = pneg %p169
      %p558 = pneg %p166
      %p559 = pneg %p190
      %p560 = pneg %p187
      %p561 = pneg %p211
      %p562 = pneg %p208
      %p563 = pneg %p232
      %p564 = pneg %p229
      %p565 = pneg %p253
      %p566 = pneg %p250
      %p567 = pneg %p274
      %p568 = pneg %p271
      %p569 = pneg %p295
      %p570 = pneg %p292
      %p571 = pneg %p316
      %p572 = pneg %p313
      %p573 = pneg %p337
      %p574 = pneg %p334
      %p575 = pneg %p358
      %p576 = pneg %p355
      %p577 = pneg %p379
      %p578 = pneg %p376
      %p579 = pneg %p400
      %p580 = pneg %p397
      %p581 = pneg %p426
      %p582 = pneg %p423
      %s583 = smul.u32 63, %s28
      %p584 = scmp.lt.s32.totalorder %s583, 125
      %s585 = scalar_select %p584, %s583, 125
      %s586 = smul.addr %s585, 8
      %s587 = scalar_lea.vmem %s17, %s586
      %s588 = smul.u32 63, %s28
      %p589 = scmp.lt.s32.totalorder %s588, 125
      %s590 = scalar_select %p589, %s588, 125
      %s591 = smul.addr %s590, 4
      %s592 = scalar_lea.vmem %s0, %s591
      %s593 = smul.u32 63, %s28
      %s594 = smul.u32 63, %s28
      %p595 = scmp.lt.s32.totalorder %s594, 125
      %s596 = scalar_select %p595, %s594, 125
      %s597 = smul.addr %s596, 4
      %s598 = scalar_lea.vmem %s1, %s597
      %s599 = smul.u32 63, %s28
      %s600 = smul.u32 63, %s28
      %p601 = scmp.lt.s32.totalorder %s600, 125
      %s602 = scalar_select %p601, %s600, 125
      %s603 = smul.addr %s602, 4
      %s604 = scalar_lea.vmem %s2, %s603
      %s605 = smul.u32 63, %s28
      %s606 = smul.u32 63, %s28
      %p607 = scmp.lt.s32.totalorder %s606, 125
      %s608 = scalar_select %p607, %s606, 125
      %s609 = smul.addr %s608, 4
      %s610 = scalar_lea.vmem %s3, %s609
      %s611 = smul.u32 63, %s28
      %s612 = smul.u32 63, %s28
      %p613 = scmp.lt.s32.totalorder %s612, 125
      %s614 = scalar_select %p613, %s612, 125
      %s615 = smul.addr %s614, 8
      %s616 = scalar_lea.vmem %s17, %s615
      %s617 = smul.u32 63, %s28
      %v619 = vld [vmem:[%s592] sm:$0xf]
      %v620 = vld [vmem:[%s592 + $0x4] sm:$0xf]
      %v621 = vld [vmem:[%s592 + $0x8] sm:$0xf]
      %v622 = vld [vmem:[%s592 + $0xc] sm:$0xf]
      %v623 = vld [vmem:[%s592 + $0x10] sm:$0xf]
      %v624 = vld [vmem:[%s592 + $0x14] sm:$0xf]
      %v625 = vld [vmem:[%s592 + $0x18] sm:$0xf]
      %v626 = vld [vmem:[%s592 + $0x1c] sm:$0xf]
      %v627 = vld [vmem:[%s592 + $0x20] sm:$0xf]
      %v628 = vld [vmem:[%s592 + $0x24] sm:$0xf]
      %v629 = vld [vmem:[%s592 + $0x28] sm:$0xf]
      %v630 = vld [vmem:[%s592 + $0x2c] sm:$0xf]
      %v631 = vld [vmem:[%s592 + $0x30] sm:$0xf]
      %v632 = vld [vmem:[%s592 + $0x34] sm:$0xf]
      %v633 = vld [vmem:[%s592 + $0x38] sm:$0xf]
      %v634 = vld [vmem:[%s592 + $0x3c] sm:$0xf]
      %v635 = vld [vmem:[%s592 + $0x40] sm:$0xf]
      %v636 = vld [vmem:[%s592 + $0x44] sm:$0xf]
      %v637 = vld [vmem:[%s592 + $0x48] sm:$0xf]
      %v638 = vld [vmem:[%s592 + $0x4c] sm:$0xf]
      %v639 = vld [vmem:[%s592 + $0x50] sm:$0xf]
      %v640 = vld [vmem:[%s592 + $0x54] sm:$0xf]
      %v641 = vld [vmem:[%s592 + $0x58] sm:$0xf]
      %v642 = vld [vmem:[%s592 + $0x5c] sm:$0xf]
      %v643 = vld [vmem:[%s592 + $0x60] sm:$0xf]
      %v644 = vld [vmem:[%s592 + $0x64] sm:$0xf]
      %v645 = vld [vmem:[%s592 + $0x68] sm:$0xf]
      %v646 = vld [vmem:[%s592 + $0x6c] sm:$0xf]
      %v647 = vld [vmem:[%s592 + $0x70] sm:$0xf]
      %v648 = vld [vmem:[%s592 + $0x74] sm:$0xf]
      %v649 = vld [vmem:[%s592 + $0x78] sm:$0xf]
      %v650 = vld [vmem:[%s592 + $0x7c] sm:$0xf]
      %v651 = vld [vmem:[%s592 + $0x80] sm:$0xf]
      %v652 = vld [vmem:[%s592 + $0x84] sm:$0xf]
      %v653 = vld [vmem:[%s592 + $0x88] sm:$0xf]
      %v654 = vld [vmem:[%s592 + $0x8c] sm:$0xf]
      %v655 = vld [vmem:[%s592 + $0x90] sm:$0xf]
      %v656 = vld [vmem:[%s592 + $0x94] sm:$0xf]
      %v657 = vld [vmem:[%s592 + $0x98] sm:$0xf]
      %v658 = vld [vmem:[%s592 + $0x9c] sm:$0xf]
      %v659 = vld [vmem:[%s592 + $0xa0] sm:$0xf]
      %v660 = vld [vmem:[%s592 + $0xa4] sm:$0xf]
      %v661 = vld [vmem:[%s592 + $0xa8] sm:$0xf]
      %v662 = vld [vmem:[%s592 + $0xac] sm:$0xf]
      %v663 = vld [vmem:[%s592 + $0xb0] sm:$0xf]
      %v664 = vld [vmem:[%s592 + $0xb4] sm:$0xf]
      %v665 = vld [vmem:[%s592 + $0xb8] sm:$0xf]
      %v666 = vld [vmem:[%s592 + $0xbc] sm:$0xf]
      %v667 = vld [vmem:[%s592 + $0xc0] sm:$0xf]
      %v668 = vld [vmem:[%s592 + $0xc4] sm:$0xf]
      %v669 = vld [vmem:[%s592 + $0xc8] sm:$0xf]
      %v670 = vld [vmem:[%s592 + $0xcc] sm:$0xf]
      %v671 = vld [vmem:[%s592 + $0xd0] sm:$0xf]
      %v672 = vld [vmem:[%s592 + $0xd4] sm:$0xf]
      %v673 = vld [vmem:[%s592 + $0xd8] sm:$0xf]
      %v674 = vld [vmem:[%s592 + $0xdc] sm:$0xf]
      %v675 = vld [vmem:[%s592 + $0xe0] sm:$0xf]
      %v676 = vld [vmem:[%s592 + $0xe4] sm:$0xf]
      %v677 = vld [vmem:[%s592 + $0xe8] sm:$0xf]
      %v678 = vld [vmem:[%s592 + $0xec] sm:$0xf]
      %v679 = vld [vmem:[%s592 + $0xf0] sm:$0xf]
      %v680 = vld [vmem:[%s592 + $0xf4] sm:$0xf]
      %v681 = vld [vmem:[%s592 + $0xf8] sm:$0xf]
      %v682 = vld [vmem:[%s4] sm:$0x3]
      %v683 = vld [vmem:[%s598] sm:$0xf]
      %v684 = vld [vmem:[%s598 + $0x4] sm:$0xf]
      %v685 = vld [vmem:[%s598 + $0x8] sm:$0xf]
      %v686 = vld [vmem:[%s598 + $0xc] sm:$0xf]
      %v687 = vld [vmem:[%s598 + $0x10] sm:$0xf]
      %v688 = vld [vmem:[%s598 + $0x14] sm:$0xf]
      %v689 = vld [vmem:[%s598 + $0x18] sm:$0xf]
      %v690 = vld [vmem:[%s598 + $0x1c] sm:$0xf]
      %v691 = vld [vmem:[%s598 + $0x20] sm:$0xf]
      %v692 = vld [vmem:[%s598 + $0x24] sm:$0xf]
      %v693 = vld [vmem:[%s598 + $0x28] sm:$0xf]
      %v694 = vld [vmem:[%s598 + $0x2c] sm:$0xf]
      %v695 = vld [vmem:[%s598 + $0x30] sm:$0xf]
      %v696 = vld [vmem:[%s598 + $0x34] sm:$0xf]
      %v697 = vld [vmem:[%s598 + $0x38] sm:$0xf]
      %v698 = vld [vmem:[%s598 + $0x3c] sm:$0xf]
      %v699 = vld [vmem:[%s598 + $0x40] sm:$0xf]
      %v700 = vld [vmem:[%s598 + $0x44] sm:$0xf]
      %v701 = vld [vmem:[%s598 + $0x48] sm:$0xf]
      %v702 = vld [vmem:[%s598 + $0x4c] sm:$0xf]
      %v703 = vld [vmem:[%s598 + $0x50] sm:$0xf]
      %v704 = vld [vmem:[%s598 + $0x54] sm:$0xf]
      %v705 = vld [vmem:[%s598 + $0x58] sm:$0xf]
      %v706 = vld [vmem:[%s598 + $0x5c] sm:$0xf]
      %v707 = vld [vmem:[%s598 + $0x60] sm:$0xf]
      %v708 = vld [vmem:[%s598 + $0x64] sm:$0xf]
      %v709 = vld [vmem:[%s598 + $0x68] sm:$0xf]
      %v710 = vld [vmem:[%s598 + $0x6c] sm:$0xf]
      %v711 = vld [vmem:[%s598 + $0x70] sm:$0xf]
      %v712 = vld [vmem:[%s598 + $0x74] sm:$0xf]
      %v713 = vld [vmem:[%s598 + $0x78] sm:$0xf]
      %v714 = vld [vmem:[%s598 + $0x7c] sm:$0xf]
      %v715 = vld [vmem:[%s598 + $0x80] sm:$0xf]
      %v716 = vld [vmem:[%s598 + $0x84] sm:$0xf]
      %v717 = vld [vmem:[%s598 + $0x88] sm:$0xf]
      %v718 = vld [vmem:[%s598 + $0x8c] sm:$0xf]
      %v719 = vld [vmem:[%s598 + $0x90] sm:$0xf]
      %v720 = vld [vmem:[%s598 + $0x94] sm:$0xf]
      %v721 = vld [vmem:[%s598 + $0x98] sm:$0xf]
      %v722 = vld [vmem:[%s598 + $0x9c] sm:$0xf]
      %v723 = vld [vmem:[%s598 + $0xa0] sm:$0xf]
      %v724 = vld [vmem:[%s598 + $0xa4] sm:$0xf]
      %v725 = vld [vmem:[%s598 + $0xa8] sm:$0xf]
      %v726 = vld [vmem:[%s598 + $0xac] sm:$0xf]
      %v727 = vld [vmem:[%s598 + $0xb0] sm:$0xf]
      %v728 = vld [vmem:[%s598 + $0xb4] sm:$0xf]
      %v729 = vld [vmem:[%s598 + $0xb8] sm:$0xf]
      %v730 = vld [vmem:[%s598 + $0xbc] sm:$0xf]
      %v731 = vld [vmem:[%s598 + $0xc0] sm:$0xf]
      %v732 = vld [vmem:[%s598 + $0xc4] sm:$0xf]
      %v733 = vld [vmem:[%s598 + $0xc8] sm:$0xf]
      %v734 = vld [vmem:[%s598 + $0xcc] sm:$0xf]
      %v735 = vld [vmem:[%s598 + $0xd0] sm:$0xf]
      %v736 = vld [vmem:[%s598 + $0xd4] sm:$0xf]
      %v737 = vld [vmem:[%s598 + $0xd8] sm:$0xf]
      %v738 = vld [vmem:[%s598 + $0xdc] sm:$0xf]
      %v739 = vld [vmem:[%s598 + $0xe0] sm:$0xf]
      %v740 = vld [vmem:[%s598 + $0xe4] sm:$0xf]
      %v741 = vld [vmem:[%s598 + $0xe8] sm:$0xf]
      %v742 = vld [vmem:[%s598 + $0xec] sm:$0xf]
      %v743 = vld [vmem:[%s598 + $0xf0] sm:$0xf]
      %v744 = vld [vmem:[%s598 + $0xf4] sm:$0xf]
      %v745 = vld [vmem:[%s598 + $0xf8] sm:$0xf]
      %v746 = vld [vmem:[%s5] sm:$0x3]
      %v810 = vunpack.c.l.b16 %v683
      %v811 = vunpack.c.l.b16 %v684
      %v812 = vunpack.c.l.b16 %v685
      %v813 = vunpack.c.l.b16 %v686
      %v814 = vunpack.c.l.b16 %v687
      %v815 = vunpack.c.l.b16 %v688
      %v816 = vunpack.c.l.b16 %v689
      %v817 = vunpack.c.l.b16 %v690
      %v818 = vunpack.c.l.b16 %v691
      %v819 = vunpack.c.l.b16 %v692
      %v820 = vunpack.c.l.b16 %v693
      %v821 = vunpack.c.l.b16 %v694
      %v822 = vunpack.c.l.b16 %v695
      %v823 = vunpack.c.l.b16 %v696
      %v824 = vunpack.c.l.b16 %v697
      %v825 = vunpack.c.l.b16 %v698
      %v826 = vunpack.c.l.b16 %v699
      %v827 = vunpack.c.l.b16 %v700
      %v828 = vunpack.c.l.b16 %v701
      %v829 = vunpack.c.l.b16 %v702
      %v830 = vunpack.c.l.b16 %v703
      %v831 = vunpack.c.l.b16 %v704
      %v832 = vunpack.c.l.b16 %v705
      %v833 = vunpack.c.l.b16 %v706
      %v834 = vunpack.c.l.b16 %v707
      %v835 = vunpack.c.l.b16 %v708
      %v836 = vunpack.c.l.b16 %v709
      %v837 = vunpack.c.l.b16 %v710
      %v838 = vunpack.c.l.b16 %v711
      %v839 = vunpack.c.l.b16 %v712
      %v840 = vunpack.c.l.b16 %v713
      %v841 = vunpack.c.l.b16 %v714
      %v842 = vunpack.c.l.b16 %v715
      %v843 = vunpack.c.l.b16 %v716
      %v844 = vunpack.c.l.b16 %v717
      %v845 = vunpack.c.l.b16 %v718
      %v846 = vunpack.c.l.b16 %v719
      %v847 = vunpack.c.l.b16 %v720
      %v848 = vunpack.c.l.b16 %v721
      %v849 = vunpack.c.l.b16 %v722
      %v850 = vunpack.c.l.b16 %v723
      %v851 = vunpack.c.l.b16 %v724
      %v852 = vunpack.c.l.b16 %v725
      %v853 = vunpack.c.l.b16 %v726
      %v854 = vunpack.c.l.b16 %v727
      %v855 = vunpack.c.l.b16 %v728
      %v856 = vunpack.c.l.b16 %v729
      %v857 = vunpack.c.l.b16 %v730
      %v858 = vunpack.c.l.b16 %v731
      %v859 = vunpack.c.l.b16 %v732
      %v860 = vunpack.c.l.b16 %v733
      %v861 = vunpack.c.l.b16 %v734
      %v862 = vunpack.c.l.b16 %v735
      %v863 = vunpack.c.l.b16 %v736
      %v864 = vunpack.c.l.b16 %v737
      %v865 = vunpack.c.l.b16 %v738
      %v866 = vunpack.c.l.b16 %v739
      %v867 = vunpack.c.l.b16 %v740
      %v868 = vunpack.c.l.b16 %v741
      %v869 = vunpack.c.l.b16 %v742
      %v870 = vunpack.c.l.b16 %v743
      %v871 = vunpack.c.l.b16 %v744
      %v872 = vunpack.c.l.b16 %v745
      %v873 = vpack.c.b16 %v811, %v810
      %v874 = vpack.c.b16 %v813, %v812
      %v875 = vpack.c.b16 %v815, %v814
      %v876 = vpack.c.b16 %v817, %v816
      %v877 = vpack.c.b16 %v819, %v818
      %v878 = vpack.c.b16 %v821, %v820
      %v879 = vpack.c.b16 %v823, %v822
      %v880 = vpack.c.b16 %v825, %v824
      %v881 = vpack.c.b16 %v827, %v826
      %v882 = vpack.c.b16 %v829, %v828
      %v883 = vpack.c.b16 %v831, %v830
      %v884 = vpack.c.b16 %v833, %v832
      %v885 = vpack.c.b16 %v835, %v834
      %v886 = vpack.c.b16 %v837, %v836
      %v887 = vpack.c.b16 %v839, %v838
      %v888 = vpack.c.b16 %v841, %v840
      %v889 = vpack.c.b16 %v843, %v842
      %v890 = vpack.c.b16 %v845, %v844
      %v891 = vpack.c.b16 %v847, %v846
      %v892 = vpack.c.b16 %v849, %v848
      %v893 = vpack.c.b16 %v851, %v850
      %v894 = vpack.c.b16 %v853, %v852
      %v895 = vpack.c.b16 %v855, %v854
      %v896 = vpack.c.b16 %v857, %v856
      %v897 = vpack.c.b16 %v859, %v858
      %v898 = vpack.c.b16 %v861, %v860
      %v899 = vpack.c.b16 %v863, %v862
      %v900 = vpack.c.b16 %v865, %v864
      %v901 = vpack.c.b16 %v867, %v866
      %v902 = vpack.c.b16 %v869, %v868
      %v903 = vpack.c.b16 %v871, %v870
      %v904 = vpack.c.b16 %v872, %v872
      %vm905 = vcmask 23552
      %v907 = vsel %vm905, %v873, 0
      %v910 = vsel %vm905, %v874, 0
      %v913 = vsel %vm905, %v875, 0
      %v916 = vsel %vm905, %v876, 0
      %v919 = vsel %vm905, %v877, 0
      %v922 = vsel %vm905, %v878, 0
      %v925 = vsel %vm905, %v879, 0
      %v928 = vsel %vm905, %v880, 0
      %v931 = vsel %vm905, %v881, 0
      %v934 = vsel %vm905, %v882, 0
      %v937 = vsel %vm905, %v883, 0
      %v940 = vsel %vm905, %v884, 0
      %v943 = vsel %vm905, %v885, 0
      %v946 = vsel %vm905, %v886, 0
      %v949 = vsel %vm905, %v887, 0
      %v952 = vsel %vm905, %v888, 0
      %v955 = vsel %vm905, %v889, 0
      %v958 = vsel %vm905, %v890, 0
      %v961 = vsel %vm905, %v891, 0
      %v964 = vsel %vm905, %v892, 0
      %v967 = vsel %vm905, %v893, 0
      %v970 = vsel %vm905, %v894, 0
      %v973 = vsel %vm905, %v895, 0
      %v976 = vsel %vm905, %v896, 0
      %v979 = vsel %vm905, %v897, 0
      %v982 = vsel %vm905, %v898, 0
      %v985 = vsel %vm905, %v899, 0
      %v988 = vsel %vm905, %v900, 0
      %v991 = vsel %vm905, %v901, 0
      %v994 = vsel %vm905, %v902, 0
      %v997 = vsel %vm905, %v903, 0
      %v1000 = vsel %vm905, %v904, 0
      %vm1002 = vcmask 1040384
      %vm1003 = vcmask 1041408
      %v1004 = vsel %vm1002, 4294967295, 65535
      %v1005 = vsel %vm1003, %v1004, 0
      %v1007 = vand.u32 %v746, %v1005
      %1009 = vmatprep.subr.bf16.mxu0 0
      %1010 = vmatpush1.bf16.msra.mxu0 %v1007
      %1011 = vmatprep.subr.bf16.mxu0 0
      %1012 = vmatpush1.bf16.msra.mxu0 0
      %1013 = vmatprep.subr.bf16.mxu0 0
      %1014 = vmatpush1.bf16.msra.mxu0 0
      %1015 = vmatprep.subr.bf16.mxu0 0
      %1016 = vmatpush1.bf16.msra.mxu0 0
      %1017 = vmatprep.subr.bf16.mxu0 0
      %1018 = vmatpush1.bf16.msra.mxu0 0
      %1019 = vmatprep.subr.bf16.mxu0 0
      %1020 = vmatpush1.bf16.msra.mxu0 0
      %1021 = vmatprep.subr.bf16.mxu0 0
      %1022 = vmatpush1.bf16.msra.mxu0 0
      %1023 = vmatprep.subr.bf16.mxu0 0
      %1024 = vmatpush1.bf16.msra.mxu0 0
      %1025 = vmatprep.subr.bf16.mxu0 0
      %1026 = vmatpush1.bf16.msra.mxu0 0
      %1027 = vmatprep.subr.bf16.mxu0 0
      %1028 = vmatpush1.bf16.msra.mxu0 0
      %1029 = vmatprep.subr.bf16.mxu0 0
      %1030 = vmatpush1.bf16.msra.mxu0 0
      %1031 = vmatprep.subr.bf16.mxu0 0
      %1032 = vmatpush1.bf16.msra.mxu0 0
      %1033 = vmatprep.subr.bf16.mxu0 0
      %1034 = vmatpush1.bf16.msra.mxu0 0
      %1035 = vmatprep.subr.bf16.mxu0 0
      %1036 = vmatpush1.bf16.msra.mxu0 0
      %1037 = vmatprep.subr.bf16.mxu0 0
      %1038 = vmatpush1.bf16.msra.mxu0 0
      %1039 = vmatprep.subr.bf16.mxu0 0
      %1040 = vmatpush1.bf16.msra.mxu0 0
      %1041 = vmatprep.mubr.bf16.mxu0 0
      %1042 = vmatmul.mubr.bf16.gmra.mrb[0].mxu0 %v907
      %v1043 = vpop.f32.mrb[0].mxu0
      %v1044 = vadd.f32 0.0, %v1043
      %v1045 = vpop.f32.mrb[0].mxu0
      %v1046 = vpop.f32.mrb[0].mxu0
      %v1047 = vadd.f32 0.0, %v1046
      %v1048 = vpop.f32.mrb[0].mxu0
      %1049 = vmatprep.mubr.bf16.mxu0 0
      %1050 = vmatmul.mubr.bf16.gmra.mrb[0].mxu0 %v910
      %v1051 = vpop.f32.mrb[0].mxu0
      %v1052 = vadd.f32 0.0, %v1051
      %v1053 = vpop.f32.mrb[0].mxu0
      %v1054 = vpop.f32.mrb[0].mxu0
      %v1055 = vadd.f32 0.0, %v1054
      %v1056 = vpop.f32.mrb[0].mxu0
      %1057 = vmatprep.mubr.bf16.mxu0 0
      %1058 = vmatmul.mubr.bf16.gmra.mrb[0].mxu0 %v913
      %v1059 = vpop.f32.mrb[0].mxu0
      %v1060 = vadd.f32 0.0, %v1059
      %v1061 = vpop.f32.mrb[0].mxu0
      %v1062 = vpop.f32.mrb[0].mxu0
      %v1063 = vadd.f32 0.0, %v1062
      %v1064 = vpop.f32.mrb[0].mxu0
      %1065 = vmatprep.mubr.bf16.mxu0 0
      %1066 = vmatmul.mubr.bf16.gmra.mrb[0].mxu0 %v916
      %v1067 = vpop.f32.mrb[0].mxu0
      %v1068 = vadd.f32 0.0, %v1067
      %v1069 = vpop.f32.mrb[0].mxu0
      %v1070 = vpop.f32.mrb[0].mxu0
      %v1071 = vadd.f32 0.0, %v1070
      %v1072 = vpop.f32.mrb[0].mxu0
      %1073 = vmatprep.mubr.bf16.mxu0 0
      %1074 = vmatmul.mubr.bf16.gmra.mrb[0].mxu0 %v919
      %v1075 = vpop.f32.mrb[0].mxu0
      %v1076 = vadd.f32 0.0, %v1075
      %v1077 = vpop.f32.mrb[0].mxu0
      %v1078 = vpop.f32.mrb[0].mxu0
      %v1079 = vadd.f32 0.0, %v1078
      %v1080 = vpop.f32.mrb[0].mxu0
      %1081 = vmatprep.mubr.bf16.mxu0 0
      %1082 = vmatmul.mubr.bf16.gmra.mrb[0].mxu0 %v922
      %v1083 = vpop.f32.mrb[0].mxu0
      %v1084 = vadd.f32 0.0, %v1083
      %v1085 = vpop.f32.mrb[0].mxu0
      %v1086 = vpop.f32.mrb[0].mxu0
      %v1087 = vadd.f32 0.0, %v1086
      %v1088 = vpop.f32.mrb[0].mxu0
      %1089 = vmatprep.mubr.bf16.mxu0 0
      %1090 = vmatmul.mubr.bf16.gmra.mrb[0].mxu0 %v925
      %v1091 = vpop.f32.mrb[0].mxu0
      %v1092 = vadd.f32 0.0, %v1091
      %v1093 = vpop.f32.mrb[0].mxu0
      %v1094 = vpop.f32.mrb[0].mxu0
      %v1095 = vadd.f32 0.0, %v1094
      %v1096 = vpop.f32.mrb[0].mxu0
      %1097 = vmatprep.mubr.bf16.mxu0 0
      %1098 = vmatmul.mubr.bf16.gmra.mrb[0].mxu0 %v928
      %v1099 = vpop.f32.mrb[0].mxu0
      %v1100 = vadd.f32 0.0, %v1099
      %v1101 = vpop.f32.mrb[0].mxu0
      %v1102 = vpop.f32.mrb[0].mxu0
      %v1103 = vadd.f32 0.0, %v1102
      %v1104 = vpop.f32.mrb[0].mxu0
      %1105 = vmatprep.mubr.bf16.mxu0 0
      %1106 = vmatmul.mubr.bf16.gmra.mrb[0].mxu0 %v931
      %v1107 = vpop.f32.mrb[0].mxu0
      %v1108 = vadd.f32 0.0, %v1107
      %v1109 = vpop.f32.mrb[0].mxu0
      %v1110 = vpop.f32.mrb[0].mxu0
      %v1111 = vadd.f32 0.0, %v1110
      %v1112 = vpop.f32.mrb[0].mxu0
      %1113 = vmatprep.mubr.bf16.mxu0 0
      %1114 = vmatmul.mubr.bf16.gmra.mrb[0].mxu0 %v934
      %v1115 = vpop.f32.mrb[0].mxu0
      %v1116 = vadd.f32 0.0, %v1115
      %v1117 = vpop.f32.mrb[0].mxu0
      %v1118 = vpop.f32.mrb[0].mxu0
      %v1119 = vadd.f32 0.0, %v1118
      %v1120 = vpop.f32.mrb[0].mxu0
      %1121 = vmatprep.mubr.bf16.mxu0 0
      %1122 = vmatmul.mubr.bf16.gmra.mrb[0].mxu0 %v937
      %v1123 = vpop.f32.mrb[0].mxu0
      %v1124 = vadd.f32 0.0, %v1123
      %v1125 = vpop.f32.mrb[0].mxu0
      %v1126 = vpop.f32.mrb[0].mxu0
      %v1127 = vadd.f32 0.0, %v1126
      %v1128 = vpop.f32.mrb[0].mxu0
      %1129 = vmatprep.mubr.bf16.mxu0 0
      %1130 = vmatmul.mubr.bf16.gmra.mrb[0].mxu0 %v940
      %v1131 = vpop.f32.mrb[0].mxu0
      %v1132 = vadd.f32 0.0, %v1131
      %v1133 = vpop.f32.mrb[0].mxu0
      %v1134 = vpop.f32.mrb[0].mxu0
      %v1135 = vadd.f32 0.0, %v1134
      %v1136 = vpop.f32.mrb[0].mxu0
      %1137 = vmatprep.mubr.bf16.mxu0 0
      %1138 = vmatmul.mubr.bf16.gmra.mrb[0].mxu0 %v943
      %v1139 = vpop.f32.mrb[0].mxu0
      %v1140 = vadd.f32 0.0, %v1139
      %v1141 = vpop.f32.mrb[0].mxu0
      %v1142 = vpop.f32.mrb[0].mxu0
      %v1143 = vadd.f32 0.0, %v1142
      %v1144 = vpop.f32.mrb[0].mxu0
      %1145 = vmatprep.mubr.bf16.mxu0 0
      %1146 = vmatmul.mubr.bf16.gmra.mrb[0].mxu0 %v946
      %v1147 = vpop.f32.mrb[0].mxu0
      %v1148 = vadd.f32 0.0, %v1147
      %v1149 = vpop.f32.mrb[0].mxu0
      %v1150 = vpop.f32.mrb[0].mxu0
      %v1151 = vadd.f32 0.0, %v1150
      %v1152 = vpop.f32.mrb[0].mxu0
      %1153 = vmatprep.mubr.bf16.mxu0 0
      %1154 = vmatmul.mubr.bf16.gmra.mrb[0].mxu0 %v949
      %v1155 = vpop.f32.mrb[0].mxu0
      %v1156 = vadd.f32 0.0, %v1155
      %v1157 = vpop.f32.mrb[0].mxu0
      %v1158 = vpop.f32.mrb[0].mxu0
      %v1159 = vadd.f32 0.0, %v1158
      %v1160 = vpop.f32.mrb[0].mxu0
      %1161 = vmatprep.mubr.bf16.mxu0 0
      %1162 = vmatmul.mubr.bf16.gmra.mrb[0].mxu0 %v952
      %v1163 = vpop.f32.mrb[0].mxu0
      %v1164 = vadd.f32 0.0, %v1163
      %v1165 = vpop.f32.mrb[0].mxu0
      %v1166 = vpop.f32.mrb[0].mxu0
      %v1167 = vadd.f32 0.0, %v1166
      %v1168 = vpop.f32.mrb[0].mxu0
      %1169 = vmatprep.mubr.bf16.mxu0 0
      %1170 = vmatmul.mubr.bf16.gmra.mrb[0].mxu0 %v955
      %v1171 = vpop.f32.mrb[0].mxu0
      %v1172 = vadd.f32 0.0, %v1171
      %v1173 = vpop.f32.mrb[0].mxu0
      %v1174 = vpop.f32.mrb[0].mxu0
      %v1175 = vadd.f32 0.0, %v1174
      %v1176 = vpop.f32.mrb[0].mxu0
      %1177 = vmatprep.mubr.bf16.mxu0 0
      %1178 = vmatmul.mubr.bf16.gmra.mrb[0].mxu0 %v958
      %v1179 = vpop.f32.mrb[0].mxu0
      %v1180 = vadd.f32 0.0, %v1179
      %v1181 = vpop.f32.mrb[0].mxu0
      %v1182 = vpop.f32.mrb[0].mxu0
      %v1183 = vadd.f32 0.0, %v1182
      %v1184 = vpop.f32.mrb[0].mxu0
      %1185 = vmatprep.mubr.bf16.mxu0 0
      %1186 = vmatmul.mubr.bf16.gmra.mrb[0].mxu0 %v961
      %v1187 = vpop.f32.mrb[0].mxu0
      %v1188 = vadd.f32 0.0, %v1187
      %v1189 = vpop.f32.mrb[0].mxu0
      %v1190 = vpop.f32.mrb[0].mxu0
      %v1191 = vadd.f32 0.0, %v1190
      %v1192 = vpop.f32.mrb[0].mxu0
      %1193 = vmatprep.mubr.bf16.mxu0 0
      %1194 = vmatmul.mubr.bf16.gmra.mrb[0].mxu0 %v964
      %v1195 = vpop.f32.mrb[0].mxu0
      %v1196 = vadd.f32 0.0, %v1195
      %v1197 = vpop.f32.mrb[0].mxu0
      %v1198 = vpop.f32.mrb[0].mxu0
      %v1199 = vadd.f32 0.0, %v1198
      %v1200 = vpop.f32.mrb[0].mxu0
      %1201 = vmatprep.mubr.bf16.mxu0 0
      %1202 = vmatmul.mubr.bf16.gmra.mrb[0].mxu0 %v967
      %v1203 = vpop.f32.mrb[0].mxu0
      %v1204 = vadd.f32 0.0, %v1203
      %v1205 = vpop.f32.mrb[0].mxu0
      %v1206 = vpop.f32.mrb[0].mxu0
      %v1207 = vadd.f32 0.0, %v1206
      %v1208 = vpop.f32.mrb[0].mxu0
      %1209 = vmatprep.mubr.bf16.mxu0 0
      %1210 = vmatmul.mubr.bf16.gmra.mrb[0].mxu0 %v970
      %v1211 = vpop.f32.mrb[0].mxu0
      %v1212 = vadd.f32 0.0, %v1211
      %v1213 = vpop.f32.mrb[0].mxu0
      %v1214 = vpop.f32.mrb[0].mxu0
      %v1215 = vadd.f32 0.0, %v1214
      %v1216 = vpop.f32.mrb[0].mxu0
      %1217 = vmatprep.mubr.bf16.mxu0 0
      %1218 = vmatmul.mubr.bf16.gmra.mrb[0].mxu0 %v973
      %v1219 = vpop.f32.mrb[0].mxu0
      %v1220 = vadd.f32 0.0, %v1219
      %v1221 = vpop.f32.mrb[0].mxu0
      %v1222 = vpop.f32.mrb[0].mxu0
      %v1223 = vadd.f32 0.0, %v1222
      %v1224 = vpop.f32.mrb[0].mxu0
      %1225 = vmatprep.mubr.bf16.mxu0 0
      %1226 = vmatmul.mubr.bf16.gmra.mrb[0].mxu0 %v976
      %v1227 = vpop.f32.mrb[0].mxu0
      %v1228 = vadd.f32 0.0, %v1227
      %v1229 = vpop.f32.mrb[0].mxu0
      %v1230 = vpop.f32.mrb[0].mxu0
      %v1231 = vadd.f32 0.0, %v1230
      %v1232 = vpop.f32.mrb[0].mxu0
      %1233 = vmatprep.mubr.bf16.mxu0 0
      %1234 = vmatmul.mubr.bf16.gmra.mrb[0].mxu0 %v979
      %v1235 = vpop.f32.mrb[0].mxu0
      %v1236 = vadd.f32 0.0, %v1235
      %v1237 = vpop.f32.mrb[0].mxu0
      %v1238 = vpop.f32.mrb[0].mxu0
      %v1239 = vadd.f32 0.0, %v1238
      %v1240 = vpop.f32.mrb[0].mxu0
      %1241 = vmatprep.mubr.bf16.mxu0 0
      %1242 = vmatmul.mubr.bf16.gmra.mrb[0].mxu0 %v982
      %v1243 = vpop.f32.mrb[0].mxu0
      %v1244 = vadd.f32 0.0, %v1243
      %v1245 = vpop.f32.mrb[0].mxu0
      %v1246 = vpop.f32.mrb[0].mxu0
      %v1247 = vadd.f32 0.0, %v1246
      %v1248 = vpop.f32.mrb[0].mxu0
      %1249 = vmatprep.mubr.bf16.mxu0 0
      %1250 = vmatmul.mubr.bf16.gmra.mrb[0].mxu0 %v985
      %v1251 = vpop.f32.mrb[0].mxu0
      %v1252 = vadd.f32 0.0, %v1251
      %v1253 = vpop.f32.mrb[0].mxu0
      %v1254 = vpop.f32.mrb[0].mxu0
      %v1255 = vadd.f32 0.0, %v1254
      %v1256 = vpop.f32.mrb[0].mxu0
      %1257 = vmatprep.mubr.bf16.mxu0 0
      %1258 = vmatmul.mubr.bf16.gmra.mrb[0].mxu0 %v988
      %v1259 = vpop.f32.mrb[0].mxu0
      %v1260 = vadd.f32 0.0, %v1259
      %v1261 = vpop.f32.mrb[0].mxu0
      %v1262 = vpop.f32.mrb[0].mxu0
      %v1263 = vadd.f32 0.0, %v1262
      %v1264 = vpop.f32.mrb[0].mxu0
      %1265 = vmatprep.mubr.bf16.mxu0 0
      %1266 = vmatmul.mubr.bf16.gmra.mrb[0].mxu0 %v991
      %v1267 = vpop.f32.mrb[0].mxu0
      %v1268 = vadd.f32 0.0, %v1267
      %v1269 = vpop.f32.mrb[0].mxu0
      %v1270 = vpop.f32.mrb[0].mxu0
      %v1271 = vadd.f32 0.0, %v1270
      %v1272 = vpop.f32.mrb[0].mxu0
      %1273 = vmatprep.mubr.bf16.mxu0 0
      %1274 = vmatmul.mubr.bf16.gmra.mrb[0].mxu0 %v994
      %v1275 = vpop.f32.mrb[0].mxu0
      %v1276 = vadd.f32 0.0, %v1275
      %v1277 = vpop.f32.mrb[0].mxu0
      %v1278 = vpop.f32.mrb[0].mxu0
      %v1279 = vadd.f32 0.0, %v1278
      %v1280 = vpop.f32.mrb[0].mxu0
      %1281 = vmatprep.mubr.bf16.mxu0 0
      %1282 = vmatmul.mubr.bf16.gmra.mrb[0].mxu0 %v997
      %v1283 = vpop.f32.mrb[0].mxu0
      %v1284 = vadd.f32 0.0, %v1283
      %v1285 = vpop.f32.mrb[0].mxu0
      %v1286 = vpop.f32.mrb[0].mxu0
      %v1287 = vadd.f32 0.0, %v1286
      %v1288 = vpop.f32.mrb[0].mxu0
      %1289 = vmatprep.mubr.bf16.mxu0 0
      %1290 = vmatmul.mubr.bf16.gmra.mrb[0].mxu0 %v1000
      %v1291 = vpop.f32.mrb[0].mxu0
      %v1292 = vadd.f32 0.0, %v1291
      %v1293 = vpop.f32.mrb[0].mxu0
      %v1294 = vpop.f32.mrb[0].mxu0
      %v1295 = vpop.f32.mrb[0].mxu0
      %1296 = vdwg.mxu0
      %v1360 = vunpack.c.l.b16 %v619
      %v1361 = vunpack.c.l.b16 %v620
      %v1362 = vunpack.c.l.b16 %v621
      %v1363 = vunpack.c.l.b16 %v622
      %v1364 = vunpack.c.l.b16 %v623
      %v1365 = vunpack.c.l.b16 %v624
      %v1366 = vunpack.c.l.b16 %v625
      %v1367 = vunpack.c.l.b16 %v626
      %v1368 = vunpack.c.l.b16 %v627
      %v1369 = vunpack.c.l.b16 %v628
      %v1370 = vunpack.c.l.b16 %v629
      %v1371 = vunpack.c.l.b16 %v630
      %v1372 = vunpack.c.l.b16 %v631
      %v1373 = vunpack.c.l.b16 %v632
      %v1374 = vunpack.c.l.b16 %v633
      %v1375 = vunpack.c.l.b16 %v634
      %v1376 = vunpack.c.l.b16 %v635
      %v1377 = vunpack.c.l.b16 %v636
      %v1378 = vunpack.c.l.b16 %v637
      %v1379 = vunpack.c.l.b16 %v638
      %v1380 = vunpack.c.l.b16 %v639
      %v1381 = vunpack.c.l.b16 %v640
      %v1382 = vunpack.c.l.b16 %v641
      %v1383 = vunpack.c.l.b16 %v642
      %v1384 = vunpack.c.l.b16 %v643
      %v1385 = vunpack.c.l.b16 %v644
      %v1386 = vunpack.c.l.b16 %v645
      %v1387 = vunpack.c.l.b16 %v646
      %v1388 = vunpack.c.l.b16 %v647
      %v1389 = vunpack.c.l.b16 %v648
      %v1390 = vunpack.c.l.b16 %v649
      %v1391 = vunpack.c.l.b16 %v650
      %v1392 = vunpack.c.l.b16 %v651
      %v1393 = vunpack.c.l.b16 %v652
      %v1394 = vunpack.c.l.b16 %v653
      %v1395 = vunpack.c.l.b16 %v654
      %v1396 = vunpack.c.l.b16 %v655
      %v1397 = vunpack.c.l.b16 %v656
      %v1398 = vunpack.c.l.b16 %v657
      %v1399 = vunpack.c.l.b16 %v658
      %v1400 = vunpack.c.l.b16 %v659
      %v1401 = vunpack.c.l.b16 %v660
      %v1402 = vunpack.c.l.b16 %v661
      %v1403 = vunpack.c.l.b16 %v662
      %v1404 = vunpack.c.l.b16 %v663
      %v1405 = vunpack.c.l.b16 %v664
      %v1406 = vunpack.c.l.b16 %v665
      %v1407 = vunpack.c.l.b16 %v666
      %v1408 = vunpack.c.l.b16 %v667
      %v1409 = vunpack.c.l.b16 %v668
      %v1410 = vunpack.c.l.b16 %v669
      %v1411 = vunpack.c.l.b16 %v670
      %v1412 = vunpack.c.l.b16 %v671
      %v1413 = vunpack.c.l.b16 %v672
      %v1414 = vunpack.c.l.b16 %v673
      %v1415 = vunpack.c.l.b16 %v674
      %v1416 = vunpack.c.l.b16 %v675
      %v1417 = vunpack.c.l.b16 %v676
      %v1418 = vunpack.c.l.b16 %v677
      %v1419 = vunpack.c.l.b16 %v678
      %v1420 = vunpack.c.l.b16 %v679
      %v1421 = vunpack.c.l.b16 %v680
      %v1422 = vunpack.c.l.b16 %v681
      %v1423 = vpack.c.b16 %v1361, %v1360
      %v1424 = vpack.c.b16 %v1363, %v1362
      %v1425 = vpack.c.b16 %v1365, %v1364
      %v1426 = vpack.c.b16 %v1367, %v1366
      %v1427 = vpack.c.b16 %v1369, %v1368
      %v1428 = vpack.c.b16 %v1371, %v1370
      %v1429 = vpack.c.b16 %v1373, %v1372
      %v1430 = vpack.c.b16 %v1375, %v1374
      %v1431 = vpack.c.b16 %v1377, %v1376
      %v1432 = vpack.c.b16 %v1379, %v1378
      %v1433 = vpack.c.b16 %v1381, %v1380
      %v1434 = vpack.c.b16 %v1383, %v1382
      %v1435 = vpack.c.b16 %v1385, %v1384
      %v1436 = vpack.c.b16 %v1387, %v1386
      %v1437 = vpack.c.b16 %v1389, %v1388
      %v1438 = vpack.c.b16 %v1391, %v1390
      %v1439 = vpack.c.b16 %v1393, %v1392
      %v1440 = vpack.c.b16 %v1395, %v1394
      %v1441 = vpack.c.b16 %v1397, %v1396
      %v1442 = vpack.c.b16 %v1399, %v1398
      %v1443 = vpack.c.b16 %v1401, %v1400
      %v1444 = vpack.c.b16 %v1403, %v1402
      %v1445 = vpack.c.b16 %v1405, %v1404
      %v1446 = vpack.c.b16 %v1407, %v1406
      %v1447 = vpack.c.b16 %v1409, %v1408
      %v1448 = vpack.c.b16 %v1411, %v1410
      %v1449 = vpack.c.b16 %v1413, %v1412
      %v1450 = vpack.c.b16 %v1415, %v1414
      %v1451 = vpack.c.b16 %v1417, %v1416
      %v1452 = vpack.c.b16 %v1419, %v1418
      %v1453 = vpack.c.b16 %v1421, %v1420
      %v1454 = vpack.c.b16 %v1422, %v1422
      %v1456 = vsel %vm905, %v1423, 0
      %v1459 = vsel %vm905, %v1424, 0
      %v1462 = vsel %vm905, %v1425, 0
      %v1465 = vsel %vm905, %v1426, 0
      %v1468 = vsel %vm905, %v1427, 0
      %v1471 = vsel %vm905, %v1428, 0
      %v1474 = vsel %vm905, %v1429, 0
      %v1477 = vsel %vm905, %v1430, 0
      %v1480 = vsel %vm905, %v1431, 0
      %v1483 = vsel %vm905, %v1432, 0
      %v1486 = vsel %vm905, %v1433, 0
      %v1489 = vsel %vm905, %v1434, 0
      %v1492 = vsel %vm905, %v1435, 0
      %v1495 = vsel %vm905, %v1436, 0
      %v1498 = vsel %vm905, %v1437, 0
      %v1501 = vsel %vm905, %v1438, 0
      %v1504 = vsel %vm905, %v1439, 0
      %v1507 = vsel %vm905, %v1440, 0
      %v1510 = vsel %vm905, %v1441, 0
      %v1513 = vsel %vm905, %v1442, 0
      %v1516 = vsel %vm905, %v1443, 0
      %v1519 = vsel %vm905, %v1444, 0
      %v1522 = vsel %vm905, %v1445, 0
      %v1525 = vsel %vm905, %v1446, 0
      %v1528 = vsel %vm905, %v1447, 0
      %v1531 = vsel %vm905, %v1448, 0
      %v1534 = vsel %vm905, %v1449, 0
      %v1537 = vsel %vm905, %v1450, 0
      %v1540 = vsel %vm905, %v1451, 0
      %v1543 = vsel %vm905, %v1452, 0
      %v1546 = vsel %vm905, %v1453, 0
      %v1549 = vsel %vm905, %v1454, 0
      %v1552 = vand.u32 %v682, %v1005
      %1554 = vmatprep.subr.bf16.mxu0 0
      %1555 = vmatpush1.bf16.msra.mxu0 %v1552
      %1556 = vmatprep.subr.bf16.mxu0 0
      %1557 = vmatpush1.bf16.msra.mxu0 0
      %1558 = vmatprep.subr.bf16.mxu0 0
      %1559 = vmatpush1.bf16.msra.mxu0 0
      %1560 = vmatprep.subr.bf16.mxu0 0
      %1561 = vmatpush1.bf16.msra.mxu0 0
      %1562 = vmatprep.subr.bf16.mxu0 0
      %1563 = vmatpush1.bf16.msra.mxu0 0
      %1564 = vmatprep.subr.bf16.mxu0 0
      %1565 = vmatpush1.bf16.msra.mxu0 0
      %1566 = vmatprep.subr.bf16.mxu0 0
      %1567 = vmatpush1.bf16.msra.mxu0 0
      %1568 = vmatprep.subr.bf16.mxu0 0
      %1569 = vmatpush1.bf16.msra.mxu0 0
      %1570 = vmatprep.subr.bf16.mxu0 0
      %1571 = vmatpush1.bf16.msra.mxu0 0
      %1572 = vmatprep.subr.bf16.mxu0 0
      %1573 = vmatpush1.bf16.msra.mxu0 0
      %1574 = vmatprep.subr.bf16.mxu0 0
      %1575 = vmatpush1.bf16.msra.mxu0 0
      %1576 = vmatprep.subr.bf16.mxu0 0
      %1577 = vmatpush1.bf16.msra.mxu0 0
      %1578 = vmatprep.subr.bf16.mxu0 0
      %1579 = vmatpush1.bf16.msra.mxu0 0
      %1580 = vmatprep.subr.bf16.mxu0 0
      %1581 = vmatpush1.bf16.msra.mxu0 0
      %1582 = vmatprep.subr.bf16.mxu0 0
      %1583 = vmatpush1.bf16.msra.mxu0 0
      %1584 = vmatprep.subr.bf16.mxu0 0
      %1585 = vmatpush1.bf16.msra.mxu0 0
      %1586 = vmatprep.mubr.bf16.mxu0 0
      %1587 = vmatmul.mubr.bf16.gmra.mrb[0].mxu0 %v1456
      %v1588 = vpop.f32.mrb[0].mxu0
      %v1589 = vadd.f32 %v1044, %v1588
      %v1590 = vpop.f32.mrb[0].mxu0
      %v1591 = vpop.f32.mrb[0].mxu0
      %v1592 = vadd.f32 %v1047, %v1591
      %v1593 = vpop.f32.mrb[0].mxu0
      %1594 = vmatprep.mubr.bf16.mxu0 0
      %1595 = vmatmul.mubr.bf16.gmra.mrb[0].mxu0 %v1459
      %v1596 = vpop.f32.mrb[0].mxu0
      %v1597 = vadd.f32 %v1052, %v1596
      %v1598 = vpop.f32.mrb[0].mxu0
      %v1599 = vpop.f32.mrb[0].mxu0
      %v1600 = vadd.f32 %v1055, %v1599
      %v1601 = vpop.f32.mrb[0].mxu0
      %1602 = vmatprep.mubr.bf16.mxu0 0
      %1603 = vmatmul.mubr.bf16.gmra.mrb[0].mxu0 %v1462
      %v1604 = vpop.f32.mrb[0].mxu0
      %v1605 = vadd.f32 %v1060, %v1604
      %v1606 = vpop.f32.mrb[0].mxu0
      %v1607 = vpop.f32.mrb[0].mxu0
      %v1608 = vadd.f32 %v1063, %v1607
      %v1609 = vpop.f32.mrb[0].mxu0
      %1610 = vmatprep.mubr.bf16.mxu0 0
      %1611 = vmatmul.mubr.bf16.gmra.mrb[0].mxu0 %v1465
      %v1612 = vpop.f32.mrb[0].mxu0
      %v1613 = vadd.f32 %v1068, %v1612
      %v1614 = vpop.f32.mrb[0].mxu0
      %v1615 = vpop.f32.mrb[0].mxu0
      %v1616 = vadd.f32 %v1071, %v1615
      %v1617 = vpop.f32.mrb[0].mxu0
      %1618 = vmatprep.mubr.bf16.mxu0 0
      %1619 = vmatmul.mubr.bf16.gmra.mrb[0].mxu0 %v1468
      %v1620 = vpop.f32.mrb[0].mxu0
      %v1621 = vadd.f32 %v1076, %v1620
      %v1622 = vpop.f32.mrb[0].mxu0
      %v1623 = vpop.f32.mrb[0].mxu0
      %v1624 = vadd.f32 %v1079, %v1623
      %v1625 = vpop.f32.mrb[0].mxu0
      %1626 = vmatprep.mubr.bf16.mxu0 0
      %1627 = vmatmul.mubr.bf16.gmra.mrb[0].mxu0 %v1471
      %v1628 = vpop.f32.mrb[0].mxu0
      %v1629 = vadd.f32 %v1084, %v1628
      %v1630 = vpop.f32.mrb[0].mxu0
      %v1631 = vpop.f32.mrb[0].mxu0
      %v1632 = vadd.f32 %v1087, %v1631
      %v1633 = vpop.f32.mrb[0].mxu0
      %1634 = vmatprep.mubr.bf16.mxu0 0
      %1635 = vmatmul.mubr.bf16.gmra.mrb[0].mxu0 %v1474
      %v1636 = vpop.f32.mrb[0].mxu0
      %v1637 = vadd.f32 %v1092, %v1636
      %v1638 = vpop.f32.mrb[0].mxu0
      %v1639 = vpop.f32.mrb[0].mxu0
      %v1640 = vadd.f32 %v1095, %v1639
      %v1641 = vpop.f32.mrb[0].mxu0
      %1642 = vmatprep.mubr.bf16.mxu0 0
      %1643 = vmatmul.mubr.bf16.gmra.mrb[0].mxu0 %v1477
      %v1644 = vpop.f32.mrb[0].mxu0
      %v1645 = vadd.f32 %v1100, %v1644
      %v1646 = vpop.f32.mrb[0].mxu0
      %v1647 = vpop.f32.mrb[0].mxu0
      %v1648 = vadd.f32 %v1103, %v1647
      %v1649 = vpop.f32.mrb[0].mxu0
      %1650 = vmatprep.mubr.bf16.mxu0 0
      %1651 = vmatmul.mubr.bf16.gmra.mrb[0].mxu0 %v1480
      %v1652 = vpop.f32.mrb[0].mxu0
      %v1653 = vadd.f32 %v1108, %v1652
      %v1654 = vpop.f32.mrb[0].mxu0
      %v1655 = vpop.f32.mrb[0].mxu0
      %v1656 = vadd.f32 %v1111, %v1655
      %v1657 = vpop.f32.mrb[0].mxu0
      %1658 = vmatprep.mubr.bf16.mxu0 0
      %1659 = vmatmul.mubr.bf16.gmra.mrb[0].mxu0 %v1483
      %v1660 = vpop.f32.mrb[0].mxu0
      %v1661 = vadd.f32 %v1116, %v1660
      %v1662 = vpop.f32.mrb[0].mxu0
      %v1663 = vpop.f32.mrb[0].mxu0
      %v1664 = vadd.f32 %v1119, %v1663
      %v1665 = vpop.f32.mrb[0].mxu0
      %1666 = vmatprep.mubr.bf16.mxu0 0
      %1667 = vmatmul.mubr.bf16.gmra.mrb[0].mxu0 %v1486
      %v1668 = vpop.f32.mrb[0].mxu0
      %v1669 = vadd.f32 %v1124, %v1668
      %v1670 = vpop.f32.mrb[0].mxu0
      %v1671 = vpop.f32.mrb[0].mxu0
      %v1672 = vadd.f32 %v1127, %v1671
      %v1673 = vpop.f32.mrb[0].mxu0
      %1674 = vmatprep.mubr.bf16.mxu0 0
      %1675 = vmatmul.mubr.bf16.gmra.mrb[0].mxu0 %v1489
      %v1676 = vpop.f32.mrb[0].mxu0
      %v1677 = vadd.f32 %v1132, %v1676
      %v1678 = vpop.f32.mrb[0].mxu0
      %v1679 = vpop.f32.mrb[0].mxu0
      %v1680 = vadd.f32 %v1135, %v1679
      %v1681 = vpop.f32.mrb[0].mxu0
      %1682 = vmatprep.mubr.bf16.mxu0 0
      %1683 = vmatmul.mubr.bf16.gmra.mrb[0].mxu0 %v1492
      %v1684 = vpop.f32.mrb[0].mxu0
      %v1685 = vadd.f32 %v1140, %v1684
      %v1686 = vpop.f32.mrb[0].mxu0
      %v1687 = vpop.f32.mrb[0].mxu0
      %v1688 = vadd.f32 %v1143, %v1687
      %v1689 = vpop.f32.mrb[0].mxu0
      %1690 = vmatprep.mubr.bf16.mxu0 0
      %1691 = vmatmul.mubr.bf16.gmra.mrb[0].mxu0 %v1495
      %v1692 = vpop.f32.mrb[0].mxu0
      %v1693 = vadd.f32 %v1148, %v1692
      %v1694 = vpop.f32.mrb[0].mxu0
      %v1695 = vpop.f32.mrb[0].mxu0
      %v1696 = vadd.f32 %v1151, %v1695
      %v1697 = vpop.f32.mrb[0].mxu0
      %1698 = vmatprep.mubr.bf16.mxu0 0
      %1699 = vmatmul.mubr.bf16.gmra.mrb[0].mxu0 %v1498
      %v1700 = vpop.f32.mrb[0].mxu0
      %v1701 = vadd.f32 %v1156, %v1700
      %v1702 = vpop.f32.mrb[0].mxu0
      %v1703 = vpop.f32.mrb[0].mxu0
      %v1704 = vadd.f32 %v1159, %v1703
      %v1705 = vpop.f32.mrb[0].mxu0
      %1706 = vmatprep.mubr.bf16.mxu0 0
      %1707 = vmatmul.mubr.bf16.gmra.mrb[0].mxu0 %v1501
      %v1708 = vpop.f32.mrb[0].mxu0
      %v1709 = vadd.f32 %v1164, %v1708
      %v1710 = vpop.f32.mrb[0].mxu0
      %v1711 = vpop.f32.mrb[0].mxu0
      %v1712 = vadd.f32 %v1167, %v1711
      %v1713 = vpop.f32.mrb[0].mxu0
      %1714 = vmatprep.mubr.bf16.mxu0 0
      %1715 = vmatmul.mubr.bf16.gmra.mrb[0].mxu0 %v1504
      %v1716 = vpop.f32.mrb[0].mxu0
      %v1717 = vadd.f32 %v1172, %v1716
      %v1718 = vpop.f32.mrb[0].mxu0
      %v1719 = vpop.f32.mrb[0].mxu0
      %v1720 = vadd.f32 %v1175, %v1719
      %v1721 = vpop.f32.mrb[0].mxu0
      %1722 = vmatprep.mubr.bf16.mxu0 0
      %1723 = vmatmul.mubr.bf16.gmra.mrb[0].mxu0 %v1507
      %v1724 = vpop.f32.mrb[0].mxu0
      %v1725 = vadd.f32 %v1180, %v1724
      %v1726 = vpop.f32.mrb[0].mxu0
      %v1727 = vpop.f32.mrb[0].mxu0
      %v1728 = vadd.f32 %v1183, %v1727
      %v1729 = vpop.f32.mrb[0].mxu0
      %1730 = vmatprep.mubr.bf16.mxu0 0
      %1731 = vmatmul.mubr.bf16.gmra.mrb[0].mxu0 %v1510
      %v1732 = vpop.f32.mrb[0].mxu0
      %v1733 = vadd.f32 %v1188, %v1732
      %v1734 = vpop.f32.mrb[0].mxu0
      %v1735 = vpop.f32.mrb[0].mxu0
      %v1736 = vadd.f32 %v1191, %v1735
      %v1737 = vpop.f32.mrb[0].mxu0
      %1738 = vmatprep.mubr.bf16.mxu0 0
      %1739 = vmatmul.mubr.bf16.gmra.mrb[0].mxu0 %v1513
      %v1740 = vpop.f32.mrb[0].mxu0
      %v1741 = vadd.f32 %v1196, %v1740
      %v1742 = vpop.f32.mrb[0].mxu0
      %v1743 = vpop.f32.mrb[0].mxu0
      %v1744 = vadd.f32 %v1199, %v1743
      %v1745 = vpop.f32.mrb[0].mxu0
      %1746 = vmatprep.mubr.bf16.mxu0 0
      %1747 = vmatmul.mubr.bf16.gmra.mrb[0].mxu0 %v1516
      %v1748 = vpop.f32.mrb[0].mxu0
      %v1749 = vadd.f32 %v1204, %v1748
      %v1750 = vpop.f32.mrb[0].mxu0
      %v1751 = vpop.f32.mrb[0].mxu0
      %v1752 = vadd.f32 %v1207, %v1751
      %v1753 = vpop.f32.mrb[0].mxu0
      %1754 = vmatprep.mubr.bf16.mxu0 0
      %1755 = vmatmul.mubr.bf16.gmra.mrb[0].mxu0 %v1519
      %v1756 = vpop.f32.mrb[0].mxu0
      %v1757 = vadd.f32 %v1212, %v1756
      %v1758 = vpop.f32.mrb[0].mxu0
      %v1759 = vpop.f32.mrb[0].mxu0
      %v1760 = vadd.f32 %v1215, %v1759
      %v1761 = vpop.f32.mrb[0].mxu0
      %1762 = vmatprep.mubr.bf16.mxu0 0
      %1763 = vmatmul.mubr.bf16.gmra.mrb[0].mxu0 %v1522
      %v1764 = vpop.f32.mrb[0].mxu0
      %v1765 = vadd.f32 %v1220, %v1764
      %v1766 = vpop.f32.mrb[0].mxu0
      %v1767 = vpop.f32.mrb[0].mxu0
      %v1768 = vadd.f32 %v1223, %v1767
      %v1769 = vpop.f32.mrb[0].mxu0
      %1770 = vmatprep.mubr.bf16.mxu0 0
      %1771 = vmatmul.mubr.bf16.gmra.mrb[0].mxu0 %v1525
      %v1772 = vpop.f32.mrb[0].mxu0
      %v1773 = vadd.f32 %v1228, %v1772
      %v1774 = vpop.f32.mrb[0].mxu0
      %v1775 = vpop.f32.mrb[0].mxu0
      %v1776 = vadd.f32 %v1231, %v1775
      %v1777 = vpop.f32.mrb[0].mxu0
      %1778 = vmatprep.mubr.bf16.mxu0 0
      %1779 = vmatmul.mubr.bf16.gmra.mrb[0].mxu0 %v1528
      %v1780 = vpop.f32.mrb[0].mxu0
      %v1781 = vadd.f32 %v1236, %v1780
      %v1782 = vpop.f32.mrb[0].mxu0
      %v1783 = vpop.f32.mrb[0].mxu0
      %v1784 = vadd.f32 %v1239, %v1783
      %v1785 = vpop.f32.mrb[0].mxu0
      %1786 = vmatprep.mubr.bf16.mxu0 0
      %1787 = vmatmul.mubr.bf16.gmra.mrb[0].mxu0 %v1531
      %v1788 = vpop.f32.mrb[0].mxu0
      %v1789 = vadd.f32 %v1244, %v1788
      %v1790 = vpop.f32.mrb[0].mxu0
      %v1791 = vpop.f32.mrb[0].mxu0
      %v1792 = vadd.f32 %v1247, %v1791
      %v1793 = vpop.f32.mrb[0].mxu0
      %1794 = vmatprep.mubr.bf16.mxu0 0
      %1795 = vmatmul.mubr.bf16.gmra.mrb[0].mxu0 %v1534
      %v1796 = vpop.f32.mrb[0].mxu0
      %v1797 = vadd.f32 %v1252, %v1796
      %v1798 = vpop.f32.mrb[0].mxu0
      %v1799 = vpop.f32.mrb[0].mxu0
      %v1800 = vadd.f32 %v1255, %v1799
      %v1801 = vpop.f32.mrb[0].mxu0
      %1802 = vmatprep.mubr.bf16.mxu0 0
      %1803 = vmatmul.mubr.bf16.gmra.mrb[0].mxu0 %v1537
      %v1804 = vpop.f32.mrb[0].mxu0
      %v1805 = vadd.f32 %v1260, %v1804
      %v1806 = vpop.f32.mrb[0].mxu0
      %v1807 = vpop.f32.mrb[0].mxu0
      %v1808 = vadd.f32 %v1263, %v1807
      %v1809 = vpop.f32.mrb[0].mxu0
      %1810 = vmatprep.mubr.bf16.mxu0 0
      %1811 = vmatmul.mubr.bf16.gmra.mrb[0].mxu0 %v1540
      %v1812 = vpop.f32.mrb[0].mxu0
      %v1813 = vadd.f32 %v1268, %v1812
      %v1814 = vpop.f32.mrb[0].mxu0
      %v1815 = vpop.f32.mrb[0].mxu0
      %v1816 = vadd.f32 %v1271, %v1815
      %v1817 = vpop.f32.mrb[0].mxu0
      %1818 = vmatprep.mubr.bf16.mxu0 0
      %1819 = vmatmul.mubr.bf16.gmra.mrb[0].mxu0 %v1543
      %v1820 = vpop.f32.mrb[0].mxu0
      %v1821 = vadd.f32 %v1276, %v1820
      %v1822 = vpop.f32.mrb[0].mxu0
      %v1823 = vpop.f32.mrb[0].mxu0
      %v1824 = vadd.f32 %v1279, %v1823
      %v1825 = vpop.f32.mrb[0].mxu0
      %1826 = vmatprep.mubr.bf16.mxu0 0
      %1827 = vmatmul.mubr.bf16.gmra.mrb[0].mxu0 %v1546
      %v1828 = vpop.f32.mrb[0].mxu0
      %v1829 = vadd.f32 %v1284, %v1828
      %v1830 = vpop.f32.mrb[0].mxu0
      %v1831 = vpop.f32.mrb[0].mxu0
      %v1832 = vadd.f32 %v1287, %v1831
      %v1833 = vpop.f32.mrb[0].mxu0
      %1834 = vmatprep.mubr.bf16.mxu0 0
      %1835 = vmatmul.mubr.bf16.gmra.mrb[0].mxu0 %v1549
      %v1836 = vpop.f32.mrb[0].mxu0
      %v1837 = vadd.f32 %v1292, %v1836
      %v1838 = vpop.f32.mrb[0].mxu0
      %v1839 = vpop.f32.mrb[0].mxu0
      %v1840 = vpop.f32.mrb[0].mxu0
      %1841 = vdwg.mxu0
      %v1842 = vld [vmem:[%s604] sm:$0xf]
      %v1843 = vld [vmem:[%s604 + $0x4] sm:$0xf]
      %v1844 = vld [vmem:[%s604 + $0x8] sm:$0xf]
      %v1845 = vld [vmem:[%s604 + $0xc] sm:$0xf]
      %v1846 = vld [vmem:[%s604 + $0x10] sm:$0xf]
      %v1847 = vld [vmem:[%s604 + $0x14] sm:$0xf]
      %v1848 = vld [vmem:[%s604 + $0x18] sm:$0xf]
      %v1849 = vld [vmem:[%s604 + $0x1c] sm:$0xf]
      %v1850 = vld [vmem:[%s604 + $0x20] sm:$0xf]
      %v1851 = vld [vmem:[%s604 + $0x24] sm:$0xf]
      %v1852 = vld [vmem:[%s604 + $0x28] sm:$0xf]
      %v1853 = vld [vmem:[%s604 + $0x2c] sm:$0xf]
      %v1854 = vld [vmem:[%s604 + $0x30] sm:$0xf]
      %v1855 = vld [vmem:[%s604 + $0x34] sm:$0xf]
      %v1856 = vld [vmem:[%s604 + $0x38] sm:$0xf]
      %v1857 = vld [vmem:[%s604 + $0x3c] sm:$0xf]
      %v1858 = vld [vmem:[%s604 + $0x40] sm:$0xf]
      %v1859 = vld [vmem:[%s604 + $0x44] sm:$0xf]
      %v1860 = vld [vmem:[%s604 + $0x48] sm:$0xf]
      %v1861 = vld [vmem:[%s604 + $0x4c] sm:$0xf]
      %v1862 = vld [vmem:[%s604 + $0x50] sm:$0xf]
      %v1863 = vld [vmem:[%s604 + $0x54] sm:$0xf]
      %v1864 = vld [vmem:[%s604 + $0x58] sm:$0xf]
      %v1865 = vld [vmem:[%s604 + $0x5c] sm:$0xf]
      %v1866 = vld [vmem:[%s604 + $0x60] sm:$0xf]
      %v1867 = vld [vmem:[%s604 + $0x64] sm:$0xf]
      %v1868 = vld [vmem:[%s604 + $0x68] sm:$0xf]
      %v1869 = vld [vmem:[%s604 + $0x6c] sm:$0xf]
      %v1870 = vld [vmem:[%s604 + $0x70] sm:$0xf]
      %v1871 = vld [vmem:[%s604 + $0x74] sm:$0xf]
      %v1872 = vld [vmem:[%s604 + $0x78] sm:$0xf]
      %v1873 = vld [vmem:[%s604 + $0x7c] sm:$0xf]
      %v1874 = vld [vmem:[%s604 + $0x80] sm:$0xf]
      %v1875 = vld [vmem:[%s604 + $0x84] sm:$0xf]
      %v1876 = vld [vmem:[%s604 + $0x88] sm:$0xf]
      %v1877 = vld [vmem:[%s604 + $0x8c] sm:$0xf]
      %v1878 = vld [vmem:[%s604 + $0x90] sm:$0xf]
      %v1879 = vld [vmem:[%s604 + $0x94] sm:$0xf]
      %v1880 = vld [vmem:[%s604 + $0x98] sm:$0xf]
      %v1881 = vld [vmem:[%s604 + $0x9c] sm:$0xf]
      %v1882 = vld [vmem:[%s604 + $0xa0] sm:$0xf]
      %v1883 = vld [vmem:[%s604 + $0xa4] sm:$0xf]
      %v1884 = vld [vmem:[%s604 + $0xa8] sm:$0xf]
      %v1885 = vld [vmem:[%s604 + $0xac] sm:$0xf]
      %v1886 = vld [vmem:[%s604 + $0xb0] sm:$0xf]
      %v1887 = vld [vmem:[%s604 + $0xb4] sm:$0xf]
      %v1888 = vld [vmem:[%s604 + $0xb8] sm:$0xf]
      %v1889 = vld [vmem:[%s604 + $0xbc] sm:$0xf]
      %v1890 = vld [vmem:[%s604 + $0xc0] sm:$0xf]
      %v1891 = vld [vmem:[%s604 + $0xc4] sm:$0xf]
      %v1892 = vld [vmem:[%s604 + $0xc8] sm:$0xf]
      %v1893 = vld [vmem:[%s604 + $0xcc] sm:$0xf]
      %v1894 = vld [vmem:[%s604 + $0xd0] sm:$0xf]
      %v1895 = vld [vmem:[%s604 + $0xd4] sm:$0xf]
      %v1896 = vld [vmem:[%s604 + $0xd8] sm:$0xf]
      %v1897 = vld [vmem:[%s604 + $0xdc] sm:$0xf]
      %v1898 = vld [vmem:[%s604 + $0xe0] sm:$0xf]
      %v1899 = vld [vmem:[%s604 + $0xe4] sm:$0xf]
      %v1900 = vld [vmem:[%s604 + $0xe8] sm:$0xf]
      %v1901 = vld [vmem:[%s604 + $0xec] sm:$0xf]
      %v1902 = vld [vmem:[%s604 + $0xf0] sm:$0xf]
      %v1903 = vld [vmem:[%s604 + $0xf4] sm:$0xf]
      %v1904 = vld [vmem:[%s604 + $0xf8] sm:$0xf]
      %v1905 = vld [vmem:[%s6] sm:$0x3]
      %v1969 = vunpack.c.l.b16 %v1842
      %v1970 = vunpack.c.l.b16 %v1843
      %v1971 = vunpack.c.l.b16 %v1844
      %v1972 = vunpack.c.l.b16 %v1845
      %v1973 = vunpack.c.l.b16 %v1846
      %v1974 = vunpack.c.l.b16 %v1847
      %v1975 = vunpack.c.l.b16 %v1848
      %v1976 = vunpack.c.l.b16 %v1849
      %v1977 = vunpack.c.l.b16 %v1850
      %v1978 = vunpack.c.l.b16 %v1851
      %v1979 = vunpack.c.l.b16 %v1852
      %v1980 = vunpack.c.l.b16 %v1853
      %v1981 = vunpack.c.l.b16 %v1854
      %v1982 = vunpack.c.l.b16 %v1855
      %v1983 = vunpack.c.l.b16 %v1856
      %v1984 = vunpack.c.l.b16 %v1857
      %v1985 = vunpack.c.l.b16 %v1858
      %v1986 = vunpack.c.l.b16 %v1859
      %v1987 = vunpack.c.l.b16 %v1860
      %v1988 = vunpack.c.l.b16 %v1861
      %v1989 = vunpack.c.l.b16 %v1862
      %v1990 = vunpack.c.l.b16 %v1863
      %v1991 = vunpack.c.l.b16 %v1864
      %v1992 = vunpack.c.l.b16 %v1865
      %v1993 = vunpack.c.l.b16 %v1866
      %v1994 = vunpack.c.l.b16 %v1867
      %v1995 = vunpack.c.l.b16 %v1868
      %v1996 = vunpack.c.l.b16 %v1869
      %v1997 = vunpack.c.l.b16 %v1870
      %v1998 = vunpack.c.l.b16 %v1871
      %v1999 = vunpack.c.l.b16 %v1872
      %v2000 = vunpack.c.l.b16 %v1873
      %v2001 = vunpack.c.l.b16 %v1874
      %v2002 = vunpack.c.l.b16 %v1875
      %v2003 = vunpack.c.l.b16 %v1876
      %v2004 = vunpack.c.l.b16 %v1877
      %v2005 = vunpack.c.l.b16 %v1878
      %v2006 = vunpack.c.l.b16 %v1879
      %v2007 = vunpack.c.l.b16 %v1880
      %v2008 = vunpack.c.l.b16 %v1881
      %v2009 = vunpack.c.l.b16 %v1882
      %v2010 = vunpack.c.l.b16 %v1883
      %v2011 = vunpack.c.l.b16 %v1884
      %v2012 = vunpack.c.l.b16 %v1885
      %v2013 = vunpack.c.l.b16 %v1886
      %v2014 = vunpack.c.l.b16 %v1887
      %v2015 = vunpack.c.l.b16 %v1888
      %v2016 = vunpack.c.l.b16 %v1889
      %v2017 = vunpack.c.l.b16 %v1890
      %v2018 = vunpack.c.l.b16 %v1891
      %v2019 = vunpack.c.l.b16 %v1892
      %v2020 = vunpack.c.l.b16 %v1893
      %v2021 = vunpack.c.l.b16 %v1894
      %v2022 = vunpack.c.l.b16 %v1895
      %v2023 = vunpack.c.l.b16 %v1896
      %v2024 = vunpack.c.l.b16 %v1897
      %v2025 = vunpack.c.l.b16 %v1898
      %v2026 = vunpack.c.l.b16 %v1899
      %v2027 = vunpack.c.l.b16 %v1900
      %v2028 = vunpack.c.l.b16 %v1901
      %v2029 = vunpack.c.l.b16 %v1902
      %v2030 = vunpack.c.l.b16 %v1903
      %v2031 = vunpack.c.l.b16 %v1904
      %v2032 = vpack.c.b16 %v1970, %v1969
      %v2033 = vpack.c.b16 %v1972, %v1971
      %v2034 = vpack.c.b16 %v1974, %v1973
      %v2035 = vpack.c.b16 %v1976, %v1975
      %v2036 = vpack.c.b16 %v1978, %v1977
      %v2037 = vpack.c.b16 %v1980, %v1979
      %v2038 = vpack.c.b16 %v1982, %v1981
      %v2039 = vpack.c.b16 %v1984, %v1983
      %v2040 = vpack.c.b16 %v1986, %v1985
      %v2041 = vpack.c.b16 %v1988, %v1987
      %v2042 = vpack.c.b16 %v1990, %v1989
      %v2043 = vpack.c.b16 %v1992, %v1991
      %v2044 = vpack.c.b16 %v1994, %v1993
      %v2045 = vpack.c.b16 %v1996, %v1995
      %v2046 = vpack.c.b16 %v1998, %v1997
      %v2047 = vpack.c.b16 %v2000, %v1999
      %v2048 = vpack.c.b16 %v2002, %v2001
      %v2049 = vpack.c.b16 %v2004, %v2003
      %v2050 = vpack.c.b16 %v2006, %v2005
      %v2051 = vpack.c.b16 %v2008, %v2007
      %v2052 = vpack.c.b16 %v2010, %v2009
      %v2053 = vpack.c.b16 %v2012, %v2011
      %v2054 = vpack.c.b16 %v2014, %v2013
      %v2055 = vpack.c.b16 %v2016, %v2015
      %v2056 = vpack.c.b16 %v2018, %v2017
      %v2057 = vpack.c.b16 %v2020, %v2019
      %v2058 = vpack.c.b16 %v2022, %v2021
      %v2059 = vpack.c.b16 %v2024, %v2023
      %v2060 = vpack.c.b16 %v2026, %v2025
      %v2061 = vpack.c.b16 %v2028, %v2027
      %v2062 = vpack.c.b16 %v2030, %v2029
      %v2063 = vpack.c.b16 %v2031, %v2031
      %v2065 = vsel %vm905, %v2032, 0
      %v2068 = vsel %vm905, %v2033, 0
      %v2071 = vsel %vm905, %v2034, 0
      %v2074 = vsel %vm905, %v2035, 0
      %v2077 = vsel %vm905, %v2036, 0
      %v2080 = vsel %vm905, %v2037, 0
      %v2083 = vsel %vm905, %v2038, 0
      %v2086 = vsel %vm905, %v2039, 0
      %v2089 = vsel %vm905, %v2040, 0
      %v2092 = vsel %vm905, %v2041, 0
      %v2095 = vsel %vm905, %v2042, 0
      %v2098 = vsel %vm905, %v2043, 0
      %v2101 = vsel %vm905, %v2044, 0
      %v2104 = vsel %vm905, %v2045, 0
      %v2107 = vsel %vm905, %v2046, 0
      %v2110 = vsel %vm905, %v2047, 0
      %v2113 = vsel %vm905, %v2048, 0
      %v2116 = vsel %vm905, %v2049, 0
      %v2119 = vsel %vm905, %v2050, 0
      %v2122 = vsel %vm905, %v2051, 0
      %v2125 = vsel %vm905, %v2052, 0
      %v2128 = vsel %vm905, %v2053, 0
      %v2131 = vsel %vm905, %v2054, 0
      %v2134 = vsel %vm905, %v2055, 0
      %v2137 = vsel %vm905, %v2056, 0
      %v2140 = vsel %vm905, %v2057, 0
      %v2143 = vsel %vm905, %v2058, 0
      %v2146 = vsel %vm905, %v2059, 0
      %v2149 = vsel %vm905, %v2060, 0
      %v2152 = vsel %vm905, %v2061, 0
      %v2155 = vsel %vm905, %v2062, 0
      %v2158 = vsel %vm905, %v2063, 0
      %v2161 = vand.u32 %v1905, %v1005
      %2163 = vmatprep.subr.bf16.mxu0 0
      %2164 = vmatpush1.bf16.msra.mxu0 %v2161
      %2165 = vmatprep.subr.bf16.mxu0 0
      %2166 = vmatpush1.bf16.msra.mxu0 0
      %2167 = vmatprep.subr.bf16.mxu0 0
      %2168 = vmatpush1.bf16.msra.mxu0 0
      %2169 = vmatprep.subr.bf16.mxu0 0
      %2170 = vmatpush1.bf16.msra.mxu0 0
      %2171 = vmatprep.subr.bf16.mxu0 0
      %2172 = vmatpush1.bf16.msra.mxu0 0
      %2173 = vmatprep.subr.bf16.mxu0 0
      %2174 = vmatpush1.bf16.msra.mxu0 0
      %2175 = vmatprep.subr.bf16.mxu0 0
      %2176 = vmatpush1.bf16.msra.mxu0 0
      %2177 = vmatprep.subr.bf16.mxu0 0
      %2178 = vmatpush1.bf16.msra.mxu0 0
      %2179 = vmatprep.subr.bf16.mxu0 0
      %2180 = vmatpush1.bf16.msra.mxu0 0
      %2181 = vmatprep.subr.bf16.mxu0 0
      %2182 = vmatpush1.bf16.msra.mxu0 0
      %2183 = vmatprep.subr.bf16.mxu0 0
      %2184 = vmatpush1.bf16.msra.mxu0 0
      %2185 = vmatprep.subr.bf16.mxu0 0
      %2186 = vmatpush1.bf16.msra.mxu0 0
      %2187 = vmatprep.subr.bf16.mxu0 0
      %2188 = vmatpush1.bf16.msra.mxu0 0
      %2189 = vmatprep.subr.bf16.mxu0 0
      %2190 = vmatpush1.bf16.msra.mxu0 0
      %2191 = vmatprep.subr.bf16.mxu0 0
      %2192 = vmatpush1.bf16.msra.mxu0 0
      %2193 = vmatprep.subr.bf16.mxu0 0
      %2194 = vmatpush1.bf16.msra.mxu0 0
      %2195 = vmatprep.mubr.bf16.mxu0 0
      %2196 = vmatmul.mubr.bf16.gmra.mrb[0].mxu0 %v2065
      %v2197 = vpop.f32.mrb[0].mxu0
      %v2198 = vadd.f32 0.0, %v2197
      %v2199 = vpop.f32.mrb[0].mxu0
      %v2200 = vpop.f32.mrb[0].mxu0
      %v2201 = vadd.f32 0.0, %v2200
      %v2202 = vpop.f32.mrb[0].mxu0
      %2203 = vmatprep.mubr.bf16.mxu0 0
      %2204 = vmatmul.mubr.bf16.gmra.mrb[0].mxu0 %v2068
      %v2205 = vpop.f32.mrb[0].mxu0
      %v2206 = vadd.f32 0.0, %v2205
      %v2207 = vpop.f32.mrb[0].mxu0
      %v2208 = vpop.f32.mrb[0].mxu0
      %v2209 = vadd.f32 0.0, %v2208
      %v2210 = vpop.f32.mrb[0].mxu0
      %2211 = vmatprep.mubr.bf16.mxu0 0
      %2212 = vmatmul.mubr.bf16.gmra.mrb[0].mxu0 %v2071
      %v2213 = vpop.f32.mrb[0].mxu0
      %v2214 = vadd.f32 0.0, %v2213
      %v2215 = vpop.f32.mrb[0].mxu0
      %v2216 = vpop.f32.mrb[0].mxu0
      %v2217 = vadd.f32 0.0, %v2216
      %v2218 = vpop.f32.mrb[0].mxu0
      %2219 = vmatprep.mubr.bf16.mxu0 0
      %2220 = vmatmul.mubr.bf16.gmra.mrb[0].mxu0 %v2074
      %v2221 = vpop.f32.mrb[0].mxu0
      %v2222 = vadd.f32 0.0, %v2221
      %v2223 = vpop.f32.mrb[0].mxu0
      %v2224 = vpop.f32.mrb[0].mxu0
      %v2225 = vadd.f32 0.0, %v2224
      %v2226 = vpop.f32.mrb[0].mxu0
      %2227 = vmatprep.mubr.bf16.mxu0 0
      %2228 = vmatmul.mubr.bf16.gmra.mrb[0].mxu0 %v2077
      %v2229 = vpop.f32.mrb[0].mxu0
      %v2230 = vadd.f32 0.0, %v2229
      %v2231 = vpop.f32.mrb[0].mxu0
      %v2232 = vpop.f32.mrb[0].mxu0
      %v2233 = vadd.f32 0.0, %v2232
      %v2234 = vpop.f32.mrb[0].mxu0
      %2235 = vmatprep.mubr.bf16.mxu0 0
      %2236 = vmatmul.mubr.bf16.gmra.mrb[0].mxu0 %v2080
      %v2237 = vpop.f32.mrb[0].mxu0
      %v2238 = vadd.f32 0.0, %v2237
      %v2239 = vpop.f32.mrb[0].mxu0
      %v2240 = vpop.f32.mrb[0].mxu0
      %v2241 = vadd.f32 0.0, %v2240
      %v2242 = vpop.f32.mrb[0].mxu0
      %2243 = vmatprep.mubr.bf16.mxu0 0
      %2244 = vmatmul.mubr.bf16.gmra.mrb[0].mxu0 %v2083
      %v2245 = vpop.f32.mrb[0].mxu0
      %v2246 = vadd.f32 0.0, %v2245
      %v2247 = vpop.f32.mrb[0].mxu0
      %v2248 = vpop.f32.mrb[0].mxu0
      %v2249 = vadd.f32 0.0, %v2248
      %v2250 = vpop.f32.mrb[0].mxu0
      %2251 = vmatprep.mubr.bf16.mxu0 0
      %2252 = vmatmul.mubr.bf16.gmra.mrb[0].mxu0 %v2086
      %v2253 = vpop.f32.mrb[0].mxu0
      %v2254 = vadd.f32 0.0, %v2253
      %v2255 = vpop.f32.mrb[0].mxu0
      %v2256 = vpop.f32.mrb[0].mxu0
      %v2257 = vadd.f32 0.0, %v2256
      %v2258 = vpop.f32.mrb[0].mxu0
      %2259 = vmatprep.mubr.bf16.mxu0 0
      %2260 = vmatmul.mubr.bf16.gmra.mrb[0].mxu0 %v2089
      %v2261 = vpop.f32.mrb[0].mxu0
      %v2262 = vadd.f32 0.0, %v2261
      %v2263 = vpop.f32.mrb[0].mxu0
      %v2264 = vpop.f32.mrb[0].mxu0
      %v2265 = vadd.f32 0.0, %v2264
      %v2266 = vpop.f32.mrb[0].mxu0
      %2267 = vmatprep.mubr.bf16.mxu0 0
      %2268 = vmatmul.mubr.bf16.gmra.mrb[0].mxu0 %v2092
      %v2269 = vpop.f32.mrb[0].mxu0
      %v2270 = vadd.f32 0.0, %v2269
      %v2271 = vpop.f32.mrb[0].mxu0
      %v2272 = vpop.f32.mrb[0].mxu0
      %v2273 = vadd.f32 0.0, %v2272
      %v2274 = vpop.f32.mrb[0].mxu0
      %2275 = vmatprep.mubr.bf16.mxu0 0
      %2276 = vmatmul.mubr.bf16.gmra.mrb[0].mxu0 %v2095
      %v2277 = vpop.f32.mrb[0].mxu0
      %v2278 = vadd.f32 0.0, %v2277
      %v2279 = vpop.f32.mrb[0].mxu0
      %v2280 = vpop.f32.mrb[0].mxu0
      %v2281 = vadd.f32 0.0, %v2280
      %v2282 = vpop.f32.mrb[0].mxu0
      %2283 = vmatprep.mubr.bf16.mxu0 0
      %2284 = vmatmul.mubr.bf16.gmra.mrb[0].mxu0 %v2098
      %v2285 = vpop.f32.mrb[0].mxu0
      %v2286 = vadd.f32 0.0, %v2285
      %v2287 = vpop.f32.mrb[0].mxu0
      %v2288 = vpop.f32.mrb[0].mxu0
      %v2289 = vadd.f32 0.0, %v2288
      %v2290 = vpop.f32.mrb[0].mxu0
      %2291 = vmatprep.mubr.bf16.mxu0 0
      %2292 = vmatmul.mubr.bf16.gmra.mrb[0].mxu0 %v2101
      %v2293 = vpop.f32.mrb[0].mxu0
      %v2294 = vadd.f32 0.0, %v2293
      %v2295 = vpop.f32.mrb[0].mxu0
      %v2296 = vpop.f32.mrb[0].mxu0
      %v2297 = vadd.f32 0.0, %v2296
      %v2298 = vpop.f32.mrb[0].mxu0
      %2299 = vmatprep.mubr.bf16.mxu0 0
      %2300 = vmatmul.mubr.bf16.gmra.mrb[0].mxu0 %v2104
      %v2301 = vpop.f32.mrb[0].mxu0
      %v2302 = vadd.f32 0.0, %v2301
      %v2303 = vpop.f32.mrb[0].mxu0
      %v2304 = vpop.f32.mrb[0].mxu0
      %v2305 = vadd.f32 0.0, %v2304
      %v2306 = vpop.f32.mrb[0].mxu0
      %2307 = vmatprep.mubr.bf16.mxu0 0
      %2308 = vmatmul.mubr.bf16.gmra.mrb[0].mxu0 %v2107
      %v2309 = vpop.f32.mrb[0].mxu0
      %v2310 = vadd.f32 0.0, %v2309
      %v2311 = vpop.f32.mrb[0].mxu0
      %v2312 = vpop.f32.mrb[0].mxu0
      %v2313 = vadd.f32 0.0, %v2312
      %v2314 = vpop.f32.mrb[0].mxu0
      %2315 = vmatprep.mubr.bf16.mxu0 0
      %2316 = vmatmul.mubr.bf16.gmra.mrb[0].mxu0 %v2110
      %v2317 = vpop.f32.mrb[0].mxu0
      %v2318 = vadd.f32 0.0, %v2317
      %v2319 = vpop.f32.mrb[0].mxu0
      %v2320 = vpop.f32.mrb[0].mxu0
      %v2321 = vadd.f32 0.0, %v2320
      %v2322 = vpop.f32.mrb[0].mxu0
      %2323 = vmatprep.mubr.bf16.mxu0 0
      %2324 = vmatmul.mubr.bf16.gmra.mrb[0].mxu0 %v2113
      %v2325 = vpop.f32.mrb[0].mxu0
      %v2326 = vadd.f32 0.0, %v2325
      %v2327 = vpop.f32.mrb[0].mxu0
      %v2328 = vpop.f32.mrb[0].mxu0
      %v2329 = vadd.f32 0.0, %v2328
      %v2330 = vpop.f32.mrb[0].mxu0
      %2331 = vmatprep.mubr.bf16.mxu0 0
      %2332 = vmatmul.mubr.bf16.gmra.mrb[0].mxu0 %v2116
      %v2333 = vpop.f32.mrb[0].mxu0
      %v2334 = vadd.f32 0.0, %v2333
      %v2335 = vpop.f32.mrb[0].mxu0
      %v2336 = vpop.f32.mrb[0].mxu0
      %v2337 = vadd.f32 0.0, %v2336
      %v2338 = vpop.f32.mrb[0].mxu0
      %2339 = vmatprep.mubr.bf16.mxu0 0
      %2340 = vmatmul.mubr.bf16.gmra.mrb[0].mxu0 %v2119
      %v2341 = vpop.f32.mrb[0].mxu0
      %v2342 = vadd.f32 0.0, %v2341
      %v2343 = vpop.f32.mrb[0].mxu0
      %v2344 = vpop.f32.mrb[0].mxu0
      %v2345 = vadd.f32 0.0, %v2344
      %v2346 = vpop.f32.mrb[0].mxu0
      %2347 = vmatprep.mubr.bf16.mxu0 0
      %2348 = vmatmul.mubr.bf16.gmra.mrb[0].mxu0 %v2122
      %v2349 = vpop.f32.mrb[0].mxu0
      %v2350 = vadd.f32 0.0, %v2349
      %v2351 = vpop.f32.mrb[0].mxu0
      %v2352 = vpop.f32.mrb[0].mxu0
      %v2353 = vadd.f32 0.0, %v2352
      %v2354 = vpop.f32.mrb[0].mxu0
      %2355 = vmatprep.mubr.bf16.mxu0 0
      %2356 = vmatmul.mubr.bf16.gmra.mrb[0].mxu0 %v2125
      %v2357 = vpop.f32.mrb[0].mxu0
      %v2358 = vadd.f32 0.0, %v2357
      %v2359 = vpop.f32.mrb[0].mxu0
      %v2360 = vpop.f32.mrb[0].mxu0
      %v2361 = vadd.f32 0.0, %v2360
      %v2362 = vpop.f32.mrb[0].mxu0
      %2363 = vmatprep.mubr.bf16.mxu0 0
      %2364 = vmatmul.mubr.bf16.gmra.mrb[0].mxu0 %v2128
      %v2365 = vpop.f32.mrb[0].mxu0
      %v2366 = vadd.f32 0.0, %v2365
      %v2367 = vpop.f32.mrb[0].mxu0
      %v2368 = vpop.f32.mrb[0].mxu0
      %v2369 = vadd.f32 0.0, %v2368
      %v2370 = vpop.f32.mrb[0].mxu0
      %2371 = vmatprep.mubr.bf16.mxu0 0
      %2372 = vmatmul.mubr.bf16.gmra.mrb[0].mxu0 %v2131
      %v2373 = vpop.f32.mrb[0].mxu0
      %v2374 = vadd.f32 0.0, %v2373
      %v2375 = vpop.f32.mrb[0].mxu0
      %v2376 = vpop.f32.mrb[0].mxu0
      %v2377 = vadd.f32 0.0, %v2376
      %v2378 = vpop.f32.mrb[0].mxu0
      %2379 = vmatprep.mubr.bf16.mxu0 0
      %2380 = vmatmul.mubr.bf16.gmra.mrb[0].mxu0 %v2134
      %v2381 = vpop.f32.mrb[0].mxu0
      %v2382 = vadd.f32 0.0, %v2381
      %v2383 = vpop.f32.mrb[0].mxu0
      %v2384 = vpop.f32.mrb[0].mxu0
      %v2385 = vadd.f32 0.0, %v2384
      %v2386 = vpop.f32.mrb[0].mxu0
      %2387 = vmatprep.mubr.bf16.mxu0 0
      %2388 = vmatmul.mubr.bf16.gmra.mrb[0].mxu0 %v2137
      %v2389 = vpop.f32.mrb[0].mxu0
      %v2390 = vadd.f32 0.0, %v2389
      %v2391 = vpop.f32.mrb[0].mxu0
      %v2392 = vpop.f32.mrb[0].mxu0
      %v2393 = vadd.f32 0.0, %v2392
      %v2394 = vpop.f32.mrb[0].mxu0
      %2395 = vmatprep.mubr.bf16.mxu0 0
      %2396 = vmatmul.mubr.bf16.gmra.mrb[0].mxu0 %v2140
      %v2397 = vpop.f32.mrb[0].mxu0
      %v2398 = vadd.f32 0.0, %v2397
      %v2399 = vpop.f32.mrb[0].mxu0
      %v2400 = vpop.f32.mrb[0].mxu0
      %v2401 = vadd.f32 0.0, %v2400
      %v2402 = vpop.f32.mrb[0].mxu0
      %2403 = vmatprep.mubr.bf16.mxu0 0
      %2404 = vmatmul.mubr.bf16.gmra.mrb[0].mxu0 %v2143
      %v2405 = vpop.f32.mrb[0].mxu0
      %v2406 = vadd.f32 0.0, %v2405
      %v2407 = vpop.f32.mrb[0].mxu0
      %v2408 = vpop.f32.mrb[0].mxu0
      %v2409 = vadd.f32 0.0, %v2408
      %v2410 = vpop.f32.mrb[0].mxu0
      %2411 = vmatprep.mubr.bf16.mxu0 0
      %2412 = vmatmul.mubr.bf16.gmra.mrb[0].mxu0 %v2146
      %v2413 = vpop.f32.mrb[0].mxu0
      %v2414 = vadd.f32 0.0, %v2413
      %v2415 = vpop.f32.mrb[0].mxu0
      %v2416 = vpop.f32.mrb[0].mxu0
      %v2417 = vadd.f32 0.0, %v2416
      %v2418 = vpop.f32.mrb[0].mxu0
      %2419 = vmatprep.mubr.bf16.mxu0 0
      %2420 = vmatmul.mubr.bf16.gmra.mrb[0].mxu0 %v2149
      %v2421 = vpop.f32.mrb[0].mxu0
      %v2422 = vadd.f32 0.0, %v2421
      %v2423 = vpop.f32.mrb[0].mxu0
      %v2424 = vpop.f32.mrb[0].mxu0
      %v2425 = vadd.f32 0.0, %v2424
      %v2426 = vpop.f32.mrb[0].mxu0
      %2427 = vmatprep.mubr.bf16.mxu0 0
      %2428 = vmatmul.mubr.bf16.gmra.mrb[0].mxu0 %v2152
      %v2429 = vpop.f32.mrb[0].mxu0
      %v2430 = vadd.f32 0.0, %v2429
      %v2431 = vpop.f32.mrb[0].mxu0
      %v2432 = vpop.f32.mrb[0].mxu0
      %v2433 = vadd.f32 0.0, %v2432
      %v2434 = vpop.f32.mrb[0].mxu0
      %2435 = vmatprep.mubr.bf16.mxu0 0
      %2436 = vmatmul.mubr.bf16.gmra.mrb[0].mxu0 %v2155
      %v2437 = vpop.f32.mrb[0].mxu0
      %v2438 = vadd.f32 0.0, %v2437
      %v2439 = vpop.f32.mrb[0].mxu0
      %v2440 = vpop.f32.mrb[0].mxu0
      %v2441 = vadd.f32 0.0, %v2440
      %v2442 = vpop.f32.mrb[0].mxu0
      %2443 = vmatprep.mubr.bf16.mxu0 0
      %2444 = vmatmul.mubr.bf16.gmra.mrb[0].mxu0 %v2158
      %v2445 = vpop.f32.mrb[0].mxu0
      %v2446 = vadd.f32 0.0, %v2445
      %v2447 = vpop.f32.mrb[0].mxu0
      %v2448 = vpop.f32.mrb[0].mxu0
      %v2449 = vpop.f32.mrb[0].mxu0
      %2450 = vdwg.mxu0
      %v2451 = vadd.f32 %v1589, %v2198
      %v2452 = vadd.f32 %v1592, %v2201
      %v2453 = vadd.f32 %v1597, %v2206
      %v2454 = vadd.f32 %v1600, %v2209
      %v2455 = vadd.f32 %v1605, %v2214
      %v2456 = vadd.f32 %v1608, %v2217
      %v2457 = vadd.f32 %v1613, %v2222
      %v2458 = vadd.f32 %v1616, %v2225
      %v2459 = vadd.f32 %v1621, %v2230
      %v2460 = vadd.f32 %v1624, %v2233
      %v2461 = vadd.f32 %v1629, %v2238
      %v2462 = vadd.f32 %v1632, %v2241
      %v2463 = vadd.f32 %v1637, %v2246
      %v2464 = vadd.f32 %v1640, %v2249
      %v2465 = vadd.f32 %v1645, %v2254
      %v2466 = vadd.f32 %v1648, %v2257
      %v2467 = vadd.f32 %v1653, %v2262
      %v2468 = vadd.f32 %v1656, %v2265
      %v2469 = vadd.f32 %v1661, %v2270
      %v2470 = vadd.f32 %v1664, %v2273
      %v2471 = vadd.f32 %v1669, %v2278
      %v2472 = vadd.f32 %v1672, %v2281
      %v2473 = vadd.f32 %v1677, %v2286
      %v2474 = vadd.f32 %v1680, %v2289
      %v2475 = vadd.f32 %v1685, %v2294
      %v2476 = vadd.f32 %v1688, %v2297
      %v2477 = vadd.f32 %v1693, %v2302
      %v2478 = vadd.f32 %v1696, %v2305
      %v2479 = vadd.f32 %v1701, %v2310
      %v2480 = vadd.f32 %v1704, %v2313
      %v2481 = vadd.f32 %v1709, %v2318
      %v2482 = vadd.f32 %v1712, %v2321
      %v2483 = vadd.f32 %v1717, %v2326
      %v2484 = vadd.f32 %v1720, %v2329
      %v2485 = vadd.f32 %v1725, %v2334
      %v2486 = vadd.f32 %v1728, %v2337
      %v2487 = vadd.f32 %v1733, %v2342
      %v2488 = vadd.f32 %v1736, %v2345
      %v2489 = vadd.f32 %v1741, %v2350
      %v2490 = vadd.f32 %v1744, %v2353
      %v2491 = vadd.f32 %v1749, %v2358
      %v2492 = vadd.f32 %v1752, %v2361
      %v2493 = vadd.f32 %v1757, %v2366
      %v2494 = vadd.f32 %v1760, %v2369
      %v2495 = vadd.f32 %v1765, %v2374
      %v2496 = vadd.f32 %v1768, %v2377
      %v2497 = vadd.f32 %v1773, %v2382
      %v2498 = vadd.f32 %v1776, %v2385
      %v2499 = vadd.f32 %v1781, %v2390
      %v2500 = vadd.f32 %v1784, %v2393
      %v2501 = vadd.f32 %v1789, %v2398
      %v2502 = vadd.f32 %v1792, %v2401
      %v2503 = vadd.f32 %v1797, %v2406
      %v2504 = vadd.f32 %v1800, %v2409
      %v2505 = vadd.f32 %v1805, %v2414
      %v2506 = vadd.f32 %v1808, %v2417
      %v2507 = vadd.f32 %v1813, %v2422
      %v2508 = vadd.f32 %v1816, %v2425
      %v2509 = vadd.f32 %v1821, %v2430
      %v2510 = vadd.f32 %v1824, %v2433
      %v2511 = vadd.f32 %v1829, %v2438
      %v2512 = vadd.f32 %v1832, %v2441
      %v2513 = vadd.f32 %v1837, %v2446
      %v2514 = vld [vmem:[%s610] sm:$0xf]
      %v2515 = vld [vmem:[%s610 + $0x4] sm:$0xf]
      %v2516 = vld [vmem:[%s610 + $0x8] sm:$0xf]
      %v2517 = vld [vmem:[%s610 + $0xc] sm:$0xf]
      %v2518 = vld [vmem:[%s610 + $0x10] sm:$0xf]
      %v2519 = vld [vmem:[%s610 + $0x14] sm:$0xf]
      %v2520 = vld [vmem:[%s610 + $0x18] sm:$0xf]
      %v2521 = vld [vmem:[%s610 + $0x1c] sm:$0xf]
      %v2522 = vld [vmem:[%s610 + $0x20] sm:$0xf]
      %v2523 = vld [vmem:[%s610 + $0x24] sm:$0xf]
      %v2524 = vld [vmem:[%s610 + $0x28] sm:$0xf]
      %v2525 = vld [vmem:[%s610 + $0x2c] sm:$0xf]
      %v2526 = vld [vmem:[%s610 + $0x30] sm:$0xf]
      %v2527 = vld [vmem:[%s610 + $0x34] sm:$0xf]
      %v2528 = vld [vmem:[%s610 + $0x38] sm:$0xf]
      %v2529 = vld [vmem:[%s610 + $0x3c] sm:$0xf]
      %v2530 = vld [vmem:[%s610 + $0x40] sm:$0xf]
      %v2531 = vld [vmem:[%s610 + $0x44] sm:$0xf]
      %v2532 = vld [vmem:[%s610 + $0x48] sm:$0xf]
      %v2533 = vld [vmem:[%s610 + $0x4c] sm:$0xf]
      %v2534 = vld [vmem:[%s610 + $0x50] sm:$0xf]
      %v2535 = vld [vmem:[%s610 + $0x54] sm:$0xf]
      %v2536 = vld [vmem:[%s610 + $0x58] sm:$0xf]
      %v2537 = vld [vmem:[%s610 + $0x5c] sm:$0xf]
      %v2538 = vld [vmem:[%s610 + $0x60] sm:$0xf]
      %v2539 = vld [vmem:[%s610 + $0x64] sm:$0xf]
      %v2540 = vld [vmem:[%s610 + $0x68] sm:$0xf]
      %v2541 = vld [vmem:[%s610 + $0x6c] sm:$0xf]
      %v2542 = vld [vmem:[%s610 + $0x70] sm:$0xf]
      %v2543 = vld [vmem:[%s610 + $0x74] sm:$0xf]
      %v2544 = vld [vmem:[%s610 + $0x78] sm:$0xf]
      %v2545 = vld [vmem:[%s610 + $0x7c] sm:$0xf]
      %v2546 = vld [vmem:[%s610 + $0x80] sm:$0xf]
      %v2547 = vld [vmem:[%s610 + $0x84] sm:$0xf]
      %v2548 = vld [vmem:[%s610 + $0x88] sm:$0xf]
      %v2549 = vld [vmem:[%s610 + $0x8c] sm:$0xf]
      %v2550 = vld [vmem:[%s610 + $0x90] sm:$0xf]
      %v2551 = vld [vmem:[%s610 + $0x94] sm:$0xf]
      %v2552 = vld [vmem:[%s610 + $0x98] sm:$0xf]
      %v2553 = vld [vmem:[%s610 + $0x9c] sm:$0xf]
      %v2554 = vld [vmem:[%s610 + $0xa0] sm:$0xf]
      %v2555 = vld [vmem:[%s610 + $0xa4] sm:$0xf]
      %v2556 = vld [vmem:[%s610 + $0xa8] sm:$0xf]
      %v2557 = vld [vmem:[%s610 + $0xac] sm:$0xf]
      %v2558 = vld [vmem:[%s610 + $0xb0] sm:$0xf]
      %v2559 = vld [vmem:[%s610 + $0xb4] sm:$0xf]
      %v2560 = vld [vmem:[%s610 + $0xb8] sm:$0xf]
      %v2561 = vld [vmem:[%s610 + $0xbc] sm:$0xf]
      %v2562 = vld [vmem:[%s610 + $0xc0] sm:$0xf]
      %v2563 = vld [vmem:[%s610 + $0xc4] sm:$0xf]
      %v2564 = vld [vmem:[%s610 + $0xc8] sm:$0xf]
      %v2565 = vld [vmem:[%s610 + $0xcc] sm:$0xf]
      %v2566 = vld [vmem:[%s610 + $0xd0] sm:$0xf]
      %v2567 = vld [vmem:[%s610 + $0xd4] sm:$0xf]
      %v2568 = vld [vmem:[%s610 + $0xd8] sm:$0xf]
      %v2569 = vld [vmem:[%s610 + $0xdc] sm:$0xf]
      %v2570 = vld [vmem:[%s610 + $0xe0] sm:$0xf]
      %v2571 = vld [vmem:[%s610 + $0xe4] sm:$0xf]
      %v2572 = vld [vmem:[%s610 + $0xe8] sm:$0xf]
      %v2573 = vld [vmem:[%s610 + $0xec] sm:$0xf]
      %v2574 = vld [vmem:[%s610 + $0xf0] sm:$0xf]
      %v2575 = vld [vmem:[%s610 + $0xf4] sm:$0xf]
      %v2576 = vld [vmem:[%s610 + $0xf8] sm:$0xf]
      %v2577 = vld [vmem:[%s7] sm:$0xf]
      %v2578 = vld [vmem:[%s7 + $0x4] sm:$0xf]
      %v2579 = vld [vmem:[%s7 + $0x8] sm:$0xf]
      %v2580 = vld [vmem:[%s7 + $0xc] sm:$0xf]
      %v2644 = vunpack.c.l.b16 %v2514
      %v2645 = vunpack.c.l.b16 %v2515
      %v2646 = vunpack.c.l.b16 %v2516
      %v2647 = vunpack.c.l.b16 %v2517
      %v2648 = vunpack.c.l.b16 %v2518
      %v2649 = vunpack.c.l.b16 %v2519
      %v2650 = vunpack.c.l.b16 %v2520
      %v2651 = vunpack.c.l.b16 %v2521
      %v2652 = vunpack.c.l.b16 %v2522
      %v2653 = vunpack.c.l.b16 %v2523
      %v2654 = vunpack.c.l.b16 %v2524
      %v2655 = vunpack.c.l.b16 %v2525
      %v2656 = vunpack.c.l.b16 %v2526
      %v2657 = vunpack.c.l.b16 %v2527
      %v2658 = vunpack.c.l.b16 %v2528
      %v2659 = vunpack.c.l.b16 %v2529
      %v2660 = vunpack.c.l.b16 %v2530
      %v2661 = vunpack.c.l.b16 %v2531
      %v2662 = vunpack.c.l.b16 %v2532
      %v2663 = vunpack.c.l.b16 %v2533
      %v2664 = vunpack.c.l.b16 %v2534
      %v2665 = vunpack.c.l.b16 %v2535
      %v2666 = vunpack.c.l.b16 %v2536
      %v2667 = vunpack.c.l.b16 %v2537
      %v2668 = vunpack.c.l.b16 %v2538
      %v2669 = vunpack.c.l.b16 %v2539
      %v2670 = vunpack.c.l.b16 %v2540
      %v2671 = vunpack.c.l.b16 %v2541
      %v2672 = vunpack.c.l.b16 %v2542
      %v2673 = vunpack.c.l.b16 %v2543
      %v2674 = vunpack.c.l.b16 %v2544
      %v2675 = vunpack.c.l.b16 %v2545
      %v2676 = vunpack.c.l.b16 %v2546
      %v2677 = vunpack.c.l.b16 %v2547
      %v2678 = vunpack.c.l.b16 %v2548
      %v2679 = vunpack.c.l.b16 %v2549
      %v2680 = vunpack.c.l.b16 %v2550
      %v2681 = vunpack.c.l.b16 %v2551
      %v2682 = vunpack.c.l.b16 %v2552
      %v2683 = vunpack.c.l.b16 %v2553
      %v2684 = vunpack.c.l.b16 %v2554
      %v2685 = vunpack.c.l.b16 %v2555
      %v2686 = vunpack.c.l.b16 %v2556
      %v2687 = vunpack.c.l.b16 %v2557
      %v2688 = vunpack.c.l.b16 %v2558
      %v2689 = vunpack.c.l.b16 %v2559
      %v2690 = vunpack.c.l.b16 %v2560
      %v2691 = vunpack.c.l.b16 %v2561
      %v2692 = vunpack.c.l.b16 %v2562
      %v2693 = vunpack.c.l.b16 %v2563
      %v2694 = vunpack.c.l.b16 %v2564
      %v2695 = vunpack.c.l.b16 %v2565
      %v2696 = vunpack.c.l.b16 %v2566
      %v2697 = vunpack.c.l.b16 %v2567
      %v2698 = vunpack.c.l.b16 %v2568
      %v2699 = vunpack.c.l.b16 %v2569
      %v2700 = vunpack.c.l.b16 %v2570
      %v2701 = vunpack.c.l.b16 %v2571
      %v2702 = vunpack.c.l.b16 %v2572
      %v2703 = vunpack.c.l.b16 %v2573
      %v2704 = vunpack.c.l.b16 %v2574
      %v2705 = vunpack.c.l.b16 %v2575
      %v2706 = vunpack.c.l.b16 %v2576
      %v2707 = vpack.c.b16 %v2645, %v2644
      %v2708 = vpack.c.b16 %v2647, %v2646
      %v2709 = vpack.c.b16 %v2649, %v2648
      %v2710 = vpack.c.b16 %v2651, %v2650
      %v2711 = vpack.c.b16 %v2653, %v2652
      %v2712 = vpack.c.b16 %v2655, %v2654
      %v2713 = vpack.c.b16 %v2657, %v2656
      %v2714 = vpack.c.b16 %v2659, %v2658
      %v2715 = vpack.c.b16 %v2661, %v2660
      %v2716 = vpack.c.b16 %v2663, %v2662
      %v2717 = vpack.c.b16 %v2665, %v2664
      %v2718 = vpack.c.b16 %v2667, %v2666
      %v2719 = vpack.c.b16 %v2669, %v2668
      %v2720 = vpack.c.b16 %v2671, %v2670
      %v2721 = vpack.c.b16 %v2673, %v2672
      %v2722 = vpack.c.b16 %v2675, %v2674
      %v2723 = vpack.c.b16 %v2677, %v2676
      %v2724 = vpack.c.b16 %v2679, %v2678
      %v2725 = vpack.c.b16 %v2681, %v2680
      %v2726 = vpack.c.b16 %v2683, %v2682
      %v2727 = vpack.c.b16 %v2685, %v2684
      %v2728 = vpack.c.b16 %v2687, %v2686
      %v2729 = vpack.c.b16 %v2689, %v2688
      %v2730 = vpack.c.b16 %v2691, %v2690
      %v2731 = vpack.c.b16 %v2693, %v2692
      %v2732 = vpack.c.b16 %v2695, %v2694
      %v2733 = vpack.c.b16 %v2697, %v2696
      %v2734 = vpack.c.b16 %v2699, %v2698
      %v2735 = vpack.c.b16 %v2701, %v2700
      %v2736 = vpack.c.b16 %v2703, %v2702
      %v2737 = vpack.c.b16 %v2705, %v2704
      %v2738 = vpack.c.b16 %v2706, %v2706
      %v2743 = vunpack.c.l.b16 %v2577
      %v2744 = vunpack.c.l.b16 %v2578
      %v2745 = vunpack.c.l.b16 %v2579
      %v2746 = vunpack.c.l.b16 %v2580
      %v2747 = vpack.c.b16 %v2744, %v2743
      %v2748 = vpack.c.b16 %v2746, %v2745
      %vm2751 = vcmask 261120
      %v2753 = vsel %vm2751, %v2707, 0
      %v2756 = vsel %vm2751, %v2708, 0
      %v2759 = vsel %vm2751, %v2709, 0
      %v2762 = vsel %vm2751, %v2710, 0
      %v2765 = vsel %vm2751, %v2711, 0
      %v2768 = vsel %vm2751, %v2712, 0
      %v2771 = vsel %vm2751, %v2713, 0
      %v2774 = vsel %vm2751, %v2714, 0
      %v2777 = vsel %vm2751, %v2715, 0
      %v2780 = vsel %vm2751, %v2716, 0
      %v2783 = vsel %vm2751, %v2717, 0
      %v2786 = vsel %vm2751, %v2718, 0
      %v2789 = vsel %vm2751, %v2719, 0
      %v2792 = vsel %vm2751, %v2720, 0
      %v2795 = vsel %vm2751, %v2721, 0
      %v2798 = vsel %vm2751, %v2722, 0
      %v2801 = vsel %vm2751, %v2723, 0
      %v2804 = vsel %vm2751, %v2724, 0
      %v2807 = vsel %vm2751, %v2725, 0
      %v2810 = vsel %vm2751, %v2726, 0
      %v2813 = vsel %vm2751, %v2727, 0
      %v2816 = vsel %vm2751, %v2728, 0
      %v2819 = vsel %vm2751, %v2729, 0
      %v2822 = vsel %vm2751, %v2730, 0
      %v2825 = vsel %vm2751, %v2731, 0
      %v2828 = vsel %vm2751, %v2732, 0
      %v2831 = vsel %vm2751, %v2733, 0
      %v2834 = vsel %vm2751, %v2734, 0
      %v2837 = vsel %vm2751, %v2735, 0
      %v2840 = vsel %vm2751, %v2736, 0
      %v2843 = vsel %vm2751, %v2737, 0
      %v2846 = vsel %vm2751, %v2738, 0
      %2848 = vmatprep.subr.bf16.mxu0 0
      %2849 = vmatpush1.bf16.msra.mxu0 %v2747
      %2850 = vmatprep.subr.bf16.mxu0 0
      %2851 = vmatpush1.bf16.msra.mxu0 %v2748
      %2852 = vmatprep.subr.bf16.mxu0 0
      %2853 = vmatpush1.bf16.msra.mxu0 0
      %2854 = vmatprep.subr.bf16.mxu0 0
      %2855 = vmatpush1.bf16.msra.mxu0 0
      %2856 = vmatprep.subr.bf16.mxu0 0
      %2857 = vmatpush1.bf16.msra.mxu0 0
      %2858 = vmatprep.subr.bf16.mxu0 0
      %2859 = vmatpush1.bf16.msra.mxu0 0
      %2860 = vmatprep.subr.bf16.mxu0 0
      %2861 = vmatpush1.bf16.msra.mxu0 0
      %2862 = vmatprep.subr.bf16.mxu0 0
      %2863 = vmatpush1.bf16.msra.mxu0 0
      %2864 = vmatprep.subr.bf16.mxu0 0
      %2865 = vmatpush1.bf16.msra.mxu0 0
      %2866 = vmatprep.subr.bf16.mxu0 0
      %2867 = vmatpush1.bf16.msra.mxu0 0
      %2868 = vmatprep.subr.bf16.mxu0 0
      %2869 = vmatpush1.bf16.msra.mxu0 0
      %2870 = vmatprep.subr.bf16.mxu0 0
      %2871 = vmatpush1.bf16.msra.mxu0 0
      %2872 = vmatprep.subr.bf16.mxu0 0
      %2873 = vmatpush1.bf16.msra.mxu0 0
      %2874 = vmatprep.subr.bf16.mxu0 0
      %2875 = vmatpush1.bf16.msra.mxu0 0
      %2876 = vmatprep.subr.bf16.mxu0 0
      %2877 = vmatpush1.bf16.msra.mxu0 0
      %2878 = vmatprep.subr.bf16.mxu0 0
      %2879 = vmatpush1.bf16.msra.mxu0 0
      %2880 = vmatprep.mubr.bf16.mxu0 0
      %2881 = vmatmul.mubr.bf16.gmra.mrb[0].mxu0 %v2753
      %v2882 = vpop.f32.mrb[0].mxu0
      %v2883 = vadd.f32 0.0, %v2882
      %v2884 = vpop.f32.mrb[0].mxu0
      %v2885 = vpop.f32.mrb[0].mxu0
      %v2886 = vadd.f32 0.0, %v2885
      %v2887 = vpop.f32.mrb[0].mxu0
      %2888 = vmatprep.mubr.bf16.mxu0 0
      %2889 = vmatmul.mubr.bf16.gmra.mrb[0].mxu0 %v2756
      %v2890 = vpop.f32.mrb[0].mxu0
      %v2891 = vadd.f32 0.0, %v2890
      %v2892 = vpop.f32.mrb[0].mxu0
      %v2893 = vpop.f32.mrb[0].mxu0
      %v2894 = vadd.f32 0.0, %v2893
      %v2895 = vpop.f32.mrb[0].mxu0
      %2896 = vmatprep.mubr.bf16.mxu0 0
      %2897 = vmatmul.mubr.bf16.gmra.mrb[0].mxu0 %v2759
      %v2898 = vpop.f32.mrb[0].mxu0
      %v2899 = vadd.f32 0.0, %v2898
      %v2900 = vpop.f32.mrb[0].mxu0
      %v2901 = vpop.f32.mrb[0].mxu0
      %v2902 = vadd.f32 0.0, %v2901
      %v2903 = vpop.f32.mrb[0].mxu0
      %2904 = vmatprep.mubr.bf16.mxu0 0
      %2905 = vmatmul.mubr.bf16.gmra.mrb[0].mxu0 %v2762
      %v2906 = vpop.f32.mrb[0].mxu0
      %v2907 = vadd.f32 0.0, %v2906
      %v2908 = vpop.f32.mrb[0].mxu0
      %v2909 = vpop.f32.mrb[0].mxu0
      %v2910 = vadd.f32 0.0, %v2909
      %v2911 = vpop.f32.mrb[0].mxu0
      %2912 = vmatprep.mubr.bf16.mxu0 0
      %2913 = vmatmul.mubr.bf16.gmra.mrb[0].mxu0 %v2765
      %v2914 = vpop.f32.mrb[0].mxu0
      %v2915 = vadd.f32 0.0, %v2914
      %v2916 = vpop.f32.mrb[0].mxu0
      %v2917 = vpop.f32.mrb[0].mxu0
      %v2918 = vadd.f32 0.0, %v2917
      %v2919 = vpop.f32.mrb[0].mxu0
      %2920 = vmatprep.mubr.bf16.mxu0 0
      %2921 = vmatmul.mubr.bf16.gmra.mrb[0].mxu0 %v2768
      %v2922 = vpop.f32.mrb[0].mxu0
      %v2923 = vadd.f32 0.0, %v2922
      %v2924 = vpop.f32.mrb[0].mxu0
      %v2925 = vpop.f32.mrb[0].mxu0
      %v2926 = vadd.f32 0.0, %v2925
      %v2927 = vpop.f32.mrb[0].mxu0
      %2928 = vmatprep.mubr.bf16.mxu0 0
      %2929 = vmatmul.mubr.bf16.gmra.mrb[0].mxu0 %v2771
      %v2930 = vpop.f32.mrb[0].mxu0
      %v2931 = vadd.f32 0.0, %v2930
      %v2932 = vpop.f32.mrb[0].mxu0
      %v2933 = vpop.f32.mrb[0].mxu0
      %v2934 = vadd.f32 0.0, %v2933
      %v2935 = vpop.f32.mrb[0].mxu0
      %2936 = vmatprep.mubr.bf16.mxu0 0
      %2937 = vmatmul.mubr.bf16.gmra.mrb[0].mxu0 %v2774
      %v2938 = vpop.f32.mrb[0].mxu0
      %v2939 = vadd.f32 0.0, %v2938
      %v2940 = vpop.f32.mrb[0].mxu0
      %v2941 = vpop.f32.mrb[0].mxu0
      %v2942 = vadd.f32 0.0, %v2941
      %v2943 = vpop.f32.mrb[0].mxu0
      %2944 = vmatprep.mubr.bf16.mxu0 0
      %2945 = vmatmul.mubr.bf16.gmra.mrb[0].mxu0 %v2777
      %v2946 = vpop.f32.mrb[0].mxu0
      %v2947 = vadd.f32 0.0, %v2946
      %v2948 = vpop.f32.mrb[0].mxu0
      %v2949 = vpop.f32.mrb[0].mxu0
      %v2950 = vadd.f32 0.0, %v2949
      %v2951 = vpop.f32.mrb[0].mxu0
      %2952 = vmatprep.mubr.bf16.mxu0 0
      %2953 = vmatmul.mubr.bf16.gmra.mrb[0].mxu0 %v2780
      %v2954 = vpop.f32.mrb[0].mxu0
      %v2955 = vadd.f32 0.0, %v2954
      %v2956 = vpop.f32.mrb[0].mxu0
      %v2957 = vpop.f32.mrb[0].mxu0
      %v2958 = vadd.f32 0.0, %v2957
      %v2959 = vpop.f32.mrb[0].mxu0
      %2960 = vmatprep.mubr.bf16.mxu0 0
      %2961 = vmatmul.mubr.bf16.gmra.mrb[0].mxu0 %v2783
      %v2962 = vpop.f32.mrb[0].mxu0
      %v2963 = vadd.f32 0.0, %v2962
      %v2964 = vpop.f32.mrb[0].mxu0
      %v2965 = vpop.f32.mrb[0].mxu0
      %v2966 = vadd.f32 0.0, %v2965
      %v2967 = vpop.f32.mrb[0].mxu0
      %2968 = vmatprep.mubr.bf16.mxu0 0
      %2969 = vmatmul.mubr.bf16.gmra.mrb[0].mxu0 %v2786
      %v2970 = vpop.f32.mrb[0].mxu0
      %v2971 = vadd.f32 0.0, %v2970
      %v2972 = vpop.f32.mrb[0].mxu0
      %v2973 = vpop.f32.mrb[0].mxu0
      %v2974 = vadd.f32 0.0, %v2973
      %v2975 = vpop.f32.mrb[0].mxu0
      %2976 = vmatprep.mubr.bf16.mxu0 0
      %2977 = vmatmul.mubr.bf16.gmra.mrb[0].mxu0 %v2789
      %v2978 = vpop.f32.mrb[0].mxu0
      %v2979 = vadd.f32 0.0, %v2978
      %v2980 = vpop.f32.mrb[0].mxu0
      %v2981 = vpop.f32.mrb[0].mxu0
      %v2982 = vadd.f32 0.0, %v2981
      %v2983 = vpop.f32.mrb[0].mxu0
      %2984 = vmatprep.mubr.bf16.mxu0 0
      %2985 = vmatmul.mubr.bf16.gmra.mrb[0].mxu0 %v2792
      %v2986 = vpop.f32.mrb[0].mxu0
      %v2987 = vadd.f32 0.0, %v2986
      %v2988 = vpop.f32.mrb[0].mxu0
      %v2989 = vpop.f32.mrb[0].mxu0
      %v2990 = vadd.f32 0.0, %v2989
      %v2991 = vpop.f32.mrb[0].mxu0
      %2992 = vmatprep.mubr.bf16.mxu0 0
      %2993 = vmatmul.mubr.bf16.gmra.mrb[0].mxu0 %v2795
      %v2994 = vpop.f32.mrb[0].mxu0
      %v2995 = vadd.f32 0.0, %v2994
      %v2996 = vpop.f32.mrb[0].mxu0
      %v2997 = vpop.f32.mrb[0].mxu0
      %v2998 = vadd.f32 0.0, %v2997
      %v2999 = vpop.f32.mrb[0].mxu0
      %3000 = vmatprep.mubr.bf16.mxu0 0
      %3001 = vmatmul.mubr.bf16.gmra.mrb[0].mxu0 %v2798
      %v3002 = vpop.f32.mrb[0].mxu0
      %v3003 = vadd.f32 0.0, %v3002
      %v3004 = vpop.f32.mrb[0].mxu0
      %v3005 = vpop.f32.mrb[0].mxu0
      %v3006 = vadd.f32 0.0, %v3005
      %v3007 = vpop.f32.mrb[0].mxu0
      %3008 = vmatprep.mubr.bf16.mxu0 0
      %3009 = vmatmul.mubr.bf16.gmra.mrb[0].mxu0 %v2801
      %v3010 = vpop.f32.mrb[0].mxu0
      %v3011 = vadd.f32 0.0, %v3010
      %v3012 = vpop.f32.mrb[0].mxu0
      %v3013 = vpop.f32.mrb[0].mxu0
      %v3014 = vadd.f32 0.0, %v3013
      %v3015 = vpop.f32.mrb[0].mxu0
      %3016 = vmatprep.mubr.bf16.mxu0 0
      %3017 = vmatmul.mubr.bf16.gmra.mrb[0].mxu0 %v2804
      %v3018 = vpop.f32.mrb[0].mxu0
      %v3019 = vadd.f32 0.0, %v3018
      %v3020 = vpop.f32.mrb[0].mxu0
      %v3021 = vpop.f32.mrb[0].mxu0
      %v3022 = vadd.f32 0.0, %v3021
      %v3023 = vpop.f32.mrb[0].mxu0
      %3024 = vmatprep.mubr.bf16.mxu0 0
      %3025 = vmatmul.mubr.bf16.gmra.mrb[0].mxu0 %v2807
      %v3026 = vpop.f32.mrb[0].mxu0
      %v3027 = vadd.f32 0.0, %v3026
      %v3028 = vpop.f32.mrb[0].mxu0
      %v3029 = vpop.f32.mrb[0].mxu0
      %v3030 = vadd.f32 0.0, %v3029
      %v3031 = vpop.f32.mrb[0].mxu0
      %3032 = vmatprep.mubr.bf16.mxu0 0
      %3033 = vmatmul.mubr.bf16.gmra.mrb[0].mxu0 %v2810
      %v3034 = vpop.f32.mrb[0].mxu0
      %v3035 = vadd.f32 0.0, %v3034
      %v3036 = vpop.f32.mrb[0].mxu0
      %v3037 = vpop.f32.mrb[0].mxu0
      %v3038 = vadd.f32 0.0, %v3037
      %v3039 = vpop.f32.mrb[0].mxu0
      %3040 = vmatprep.mubr.bf16.mxu0 0
      %3041 = vmatmul.mubr.bf16.gmra.mrb[0].mxu0 %v2813
      %v3042 = vpop.f32.mrb[0].mxu0
      %v3043 = vadd.f32 0.0, %v3042
      %v3044 = vpop.f32.mrb[0].mxu0
      %v3045 = vpop.f32.mrb[0].mxu0
      %v3046 = vadd.f32 0.0, %v3045
      %v3047 = vpop.f32.mrb[0].mxu0
      %3048 = vmatprep.mubr.bf16.mxu0 0
      %3049 = vmatmul.mubr.bf16.gmra.mrb[0].mxu0 %v2816
      %v3050 = vpop.f32.mrb[0].mxu0
      %v3051 = vadd.f32 0.0, %v3050
      %v3052 = vpop.f32.mrb[0].mxu0
      %v3053 = vpop.f32.mrb[0].mxu0
      %v3054 = vadd.f32 0.0, %v3053
      %v3055 = vpop.f32.mrb[0].mxu0
      %3056 = vmatprep.mubr.bf16.mxu0 0
      %3057 = vmatmul.mubr.bf16.gmra.mrb[0].mxu0 %v2819
      %v3058 = vpop.f32.mrb[0].mxu0
      %v3059 = vadd.f32 0.0, %v3058
      %v3060 = vpop.f32.mrb[0].mxu0
      %v3061 = vpop.f32.mrb[0].mxu0
      %v3062 = vadd.f32 0.0, %v3061
      %v3063 = vpop.f32.mrb[0].mxu0
      %3064 = vmatprep.mubr.bf16.mxu0 0
      %3065 = vmatmul.mubr.bf16.gmra.mrb[0].mxu0 %v2822
      %v3066 = vpop.f32.mrb[0].mxu0
      %v3067 = vadd.f32 0.0, %v3066
      %v3068 = vpop.f32.mrb[0].mxu0
      %v3069 = vpop.f32.mrb[0].mxu0
      %v3070 = vadd.f32 0.0, %v3069
      %v3071 = vpop.f32.mrb[0].mxu0
      %3072 = vmatprep.mubr.bf16.mxu0 0
      %3073 = vmatmul.mubr.bf16.gmra.mrb[0].mxu0 %v2825
      %v3074 = vpop.f32.mrb[0].mxu0
      %v3075 = vadd.f32 0.0, %v3074
      %v3076 = vpop.f32.mrb[0].mxu0
      %v3077 = vpop.f32.mrb[0].mxu0
      %v3078 = vadd.f32 0.0, %v3077
      %v3079 = vpop.f32.mrb[0].mxu0
      %3080 = vmatprep.mubr.bf16.mxu0 0
      %3081 = vmatmul.mubr.bf16.gmra.mrb[0].mxu0 %v2828
      %v3082 = vpop.f32.mrb[0].mxu0
      %v3083 = vadd.f32 0.0, %v3082
      %v3084 = vpop.f32.mrb[0].mxu0
      %v3085 = vpop.f32.mrb[0].mxu0
      %v3086 = vadd.f32 0.0, %v3085
      %v3087 = vpop.f32.mrb[0].mxu0
      %3088 = vmatprep.mubr.bf16.mxu0 0
      %3089 = vmatmul.mubr.bf16.gmra.mrb[0].mxu0 %v2831
      %v3090 = vpop.f32.mrb[0].mxu0
      %v3091 = vadd.f32 0.0, %v3090
      %v3092 = vpop.f32.mrb[0].mxu0
      %v3093 = vpop.f32.mrb[0].mxu0
      %v3094 = vadd.f32 0.0, %v3093
      %v3095 = vpop.f32.mrb[0].mxu0
      %3096 = vmatprep.mubr.bf16.mxu0 0
      %3097 = vmatmul.mubr.bf16.gmra.mrb[0].mxu0 %v2834
      %v3098 = vpop.f32.mrb[0].mxu0
      %v3099 = vadd.f32 0.0, %v3098
      %v3100 = vpop.f32.mrb[0].mxu0
      %v3101 = vpop.f32.mrb[0].mxu0
      %v3102 = vadd.f32 0.0, %v3101
      %v3103 = vpop.f32.mrb[0].mxu0
      %3104 = vmatprep.mubr.bf16.mxu0 0
      %3105 = vmatmul.mubr.bf16.gmra.mrb[0].mxu0 %v2837
      %v3106 = vpop.f32.mrb[0].mxu0
      %v3107 = vadd.f32 0.0, %v3106
      %v3108 = vpop.f32.mrb[0].mxu0
      %v3109 = vpop.f32.mrb[0].mxu0
      %v3110 = vadd.f32 0.0, %v3109
      %v3111 = vpop.f32.mrb[0].mxu0
      %3112 = vmatprep.mubr.bf16.mxu0 0
      %3113 = vmatmul.mubr.bf16.gmra.mrb[0].mxu0 %v2840
      %v3114 = vpop.f32.mrb[0].mxu0
      %v3115 = vadd.f32 0.0, %v3114
      %v3116 = vpop.f32.mrb[0].mxu0
      %v3117 = vpop.f32.mrb[0].mxu0
      %v3118 = vadd.f32 0.0, %v3117
      %v3119 = vpop.f32.mrb[0].mxu0
      %3120 = vmatprep.mubr.bf16.mxu0 0
      %3121 = vmatmul.mubr.bf16.gmra.mrb[0].mxu0 %v2843
      %v3122 = vpop.f32.mrb[0].mxu0
      %v3123 = vadd.f32 0.0, %v3122
      %v3124 = vpop.f32.mrb[0].mxu0
      %v3125 = vpop.f32.mrb[0].mxu0
      %v3126 = vadd.f32 0.0, %v3125
      %v3127 = vpop.f32.mrb[0].mxu0
      %3128 = vmatprep.mubr.bf16.mxu0 0
      %3129 = vmatmul.mubr.bf16.gmra.mrb[0].mxu0 %v2846
      %v3130 = vpop.f32.mrb[0].mxu0
      %v3131 = vadd.f32 0.0, %v3130
      %v3132 = vpop.f32.mrb[0].mxu0
      %v3133 = vpop.f32.mrb[0].mxu0
      %v3134 = vpop.f32.mrb[0].mxu0
      %3135 = vdwg.mxu0
      %v3136 = vadd.f32 %v2451, %v2883
      %v3137 = vadd.f32 %v2452, %v2886
      %v3138 = vadd.f32 %v2453, %v2891
      %v3139 = vadd.f32 %v2454, %v2894
      %v3140 = vadd.f32 %v2455, %v2899
      %v3141 = vadd.f32 %v2456, %v2902
      %v3142 = vadd.f32 %v2457, %v2907
      %v3143 = vadd.f32 %v2458, %v2910
      %v3144 = vadd.f32 %v2459, %v2915
      %v3145 = vadd.f32 %v2460, %v2918
      %v3146 = vadd.f32 %v2461, %v2923
      %v3147 = vadd.f32 %v2462, %v2926
      %v3148 = vadd.f32 %v2463, %v2931
      %v3149 = vadd.f32 %v2464, %v2934
      %v3150 = vadd.f32 %v2465, %v2939
      %v3151 = vadd.f32 %v2466, %v2942
      %v3152 = vadd.f32 %v2467, %v2947
      %v3153 = vadd.f32 %v2468, %v2950
      %v3154 = vadd.f32 %v2469, %v2955
      %v3155 = vadd.f32 %v2470, %v2958
      %v3156 = vadd.f32 %v2471, %v2963
      %v3157 = vadd.f32 %v2472, %v2966
      %v3158 = vadd.f32 %v2473, %v2971
      %v3159 = vadd.f32 %v2474, %v2974
      %v3160 = vadd.f32 %v2475, %v2979
      %v3161 = vadd.f32 %v2476, %v2982
      %v3162 = vadd.f32 %v2477, %v2987
      %v3163 = vadd.f32 %v2478, %v2990
      %v3164 = vadd.f32 %v2479, %v2995
      %v3165 = vadd.f32 %v2480, %v2998
      %v3166 = vadd.f32 %v2481, %v3003
      %v3167 = vadd.f32 %v2482, %v3006
      %v3168 = vadd.f32 %v2483, %v3011
      %v3169 = vadd.f32 %v2484, %v3014
      %v3170 = vadd.f32 %v2485, %v3019
      %v3171 = vadd.f32 %v2486, %v3022
      %v3172 = vadd.f32 %v2487, %v3027
      %v3173 = vadd.f32 %v2488, %v3030
      %v3174 = vadd.f32 %v2489, %v3035
      %v3175 = vadd.f32 %v2490, %v3038
      %v3176 = vadd.f32 %v2491, %v3043
      %v3177 = vadd.f32 %v2492, %v3046
      %v3178 = vadd.f32 %v2493, %v3051
      %v3179 = vadd.f32 %v2494, %v3054
      %v3180 = vadd.f32 %v2495, %v3059
      %v3181 = vadd.f32 %v2496, %v3062
      %v3182 = vadd.f32 %v2497, %v3067
      %v3183 = vadd.f32 %v2498, %v3070
      %v3184 = vadd.f32 %v2499, %v3075
      %v3185 = vadd.f32 %v2500, %v3078
      %v3186 = vadd.f32 %v2501, %v3083
      %v3187 = vadd.f32 %v2502, %v3086
      %v3188 = vadd.f32 %v2503, %v3091
      %v3189 = vadd.f32 %v2504, %v3094
      %v3190 = vadd.f32 %v2505, %v3099
      %v3191 = vadd.f32 %v2506, %v3102
      %v3192 = vadd.f32 %v2507, %v3107
      %v3193 = vadd.f32 %v2508, %v3110
      %v3194 = vadd.f32 %v2509, %v3115
      %v3195 = vadd.f32 %v2510, %v3118
      %v3196 = vadd.f32 %v2511, %v3123
      %v3197 = vadd.f32 %v2512, %v3126
      %v3198 = vadd.f32 %v2513, %v3131
      %v3199 = vld [vmem:[%s8] sm:$0x1]
      %v3201 = vlaneseq
      %v3202 = vshrl.u32 %v3201, 7
      %v3203 = vsub.s32 0, %v3202
      %v3204 = vrot.slane %v3199, %v3203
      %v3206 = vadd.f32 %v3136, %v3204
      %v3207 = vadd.f32 %v3137, %v3204
      %v3208 = vadd.f32 %v3138, %v3204
      %v3209 = vadd.f32 %v3139, %v3204
      %v3210 = vadd.f32 %v3140, %v3204
      %v3211 = vadd.f32 %v3141, %v3204
      %v3212 = vadd.f32 %v3142, %v3204
      %v3213 = vadd.f32 %v3143, %v3204
      %v3214 = vadd.f32 %v3144, %v3204
      %v3215 = vadd.f32 %v3145, %v3204
      %v3216 = vadd.f32 %v3146, %v3204
      %v3217 = vadd.f32 %v3147, %v3204
      %v3218 = vadd.f32 %v3148, %v3204
      %v3219 = vadd.f32 %v3149, %v3204
      %v3220 = vadd.f32 %v3150, %v3204
      %v3221 = vadd.f32 %v3151, %v3204
      %v3222 = vadd.f32 %v3152, %v3204
      %v3223 = vadd.f32 %v3153, %v3204
      %v3224 = vadd.f32 %v3154, %v3204
      %v3225 = vadd.f32 %v3155, %v3204
      %v3226 = vadd.f32 %v3156, %v3204
      %v3227 = vadd.f32 %v3157, %v3204
      %v3228 = vadd.f32 %v3158, %v3204
      %v3229 = vadd.f32 %v3159, %v3204
      %v3230 = vadd.f32 %v3160, %v3204
      %v3231 = vadd.f32 %v3161, %v3204
      %v3232 = vadd.f32 %v3162, %v3204
      %v3233 = vadd.f32 %v3163, %v3204
      %v3234 = vadd.f32 %v3164, %v3204
      %v3235 = vadd.f32 %v3165, %v3204
      %v3236 = vadd.f32 %v3166, %v3204
      %v3237 = vadd.f32 %v3167, %v3204
      %v3238 = vadd.f32 %v3168, %v3204
      %v3239 = vadd.f32 %v3169, %v3204
      %v3240 = vadd.f32 %v3170, %v3204
      %v3241 = vadd.f32 %v3171, %v3204
      %v3242 = vadd.f32 %v3172, %v3204
      %v3243 = vadd.f32 %v3173, %v3204
      %v3244 = vadd.f32 %v3174, %v3204
      %v3245 = vadd.f32 %v3175, %v3204
      %v3246 = vadd.f32 %v3176, %v3204
      %v3247 = vadd.f32 %v3177, %v3204
      %v3248 = vadd.f32 %v3178, %v3204
      %v3249 = vadd.f32 %v3179, %v3204
      %v3250 = vadd.f32 %v3180, %v3204
      %v3251 = vadd.f32 %v3181, %v3204
      %v3252 = vadd.f32 %v3182, %v3204
      %v3253 = vadd.f32 %v3183, %v3204
      %v3254 = vadd.f32 %v3184, %v3204
      %v3255 = vadd.f32 %v3185, %v3204
      %v3256 = vadd.f32 %v3186, %v3204
      %v3257 = vadd.f32 %v3187, %v3204
      %v3258 = vadd.f32 %v3188, %v3204
      %v3259 = vadd.f32 %v3189, %v3204
      %v3260 = vadd.f32 %v3190, %v3204
      %v3261 = vadd.f32 %v3191, %v3204
      %v3262 = vadd.f32 %v3192, %v3204
      %v3263 = vadd.f32 %v3193, %v3204
      %v3264 = vadd.f32 %v3194, %v3204
      %v3265 = vadd.f32 %v3195, %v3204
      %v3266 = vadd.f32 %v3196, %v3204
      %v3267 = vadd.f32 %v3197, %v3204
      %v3268 = vadd.f32 %v3198, %v3204
      %v3269 = vmax.f32 %v3206, 0.0
      %v3270 = vmax.f32 %v3207, 0.0
      %v3271 = vmax.f32 %v3208, 0.0
      %v3272 = vmax.f32 %v3209, 0.0
      %v3273 = vmax.f32 %v3210, 0.0
      %v3274 = vmax.f32 %v3211, 0.0
      %v3275 = vmax.f32 %v3212, 0.0
      %v3276 = vmax.f32 %v3213, 0.0
      %v3277 = vmax.f32 %v3214, 0.0
      %v3278 = vmax.f32 %v3215, 0.0
      %v3279 = vmax.f32 %v3216, 0.0
      %v3280 = vmax.f32 %v3217, 0.0
      %v3281 = vmax.f32 %v3218, 0.0
      %v3282 = vmax.f32 %v3219, 0.0
      %v3283 = vmax.f32 %v3220, 0.0
      %v3284 = vmax.f32 %v3221, 0.0
      %v3285 = vmax.f32 %v3222, 0.0
      %v3286 = vmax.f32 %v3223, 0.0
      %v3287 = vmax.f32 %v3224, 0.0
      %v3288 = vmax.f32 %v3225, 0.0
      %v3289 = vmax.f32 %v3226, 0.0
      %v3290 = vmax.f32 %v3227, 0.0
      %v3291 = vmax.f32 %v3228, 0.0
      %v3292 = vmax.f32 %v3229, 0.0
      %v3293 = vmax.f32 %v3230, 0.0
      %v3294 = vmax.f32 %v3231, 0.0
      %v3295 = vmax.f32 %v3232, 0.0
      %v3296 = vmax.f32 %v3233, 0.0
      %v3297 = vmax.f32 %v3234, 0.0
      %v3298 = vmax.f32 %v3235, 0.0
      %v3299 = vmax.f32 %v3236, 0.0
      %v3300 = vmax.f32 %v3237, 0.0
      %v3301 = vmax.f32 %v3238, 0.0
      %v3302 = vmax.f32 %v3239, 0.0
      %v3303 = vmax.f32 %v3240, 0.0
      %v3304 = vmax.f32 %v3241, 0.0
      %v3305 = vmax.f32 %v3242, 0.0
      %v3306 = vmax.f32 %v3243, 0.0
      %v3307 = vmax.f32 %v3244, 0.0
      %v3308 = vmax.f32 %v3245, 0.0
      %v3309 = vmax.f32 %v3246, 0.0
      %v3310 = vmax.f32 %v3247, 0.0
      %v3311 = vmax.f32 %v3248, 0.0
      %v3312 = vmax.f32 %v3249, 0.0
      %v3313 = vmax.f32 %v3250, 0.0
      %v3314 = vmax.f32 %v3251, 0.0
      %v3315 = vmax.f32 %v3252, 0.0
      %v3316 = vmax.f32 %v3253, 0.0
      %v3317 = vmax.f32 %v3254, 0.0
      %v3318 = vmax.f32 %v3255, 0.0
      %v3319 = vmax.f32 %v3256, 0.0
      %v3320 = vmax.f32 %v3257, 0.0
      %v3321 = vmax.f32 %v3258, 0.0
      %v3322 = vmax.f32 %v3259, 0.0
      %v3323 = vmax.f32 %v3260, 0.0
      %v3324 = vmax.f32 %v3261, 0.0
      %v3325 = vmax.f32 %v3262, 0.0
      %v3326 = vmax.f32 %v3263, 0.0
      %v3327 = vmax.f32 %v3264, 0.0
      %v3328 = vmax.f32 %v3265, 0.0
      %v3329 = vmax.f32 %v3266, 0.0
      %v3330 = vmax.f32 %v3267, 0.0
      %v3331 = vmax.f32 %v3268, 0.0
      %v3332 = vpack.c.bf16 %v3270, %v3269
      %v3333 = vpack.c.bf16 %v3272, %v3271
      %v3334 = vpack.c.bf16 %v3274, %v3273
      %v3335 = vpack.c.bf16 %v3276, %v3275
      %v3336 = vpack.c.bf16 %v3278, %v3277
      %v3337 = vpack.c.bf16 %v3280, %v3279
      %v3338 = vpack.c.bf16 %v3282, %v3281
      %v3339 = vpack.c.bf16 %v3284, %v3283
      %v3340 = vpack.c.bf16 %v3286, %v3285
      %v3341 = vpack.c.bf16 %v3288, %v3287
      %v3342 = vpack.c.bf16 %v3290, %v3289
      %v3343 = vpack.c.bf16 %v3292, %v3291
      %v3344 = vpack.c.bf16 %v3294, %v3293
      %v3345 = vpack.c.bf16 %v3296, %v3295
      %v3346 = vpack.c.bf16 %v3298, %v3297
      %v3347 = vpack.c.bf16 %v3300, %v3299
      %v3348 = vpack.c.bf16 %v3302, %v3301
      %v3349 = vpack.c.bf16 %v3304, %v3303
      %v3350 = vpack.c.bf16 %v3306, %v3305
      %v3351 = vpack.c.bf16 %v3308, %v3307
      %v3352 = vpack.c.bf16 %v3310, %v3309
      %v3353 = vpack.c.bf16 %v3312, %v3311
      %v3354 = vpack.c.bf16 %v3314, %v3313
      %v3355 = vpack.c.bf16 %v3316, %v3315
      %v3356 = vpack.c.bf16 %v3318, %v3317
      %v3357 = vpack.c.bf16 %v3320, %v3319
      %v3358 = vpack.c.bf16 %v3322, %v3321
      %v3359 = vpack.c.bf16 %v3324, %v3323
      %v3360 = vpack.c.bf16 %v3326, %v3325
      %v3361 = vpack.c.bf16 %v3328, %v3327
      %v3362 = vpack.c.bf16 %v3330, %v3329
      %v3363 = vpack.c.bf16 %v3331, %v3331
      %v3364 = vld [vmem:[%s9] sm:$0xf]
      %v3365 = vld [vmem:[%s9 + $0x4] sm:$0xf]
      %v3366 = vld [vmem:[%s9 + $0x8] sm:$0xf]
      %v3367 = vld [vmem:[%s9 + $0xc] sm:$0xf]
      %v3368 = vld [vmem:[%s9 + $0x10] sm:$0xf]
      %v3369 = vld [vmem:[%s9 + $0x14] sm:$0xf]
      %v3370 = vld [vmem:[%s9 + $0x18] sm:$0xf]
      %v3371 = vld [vmem:[%s9 + $0x1c] sm:$0xf]
      %v3372 = vld [vmem:[%s10] sm:$0x1]
      %v3374 = vlaneseq
      %v3375 = vshrl.u32 %v3374, 7
      %v3376 = vsub.s32 0, %v3375
      %v3377 = vrot.slane %v3372, %v3376
      %v3387 = vunpack.c.l.b16 %v3364
      %v3388 = vunpack.c.l.b16 %v3365
      %v3389 = vunpack.c.l.b16 %v3366
      %v3390 = vunpack.c.l.b16 %v3367
      %v3391 = vunpack.c.l.b16 %v3368
      %v3392 = vunpack.c.l.b16 %v3369
      %v3393 = vunpack.c.l.b16 %v3370
      %v3394 = vunpack.c.l.b16 %v3371
      %v3395 = vpack.c.b16 %v3388, %v3387
      %v3396 = vpack.c.b16 %v3390, %v3389
      %v3397 = vpack.c.b16 %v3392, %v3391
      %v3398 = vpack.c.b16 %v3394, %v3393
      %vm3403 = vcmask 523264
      %v3405 = vsel %vm3403, %v3332, 0
      %v3408 = vsel %vm3403, %v3333, 0
      %v3411 = vsel %vm3403, %v3334, 0
      %v3414 = vsel %vm3403, %v3335, 0
      %v3417 = vsel %vm3403, %v3336, 0
      %v3420 = vsel %vm3403, %v3337, 0
      %v3423 = vsel %vm3403, %v3338, 0
      %v3426 = vsel %vm3403, %v3339, 0
      %v3429 = vsel %vm3403, %v3340, 0
      %v3432 = vsel %vm3403, %v3341, 0
      %v3435 = vsel %vm3403, %v3342, 0
      %v3438 = vsel %vm3403, %v3343, 0
      %v3441 = vsel %vm3403, %v3344, 0
      %v3444 = vsel %vm3403, %v3345, 0
      %v3447 = vsel %vm3403, %v3346, 0
      %v3450 = vsel %vm3403, %v3347, 0
      %v3453 = vsel %vm3403, %v3348, 0
      %v3456 = vsel %vm3403, %v3349, 0
      %v3459 = vsel %vm3403, %v3350, 0
      %v3462 = vsel %vm3403, %v3351, 0
      %v3465 = vsel %vm3403, %v3352, 0
      %v3468 = vsel %vm3403, %v3353, 0
      %v3471 = vsel %vm3403, %v3354, 0
      %v3474 = vsel %vm3403, %v3355, 0
      %v3477 = vsel %vm3403, %v3356, 0
      %v3480 = vsel %vm3403, %v3357, 0
      %v3483 = vsel %vm3403, %v3358, 0
      %v3486 = vsel %vm3403, %v3359, 0
      %v3489 = vsel %vm3403, %v3360, 0
      %v3492 = vsel %vm3403, %v3361, 0
      %v3495 = vsel %vm3403, %v3362, 0
      %v3498 = vsel %vm3403, %v3363, 0
      %3500 = vmatprep.subr.bf16.mxu0 0
      %3501 = vmatpush1.bf16.msra.mxu0 %v3395
      %3502 = vmatprep.subr.bf16.mxu0 0
      %3503 = vmatpush1.bf16.msra.mxu0 %v3396
      %3504 = vmatprep.subr.bf16.mxu0 0
      %3505 = vmatpush1.bf16.msra.mxu0 %v3397
      %3506 = vmatprep.subr.bf16.mxu0 0
      %3507 = vmatpush1.bf16.msra.mxu0 %v3398
      %3508 = vmatprep.subr.bf16.mxu0 0
      %3509 = vmatpush1.bf16.msra.mxu0 0
      %3510 = vmatprep.subr.bf16.mxu0 0
      %3511 = vmatpush1.bf16.msra.mxu0 0
      %3512 = vmatprep.subr.bf16.mxu0 0
      %3513 = vmatpush1.bf16.msra.mxu0 0
      %3514 = vmatprep.subr.bf16.mxu0 0
      %3515 = vmatpush1.bf16.msra.mxu0 0
      %3516 = vmatprep.subr.bf16.mxu0 0
      %3517 = vmatpush1.bf16.msra.mxu0 0
      %3518 = vmatprep.subr.bf16.mxu0 0
      %3519 = vmatpush1.bf16.msra.mxu0 0
      %3520 = vmatprep.subr.bf16.mxu0 0
      %3521 = vmatpush1.bf16.msra.mxu0 0
      %3522 = vmatprep.subr.bf16.mxu0 0
      %3523 = vmatpush1.bf16.msra.mxu0 0
      %3524 = vmatprep.subr.bf16.mxu0 0
      %3525 = vmatpush1.bf16.msra.mxu0 0
      %3526 = vmatprep.subr.bf16.mxu0 0
      %3527 = vmatpush1.bf16.msra.mxu0 0
      %3528 = vmatprep.subr.bf16.mxu0 0
      %3529 = vmatpush1.bf16.msra.mxu0 0
      %3530 = vmatprep.subr.bf16.mxu0 0
      %3531 = vmatpush1.bf16.msra.mxu0 0
      %3532 = vmatprep.mubr.bf16.mxu0 0
      %3533 = vmatmul.mubr.bf16.gmra.mrb[0].mxu0 %v3405
      %v3534 = vpop.f32.mrb[0].mxu0
      %v3535 = vadd.f32 %v3377, %v3534
      %v3536 = vpop.f32.mrb[0].mxu0
      %v3537 = vpop.f32.mrb[0].mxu0
      %v3538 = vadd.f32 %v3377, %v3537
      %v3539 = vpop.f32.mrb[0].mxu0
      %3540 = vmatprep.mubr.bf16.mxu0 0
      %3541 = vmatmul.mubr.bf16.gmra.mrb[0].mxu0 %v3408
      %v3542 = vpop.f32.mrb[0].mxu0
      %v3543 = vadd.f32 %v3377, %v3542
      %v3544 = vpop.f32.mrb[0].mxu0
      %v3545 = vpop.f32.mrb[0].mxu0
      %v3546 = vadd.f32 %v3377, %v3545
      %v3547 = vpop.f32.mrb[0].mxu0
      %3548 = vmatprep.mubr.bf16.mxu0 0
      %3549 = vmatmul.mubr.bf16.gmra.mrb[0].mxu0 %v3411
      %v3550 = vpop.f32.mrb[0].mxu0
      %v3551 = vadd.f32 %v3377, %v3550
      %v3552 = vpop.f32.mrb[0].mxu0
      %v3553 = vpop.f32.mrb[0].mxu0
      %v3554 = vadd.f32 %v3377, %v3553
      %v3555 = vpop.f32.mrb[0].mxu0
      %3556 = vmatprep.mubr.bf16.mxu0 0
      %3557 = vmatmul.mubr.bf16.gmra.mrb[0].mxu0 %v3414
      %v3558 = vpop.f32.mrb[0].mxu0
      %v3559 = vadd.f32 %v3377, %v3558
      %v3560 = vpop.f32.mrb[0].mxu0
      %v3561 = vpop.f32.mrb[0].mxu0
      %v3562 = vadd.f32 %v3377, %v3561
      %v3563 = vpop.f32.mrb[0].mxu0
      %3564 = vmatprep.mubr.bf16.mxu0 0
      %3565 = vmatmul.mubr.bf16.gmra.mrb[0].mxu0 %v3417
      %v3566 = vpop.f32.mrb[0].mxu0
      %v3567 = vadd.f32 %v3377, %v3566
      %v3568 = vpop.f32.mrb[0].mxu0
      %v3569 = vpop.f32.mrb[0].mxu0
      %v3570 = vadd.f32 %v3377, %v3569
      %v3571 = vpop.f32.mrb[0].mxu0
      %3572 = vmatprep.mubr.bf16.mxu0 0
      %3573 = vmatmul.mubr.bf16.gmra.mrb[0].mxu0 %v3420
      %v3574 = vpop.f32.mrb[0].mxu0
      %v3575 = vadd.f32 %v3377, %v3574
      %v3576 = vpop.f32.mrb[0].mxu0
      %v3577 = vpop.f32.mrb[0].mxu0
      %v3578 = vadd.f32 %v3377, %v3577
      %v3579 = vpop.f32.mrb[0].mxu0
      %3580 = vmatprep.mubr.bf16.mxu0 0
      %3581 = vmatmul.mubr.bf16.gmra.mrb[0].mxu0 %v3423
      %v3582 = vpop.f32.mrb[0].mxu0
      %v3583 = vadd.f32 %v3377, %v3582
      %v3584 = vpop.f32.mrb[0].mxu0
      %v3585 = vpop.f32.mrb[0].mxu0
      %v3586 = vadd.f32 %v3377, %v3585
      %v3587 = vpop.f32.mrb[0].mxu0
      %3588 = vmatprep.mubr.bf16.mxu0 0
      %3589 = vmatmul.mubr.bf16.gmra.mrb[0].mxu0 %v3426
      %v3590 = vpop.f32.mrb[0].mxu0
      %v3591 = vadd.f32 %v3377, %v3590
      %v3592 = vpop.f32.mrb[0].mxu0
      %v3593 = vpop.f32.mrb[0].mxu0
      %v3594 = vadd.f32 %v3377, %v3593
      %v3595 = vpop.f32.mrb[0].mxu0
      %3596 = vmatprep.mubr.bf16.mxu0 0
      %3597 = vmatmul.mubr.bf16.gmra.mrb[0].mxu0 %v3429
      %v3598 = vpop.f32.mrb[0].mxu0
      %v3599 = vadd.f32 %v3377, %v3598
      %v3600 = vpop.f32.mrb[0].mxu0
      %v3601 = vpop.f32.mrb[0].mxu0
      %v3602 = vadd.f32 %v3377, %v3601
      %v3603 = vpop.f32.mrb[0].mxu0
      %3604 = vmatprep.mubr.bf16.mxu0 0
      %3605 = vmatmul.mubr.bf16.gmra.mrb[0].mxu0 %v3432
      %v3606 = vpop.f32.mrb[0].mxu0
      %v3607 = vadd.f32 %v3377, %v3606
      %v3608 = vpop.f32.mrb[0].mxu0
      %v3609 = vpop.f32.mrb[0].mxu0
      %v3610 = vadd.f32 %v3377, %v3609
      %v3611 = vpop.f32.mrb[0].mxu0
      %3612 = vmatprep.mubr.bf16.mxu0 0
      %3613 = vmatmul.mubr.bf16.gmra.mrb[0].mxu0 %v3435
      %v3614 = vpop.f32.mrb[0].mxu0
      %v3615 = vadd.f32 %v3377, %v3614
      %v3616 = vpop.f32.mrb[0].mxu0
      %v3617 = vpop.f32.mrb[0].mxu0
      %v3618 = vadd.f32 %v3377, %v3617
      %v3619 = vpop.f32.mrb[0].mxu0
      %3620 = vmatprep.mubr.bf16.mxu0 0
      %3621 = vmatmul.mubr.bf16.gmra.mrb[0].mxu0 %v3438
      %v3622 = vpop.f32.mrb[0].mxu0
      %v3623 = vadd.f32 %v3377, %v3622
      %v3624 = vpop.f32.mrb[0].mxu0
      %v3625 = vpop.f32.mrb[0].mxu0
      %v3626 = vadd.f32 %v3377, %v3625
      %v3627 = vpop.f32.mrb[0].mxu0
      %3628 = vmatprep.mubr.bf16.mxu0 0
      %3629 = vmatmul.mubr.bf16.gmra.mrb[0].mxu0 %v3441
      %v3630 = vpop.f32.mrb[0].mxu0
      %v3631 = vadd.f32 %v3377, %v3630
      %v3632 = vpop.f32.mrb[0].mxu0
      %v3633 = vpop.f32.mrb[0].mxu0
      %v3634 = vadd.f32 %v3377, %v3633
      %v3635 = vpop.f32.mrb[0].mxu0
      %3636 = vmatprep.mubr.bf16.mxu0 0
      %3637 = vmatmul.mubr.bf16.gmra.mrb[0].mxu0 %v3444
      %v3638 = vpop.f32.mrb[0].mxu0
      %v3639 = vadd.f32 %v3377, %v3638
      %v3640 = vpop.f32.mrb[0].mxu0
      %v3641 = vpop.f32.mrb[0].mxu0
      %v3642 = vadd.f32 %v3377, %v3641
      %v3643 = vpop.f32.mrb[0].mxu0
      %3644 = vmatprep.mubr.bf16.mxu0 0
      %3645 = vmatmul.mubr.bf16.gmra.mrb[0].mxu0 %v3447
      %v3646 = vpop.f32.mrb[0].mxu0
      %v3647 = vadd.f32 %v3377, %v3646
      %v3648 = vpop.f32.mrb[0].mxu0
      %v3649 = vpop.f32.mrb[0].mxu0
      %v3650 = vadd.f32 %v3377, %v3649
      %v3651 = vpop.f32.mrb[0].mxu0
      %3652 = vmatprep.mubr.bf16.mxu0 0
      %3653 = vmatmul.mubr.bf16.gmra.mrb[0].mxu0 %v3450
      %v3654 = vpop.f32.mrb[0].mxu0
      %v3655 = vadd.f32 %v3377, %v3654
      %v3656 = vpop.f32.mrb[0].mxu0
      %v3657 = vpop.f32.mrb[0].mxu0
      %v3658 = vadd.f32 %v3377, %v3657
      %v3659 = vpop.f32.mrb[0].mxu0
      %3660 = vmatprep.mubr.bf16.mxu0 0
      %3661 = vmatmul.mubr.bf16.gmra.mrb[0].mxu0 %v3453
      %v3662 = vpop.f32.mrb[0].mxu0
      %v3663 = vadd.f32 %v3377, %v3662
      %v3664 = vpop.f32.mrb[0].mxu0
      %v3665 = vpop.f32.mrb[0].mxu0
      %v3666 = vadd.f32 %v3377, %v3665
      %v3667 = vpop.f32.mrb[0].mxu0
      %3668 = vmatprep.mubr.bf16.mxu0 0
      %3669 = vmatmul.mubr.bf16.gmra.mrb[0].mxu0 %v3456
      %v3670 = vpop.f32.mrb[0].mxu0
      %v3671 = vadd.f32 %v3377, %v3670
      %v3672 = vpop.f32.mrb[0].mxu0
      %v3673 = vpop.f32.mrb[0].mxu0
      %v3674 = vadd.f32 %v3377, %v3673
      %v3675 = vpop.f32.mrb[0].mxu0
      %3676 = vmatprep.mubr.bf16.mxu0 0
      %3677 = vmatmul.mubr.bf16.gmra.mrb[0].mxu0 %v3459
      %v3678 = vpop.f32.mrb[0].mxu0
      %v3679 = vadd.f32 %v3377, %v3678
      %v3680 = vpop.f32.mrb[0].mxu0
      %v3681 = vpop.f32.mrb[0].mxu0
      %v3682 = vadd.f32 %v3377, %v3681
      %v3683 = vpop.f32.mrb[0].mxu0
      %3684 = vmatprep.mubr.bf16.mxu0 0
      %3685 = vmatmul.mubr.bf16.gmra.mrb[0].mxu0 %v3462
      %v3686 = vpop.f32.mrb[0].mxu0
      %v3687 = vadd.f32 %v3377, %v3686
      %v3688 = vpop.f32.mrb[0].mxu0
      %v3689 = vpop.f32.mrb[0].mxu0
      %v3690 = vadd.f32 %v3377, %v3689
      %v3691 = vpop.f32.mrb[0].mxu0
      %3692 = vmatprep.mubr.bf16.mxu0 0
      %3693 = vmatmul.mubr.bf16.gmra.mrb[0].mxu0 %v3465
      %v3694 = vpop.f32.mrb[0].mxu0
      %v3695 = vadd.f32 %v3377, %v3694
      %v3696 = vpop.f32.mrb[0].mxu0
      %v3697 = vpop.f32.mrb[0].mxu0
      %v3698 = vadd.f32 %v3377, %v3697
      %v3699 = vpop.f32.mrb[0].mxu0
      %3700 = vmatprep.mubr.bf16.mxu0 0
      %3701 = vmatmul.mubr.bf16.gmra.mrb[0].mxu0 %v3468
      %v3702 = vpop.f32.mrb[0].mxu0
      %v3703 = vadd.f32 %v3377, %v3702
      %v3704 = vpop.f32.mrb[0].mxu0
      %v3705 = vpop.f32.mrb[0].mxu0
      %v3706 = vadd.f32 %v3377, %v3705
      %v3707 = vpop.f32.mrb[0].mxu0
      %3708 = vmatprep.mubr.bf16.mxu0 0
      %3709 = vmatmul.mubr.bf16.gmra.mrb[0].mxu0 %v3471
      %v3710 = vpop.f32.mrb[0].mxu0
      %v3711 = vadd.f32 %v3377, %v3710
      %v3712 = vpop.f32.mrb[0].mxu0
      %v3713 = vpop.f32.mrb[0].mxu0
      %v3714 = vadd.f32 %v3377, %v3713
      %v3715 = vpop.f32.mrb[0].mxu0
      %3716 = vmatprep.mubr.bf16.mxu0 0
      %3717 = vmatmul.mubr.bf16.gmra.mrb[0].mxu0 %v3474
      %v3718 = vpop.f32.mrb[0].mxu0
      %v3719 = vadd.f32 %v3377, %v3718
      %v3720 = vpop.f32.mrb[0].mxu0
      %v3721 = vpop.f32.mrb[0].mxu0
      %v3722 = vadd.f32 %v3377, %v3721
      %v3723 = vpop.f32.mrb[0].mxu0
      %3724 = vmatprep.mubr.bf16.mxu0 0
      %3725 = vmatmul.mubr.bf16.gmra.mrb[0].mxu0 %v3477
      %v3726 = vpop.f32.mrb[0].mxu0
      %v3727 = vadd.f32 %v3377, %v3726
      %v3728 = vpop.f32.mrb[0].mxu0
      %v3729 = vpop.f32.mrb[0].mxu0
      %v3730 = vadd.f32 %v3377, %v3729
      %v3731 = vpop.f32.mrb[0].mxu0
      %3732 = vmatprep.mubr.bf16.mxu0 0
      %3733 = vmatmul.mubr.bf16.gmra.mrb[0].mxu0 %v3480
      %v3734 = vpop.f32.mrb[0].mxu0
      %v3735 = vadd.f32 %v3377, %v3734
      %v3736 = vpop.f32.mrb[0].mxu0
      %v3737 = vpop.f32.mrb[0].mxu0
      %v3738 = vadd.f32 %v3377, %v3737
      %v3739 = vpop.f32.mrb[0].mxu0
      %3740 = vmatprep.mubr.bf16.mxu0 0
      %3741 = vmatmul.mubr.bf16.gmra.mrb[0].mxu0 %v3483
      %v3742 = vpop.f32.mrb[0].mxu0
      %v3743 = vadd.f32 %v3377, %v3742
      %v3744 = vpop.f32.mrb[0].mxu0
      %v3745 = vpop.f32.mrb[0].mxu0
      %v3746 = vadd.f32 %v3377, %v3745
      %v3747 = vpop.f32.mrb[0].mxu0
      %3748 = vmatprep.mubr.bf16.mxu0 0
      %3749 = vmatmul.mubr.bf16.gmra.mrb[0].mxu0 %v3486
      %v3750 = vpop.f32.mrb[0].mxu0
      %v3751 = vadd.f32 %v3377, %v3750
      %v3752 = vpop.f32.mrb[0].mxu0
      %v3753 = vpop.f32.mrb[0].mxu0
      %v3754 = vadd.f32 %v3377, %v3753
      %v3755 = vpop.f32.mrb[0].mxu0
      %3756 = vmatprep.mubr.bf16.mxu0 0
      %3757 = vmatmul.mubr.bf16.gmra.mrb[0].mxu0 %v3489
      %v3758 = vpop.f32.mrb[0].mxu0
      %v3759 = vadd.f32 %v3377, %v3758
      %v3760 = vpop.f32.mrb[0].mxu0
      %v3761 = vpop.f32.mrb[0].mxu0
      %v3762 = vadd.f32 %v3377, %v3761
      %v3763 = vpop.f32.mrb[0].mxu0
      %3764 = vmatprep.mubr.bf16.mxu0 0
      %3765 = vmatmul.mubr.bf16.gmra.mrb[0].mxu0 %v3492
      %v3766 = vpop.f32.mrb[0].mxu0
      %v3767 = vadd.f32 %v3377, %v3766
      %v3768 = vpop.f32.mrb[0].mxu0
      %v3769 = vpop.f32.mrb[0].mxu0
      %v3770 = vadd.f32 %v3377, %v3769
      %v3771 = vpop.f32.mrb[0].mxu0
      %3772 = vmatprep.mubr.bf16.mxu0 0
      %3773 = vmatmul.mubr.bf16.gmra.mrb[0].mxu0 %v3495
      %v3774 = vpop.f32.mrb[0].mxu0
      %v3775 = vadd.f32 %v3377, %v3774
      %v3776 = vpop.f32.mrb[0].mxu0
      %v3777 = vpop.f32.mrb[0].mxu0
      %v3778 = vadd.f32 %v3377, %v3777
      %v3779 = vpop.f32.mrb[0].mxu0
      %3780 = vmatprep.mubr.bf16.mxu0 0
      %3781 = vmatmul.mubr.bf16.gmra.mrb[0].mxu0 %v3498
      %v3782 = vpop.f32.mrb[0].mxu0
      %v3783 = vadd.f32 %v3377, %v3782
      %v3784 = vpop.f32.mrb[0].mxu0
      %v3785 = vpop.f32.mrb[0].mxu0
      %v3786 = vpop.f32.mrb[0].mxu0
      %3787 = vdwg.mxu0
      %v3788 = vmax.f32 %v3535, 0.0
      %v3789 = vmax.f32 %v3538, 0.0
      %v3790 = vmax.f32 %v3543, 0.0
      %v3791 = vmax.f32 %v3546, 0.0
      %v3792 = vmax.f32 %v3551, 0.0
      %v3793 = vmax.f32 %v3554, 0.0
      %v3794 = vmax.f32 %v3559, 0.0
      %v3795 = vmax.f32 %v3562, 0.0
      %v3796 = vmax.f32 %v3567, 0.0
      %v3797 = vmax.f32 %v3570, 0.0
      %v3798 = vmax.f32 %v3575, 0.0
      %v3799 = vmax.f32 %v3578, 0.0
      %v3800 = vmax.f32 %v3583, 0.0
      %v3801 = vmax.f32 %v3586, 0.0
      %v3802 = vmax.f32 %v3591, 0.0
      %v3803 = vmax.f32 %v3594, 0.0
      %v3804 = vmax.f32 %v3599, 0.0
      %v3805 = vmax.f32 %v3602, 0.0
      %v3806 = vmax.f32 %v3607, 0.0
      %v3807 = vmax.f32 %v3610, 0.0
      %v3808 = vmax.f32 %v3615, 0.0
      %v3809 = vmax.f32 %v3618, 0.0
      %v3810 = vmax.f32 %v3623, 0.0
      %v3811 = vmax.f32 %v3626, 0.0
      %v3812 = vmax.f32 %v3631, 0.0
      %v3813 = vmax.f32 %v3634, 0.0
      %v3814 = vmax.f32 %v3639, 0.0
      %v3815 = vmax.f32 %v3642, 0.0
      %v3816 = vmax.f32 %v3647, 0.0
      %v3817 = vmax.f32 %v3650, 0.0
      %v3818 = vmax.f32 %v3655, 0.0
      %v3819 = vmax.f32 %v3658, 0.0
      %v3820 = vmax.f32 %v3663, 0.0
      %v3821 = vmax.f32 %v3666, 0.0
      %v3822 = vmax.f32 %v3671, 0.0
      %v3823 = vmax.f32 %v3674, 0.0
      %v3824 = vmax.f32 %v3679, 0.0
      %v3825 = vmax.f32 %v3682, 0.0
      %v3826 = vmax.f32 %v3687, 0.0
      %v3827 = vmax.f32 %v3690, 0.0
      %v3828 = vmax.f32 %v3695, 0.0
      %v3829 = vmax.f32 %v3698, 0.0
      %v3830 = vmax.f32 %v3703, 0.0
      %v3831 = vmax.f32 %v3706, 0.0
      %v3832 = vmax.f32 %v3711, 0.0
      %v3833 = vmax.f32 %v3714, 0.0
      %v3834 = vmax.f32 %v3719, 0.0
      %v3835 = vmax.f32 %v3722, 0.0
      %v3836 = vmax.f32 %v3727, 0.0
      %v3837 = vmax.f32 %v3730, 0.0
      %v3838 = vmax.f32 %v3735, 0.0
      %v3839 = vmax.f32 %v3738, 0.0
      %v3840 = vmax.f32 %v3743, 0.0
      %v3841 = vmax.f32 %v3746, 0.0
      %v3842 = vmax.f32 %v3751, 0.0
      %v3843 = vmax.f32 %v3754, 0.0
      %v3844 = vmax.f32 %v3759, 0.0
      %v3845 = vmax.f32 %v3762, 0.0
      %v3846 = vmax.f32 %v3767, 0.0
      %v3847 = vmax.f32 %v3770, 0.0
      %v3848 = vmax.f32 %v3775, 0.0
      %v3849 = vmax.f32 %v3778, 0.0
      %v3850 = vmax.f32 %v3783, 0.0
      %v3851 = vpack.c.bf16 %v3789, %v3788
      %v3852 = vpack.c.bf16 %v3791, %v3790
      %v3853 = vpack.c.bf16 %v3793, %v3792
      %v3854 = vpack.c.bf16 %v3795, %v3794
      %v3855 = vpack.c.bf16 %v3797, %v3796
      %v3856 = vpack.c.bf16 %v3799, %v3798
      %v3857 = vpack.c.bf16 %v3801, %v3800
      %v3858 = vpack.c.bf16 %v3803, %v3802
      %v3859 = vpack.c.bf16 %v3805, %v3804
      %v3860 = vpack.c.bf16 %v3807, %v3806
      %v3861 = vpack.c.bf16 %v3809, %v3808
      %v3862 = vpack.c.bf16 %v3811, %v3810
      %v3863 = vpack.c.bf16 %v3813, %v3812
      %v3864 = vpack.c.bf16 %v3815, %v3814
      %v3865 = vpack.c.bf16 %v3817, %v3816
      %v3866 = vpack.c.bf16 %v3819, %v3818
      %v3867 = vpack.c.bf16 %v3821, %v3820
      %v3868 = vpack.c.bf16 %v3823, %v3822
      %v3869 = vpack.c.bf16 %v3825, %v3824
      %v3870 = vpack.c.bf16 %v3827, %v3826
      %v3871 = vpack.c.bf16 %v3829, %v3828
      %v3872 = vpack.c.bf16 %v3831, %v3830
      %v3873 = vpack.c.bf16 %v3833, %v3832
      %v3874 = vpack.c.bf16 %v3835, %v3834
      %v3875 = vpack.c.bf16 %v3837, %v3836
      %v3876 = vpack.c.bf16 %v3839, %v3838
      %v3877 = vpack.c.bf16 %v3841, %v3840
      %v3878 = vpack.c.bf16 %v3843, %v3842
      %v3879 = vpack.c.bf16 %v3845, %v3844
      %v3880 = vpack.c.bf16 %v3847, %v3846
      %v3881 = vpack.c.bf16 %v3849, %v3848
      %v3882 = vpack.c.bf16 %v3850, %v3850
      %v3883 = vld [vmem:[%s11] sm:$0xf]
      %v3884 = vld [vmem:[%s11 + $0x4] sm:$0xf]
      %v3885 = vld [vmem:[%s11 + $0x8] sm:$0xf]
      %v3886 = vld [vmem:[%s11 + $0xc] sm:$0xf]
      %v3887 = vld [vmem:[%s11 + $0x10] sm:$0xf]
      %v3888 = vld [vmem:[%s11 + $0x14] sm:$0xf]
      %v3889 = vld [vmem:[%s11 + $0x18] sm:$0xf]
      %v3890 = vld [vmem:[%s11 + $0x1c] sm:$0xf]
      %v3891 = vld [vmem:[%s12] sm:$0x1]
      %v3893 = vlaneseq
      %v3894 = vshrl.u32 %v3893, 7
      %v3895 = vsub.s32 0, %v3894
      %v3896 = vrot.slane %v3891, %v3895
      %v3906 = vunpack.c.l.b16 %v3883
      %v3907 = vunpack.c.l.b16 %v3884
      %v3908 = vunpack.c.l.b16 %v3885
      %v3909 = vunpack.c.l.b16 %v3886
      %v3910 = vunpack.c.l.b16 %v3887
      %v3911 = vunpack.c.l.b16 %v3888
      %v3912 = vunpack.c.l.b16 %v3889
      %v3913 = vunpack.c.l.b16 %v3890
      %v3914 = vpack.c.b16 %v3907, %v3906
      %v3915 = vpack.c.b16 %v3909, %v3908
      %v3916 = vpack.c.b16 %v3911, %v3910
      %v3917 = vpack.c.b16 %v3913, %v3912
      %v3923 = vsel %vm3403, %v3851, 0
      %v3926 = vsel %vm3403, %v3852, 0
      %v3929 = vsel %vm3403, %v3853, 0
      %v3932 = vsel %vm3403, %v3854, 0
      %v3935 = vsel %vm3403, %v3855, 0
      %v3938 = vsel %vm3403, %v3856, 0
      %v3941 = vsel %vm3403, %v3857, 0
      %v3944 = vsel %vm3403, %v3858, 0
      %v3947 = vsel %vm3403, %v3859, 0
      %v3950 = vsel %vm3403, %v3860, 0
      %v3953 = vsel %vm3403, %v3861, 0
      %v3956 = vsel %vm3403, %v3862, 0
      %v3959 = vsel %vm3403, %v3863, 0
      %v3962 = vsel %vm3403, %v3864, 0
      %v3965 = vsel %vm3403, %v3865, 0
      %v3968 = vsel %vm3403, %v3866, 0
      %v3971 = vsel %vm3403, %v3867, 0
      %v3974 = vsel %vm3403, %v3868, 0
      %v3977 = vsel %vm3403, %v3869, 0
      %v3980 = vsel %vm3403, %v3870, 0
      %v3983 = vsel %vm3403, %v3871, 0
      %v3986 = vsel %vm3403, %v3872, 0
      %v3989 = vsel %vm3403, %v3873, 0
      %v3992 = vsel %vm3403, %v3874, 0
      %v3995 = vsel %vm3403, %v3875, 0
      %v3998 = vsel %vm3403, %v3876, 0
      %v4001 = vsel %vm3403, %v3877, 0
      %v4004 = vsel %vm3403, %v3878, 0
      %v4007 = vsel %vm3403, %v3879, 0
      %v4010 = vsel %vm3403, %v3880, 0
      %v4013 = vsel %vm3403, %v3881, 0
      %v4016 = vsel %vm3403, %v3882, 0
      %4018 = vmatprep.subr.bf16.mxu0 0
      %4019 = vmatpush1.bf16.msra.mxu0 %v3914
      %4020 = vmatprep.subr.bf16.mxu0 0
      %4021 = vmatpush1.bf16.msra.mxu0 %v3915
      %4022 = vmatprep.subr.bf16.mxu0 0
      %4023 = vmatpush1.bf16.msra.mxu0 %v3916
      %4024 = vmatprep.subr.bf16.mxu0 0
      %4025 = vmatpush1.bf16.msra.mxu0 %v3917
      %4026 = vmatprep.subr.bf16.mxu0 0
      %4027 = vmatpush1.bf16.msra.mxu0 0
      %4028 = vmatprep.subr.bf16.mxu0 0
      %4029 = vmatpush1.bf16.msra.mxu0 0
      %4030 = vmatprep.subr.bf16.mxu0 0
      %4031 = vmatpush1.bf16.msra.mxu0 0
      %4032 = vmatprep.subr.bf16.mxu0 0
      %4033 = vmatpush1.bf16.msra.mxu0 0
      %4034 = vmatprep.subr.bf16.mxu0 0
      %4035 = vmatpush1.bf16.msra.mxu0 0
      %4036 = vmatprep.subr.bf16.mxu0 0
      %4037 = vmatpush1.bf16.msra.mxu0 0
      %4038 = vmatprep.subr.bf16.mxu0 0
      %4039 = vmatpush1.bf16.msra.mxu0 0
      %4040 = vmatprep.subr.bf16.mxu0 0
      %4041 = vmatpush1.bf16.msra.mxu0 0
      %4042 = vmatprep.subr.bf16.mxu0 0
      %4043 = vmatpush1.bf16.msra.mxu0 0
      %4044 = vmatprep.subr.bf16.mxu0 0
      %4045 = vmatpush1.bf16.msra.mxu0 0
      %4046 = vmatprep.subr.bf16.mxu0 0
      %4047 = vmatpush1.bf16.msra.mxu0 0
      %4048 = vmatprep.subr.bf16.mxu0 0
      %4049 = vmatpush1.bf16.msra.mxu0 0
      %4050 = vmatprep.mubr.bf16.mxu0 0
      %4051 = vmatmul.mubr.bf16.gmra.mrb[0].mxu0 %v3923
      %v4052 = vpop.f32.mrb[0].mxu0
      %v4053 = vadd.f32 %v3896, %v4052
      %v4054 = vpop.f32.mrb[0].mxu0
      %v4055 = vpop.f32.mrb[0].mxu0
      %v4056 = vadd.f32 %v3896, %v4055
      %v4057 = vpop.f32.mrb[0].mxu0
      %4058 = vmatprep.mubr.bf16.mxu0 0
      %4059 = vmatmul.mubr.bf16.gmra.mrb[0].mxu0 %v3926
      %v4060 = vpop.f32.mrb[0].mxu0
      %v4061 = vadd.f32 %v3896, %v4060
      %v4062 = vpop.f32.mrb[0].mxu0
      %v4063 = vpop.f32.mrb[0].mxu0
      %v4064 = vadd.f32 %v3896, %v4063
      %v4065 = vpop.f32.mrb[0].mxu0
      %4066 = vmatprep.mubr.bf16.mxu0 0
      %4067 = vmatmul.mubr.bf16.gmra.mrb[0].mxu0 %v3929
      %v4068 = vpop.f32.mrb[0].mxu0
      %v4069 = vadd.f32 %v3896, %v4068
      %v4070 = vpop.f32.mrb[0].mxu0
      %v4071 = vpop.f32.mrb[0].mxu0
      %v4072 = vadd.f32 %v3896, %v4071
      %v4073 = vpop.f32.mrb[0].mxu0
      %4074 = vmatprep.mubr.bf16.mxu0 0
      %4075 = vmatmul.mubr.bf16.gmra.mrb[0].mxu0 %v3932
      %v4076 = vpop.f32.mrb[0].mxu0
      %v4077 = vadd.f32 %v3896, %v4076
      %v4078 = vpop.f32.mrb[0].mxu0
      %v4079 = vpop.f32.mrb[0].mxu0
      %v4080 = vadd.f32 %v3896, %v4079
      %v4081 = vpop.f32.mrb[0].mxu0
      %4082 = vmatprep.mubr.bf16.mxu0 0
      %4083 = vmatmul.mubr.bf16.gmra.mrb[0].mxu0 %v3935
      %v4084 = vpop.f32.mrb[0].mxu0
      %v4085 = vadd.f32 %v3896, %v4084
      %v4086 = vpop.f32.mrb[0].mxu0
      %v4087 = vpop.f32.mrb[0].mxu0
      %v4088 = vadd.f32 %v3896, %v4087
      %v4089 = vpop.f32.mrb[0].mxu0
      %4090 = vmatprep.mubr.bf16.mxu0 0
      %4091 = vmatmul.mubr.bf16.gmra.mrb[0].mxu0 %v3938
      %v4092 = vpop.f32.mrb[0].mxu0
      %v4093 = vadd.f32 %v3896, %v4092
      %v4094 = vpop.f32.mrb[0].mxu0
      %v4095 = vpop.f32.mrb[0].mxu0
      %v4096 = vadd.f32 %v3896, %v4095
      %v4097 = vpop.f32.mrb[0].mxu0
      %4098 = vmatprep.mubr.bf16.mxu0 0
      %4099 = vmatmul.mubr.bf16.gmra.mrb[0].mxu0 %v3941
      %v4100 = vpop.f32.mrb[0].mxu0
      %v4101 = vadd.f32 %v3896, %v4100
      %v4102 = vpop.f32.mrb[0].mxu0
      %v4103 = vpop.f32.mrb[0].mxu0
      %v4104 = vadd.f32 %v3896, %v4103
      %v4105 = vpop.f32.mrb[0].mxu0
      %4106 = vmatprep.mubr.bf16.mxu0 0
      %4107 = vmatmul.mubr.bf16.gmra.mrb[0].mxu0 %v3944
      %v4108 = vpop.f32.mrb[0].mxu0
      %v4109 = vadd.f32 %v3896, %v4108
      %v4110 = vpop.f32.mrb[0].mxu0
      %v4111 = vpop.f32.mrb[0].mxu0
      %v4112 = vadd.f32 %v3896, %v4111
      %v4113 = vpop.f32.mrb[0].mxu0
      %4114 = vmatprep.mubr.bf16.mxu0 0
      %4115 = vmatmul.mubr.bf16.gmra.mrb[0].mxu0 %v3947
      %v4116 = vpop.f32.mrb[0].mxu0
      %v4117 = vadd.f32 %v3896, %v4116
      %v4118 = vpop.f32.mrb[0].mxu0
      %v4119 = vpop.f32.mrb[0].mxu0
      %v4120 = vadd.f32 %v3896, %v4119
      %v4121 = vpop.f32.mrb[0].mxu0
      %4122 = vmatprep.mubr.bf16.mxu0 0
      %4123 = vmatmul.mubr.bf16.gmra.mrb[0].mxu0 %v3950
      %v4124 = vpop.f32.mrb[0].mxu0
      %v4125 = vadd.f32 %v3896, %v4124
      %v4126 = vpop.f32.mrb[0].mxu0
      %v4127 = vpop.f32.mrb[0].mxu0
      %v4128 = vadd.f32 %v3896, %v4127
      %v4129 = vpop.f32.mrb[0].mxu0
      %4130 = vmatprep.mubr.bf16.mxu0 0
      %4131 = vmatmul.mubr.bf16.gmra.mrb[0].mxu0 %v3953
      %v4132 = vpop.f32.mrb[0].mxu0
      %v4133 = vadd.f32 %v3896, %v4132
      %v4134 = vpop.f32.mrb[0].mxu0
      %v4135 = vpop.f32.mrb[0].mxu0
      %v4136 = vadd.f32 %v3896, %v4135
      %v4137 = vpop.f32.mrb[0].mxu0
      %4138 = vmatprep.mubr.bf16.mxu0 0
      %4139 = vmatmul.mubr.bf16.gmra.mrb[0].mxu0 %v3956
      %v4140 = vpop.f32.mrb[0].mxu0
      %v4141 = vadd.f32 %v3896, %v4140
      %v4142 = vpop.f32.mrb[0].mxu0
      %v4143 = vpop.f32.mrb[0].mxu0
      %v4144 = vadd.f32 %v3896, %v4143
      %v4145 = vpop.f32.mrb[0].mxu0
      %4146 = vmatprep.mubr.bf16.mxu0 0
      %4147 = vmatmul.mubr.bf16.gmra.mrb[0].mxu0 %v3959
      %v4148 = vpop.f32.mrb[0].mxu0
      %v4149 = vadd.f32 %v3896, %v4148
      %v4150 = vpop.f32.mrb[0].mxu0
      %v4151 = vpop.f32.mrb[0].mxu0
      %v4152 = vadd.f32 %v3896, %v4151
      %v4153 = vpop.f32.mrb[0].mxu0
      %4154 = vmatprep.mubr.bf16.mxu0 0
      %4155 = vmatmul.mubr.bf16.gmra.mrb[0].mxu0 %v3962
      %v4156 = vpop.f32.mrb[0].mxu0
      %v4157 = vadd.f32 %v3896, %v4156
      %v4158 = vpop.f32.mrb[0].mxu0
      %v4159 = vpop.f32.mrb[0].mxu0
      %v4160 = vadd.f32 %v3896, %v4159
      %v4161 = vpop.f32.mrb[0].mxu0
      %4162 = vmatprep.mubr.bf16.mxu0 0
      %4163 = vmatmul.mubr.bf16.gmra.mrb[0].mxu0 %v3965
      %v4164 = vpop.f32.mrb[0].mxu0
      %v4165 = vadd.f32 %v3896, %v4164
      %v4166 = vpop.f32.mrb[0].mxu0
      %v4167 = vpop.f32.mrb[0].mxu0
      %v4168 = vadd.f32 %v3896, %v4167
      %v4169 = vpop.f32.mrb[0].mxu0
      %4170 = vmatprep.mubr.bf16.mxu0 0
      %4171 = vmatmul.mubr.bf16.gmra.mrb[0].mxu0 %v3968
      %v4172 = vpop.f32.mrb[0].mxu0
      %v4173 = vadd.f32 %v3896, %v4172
      %v4174 = vpop.f32.mrb[0].mxu0
      %v4175 = vpop.f32.mrb[0].mxu0
      %v4176 = vadd.f32 %v3896, %v4175
      %v4177 = vpop.f32.mrb[0].mxu0
      %4178 = vmatprep.mubr.bf16.mxu0 0
      %4179 = vmatmul.mubr.bf16.gmra.mrb[0].mxu0 %v3971
      %v4180 = vpop.f32.mrb[0].mxu0
      %v4181 = vadd.f32 %v3896, %v4180
      %v4182 = vpop.f32.mrb[0].mxu0
      %v4183 = vpop.f32.mrb[0].mxu0
      %v4184 = vadd.f32 %v3896, %v4183
      %v4185 = vpop.f32.mrb[0].mxu0
      %4186 = vmatprep.mubr.bf16.mxu0 0
      %4187 = vmatmul.mubr.bf16.gmra.mrb[0].mxu0 %v3974
      %v4188 = vpop.f32.mrb[0].mxu0
      %v4189 = vadd.f32 %v3896, %v4188
      %v4190 = vpop.f32.mrb[0].mxu0
      %v4191 = vpop.f32.mrb[0].mxu0
      %v4192 = vadd.f32 %v3896, %v4191
      %v4193 = vpop.f32.mrb[0].mxu0
      %4194 = vmatprep.mubr.bf16.mxu0 0
      %4195 = vmatmul.mubr.bf16.gmra.mrb[0].mxu0 %v3977
      %v4196 = vpop.f32.mrb[0].mxu0
      %v4197 = vadd.f32 %v3896, %v4196
      %v4198 = vpop.f32.mrb[0].mxu0
      %v4199 = vpop.f32.mrb[0].mxu0
      %v4200 = vadd.f32 %v3896, %v4199
      %v4201 = vpop.f32.mrb[0].mxu0
      %4202 = vmatprep.mubr.bf16.mxu0 0
      %4203 = vmatmul.mubr.bf16.gmra.mrb[0].mxu0 %v3980
      %v4204 = vpop.f32.mrb[0].mxu0
      %v4205 = vadd.f32 %v3896, %v4204
      %v4206 = vpop.f32.mrb[0].mxu0
      %v4207 = vpop.f32.mrb[0].mxu0
      %v4208 = vadd.f32 %v3896, %v4207
      %v4209 = vpop.f32.mrb[0].mxu0
      %4210 = vmatprep.mubr.bf16.mxu0 0
      %4211 = vmatmul.mubr.bf16.gmra.mrb[0].mxu0 %v3983
      %v4212 = vpop.f32.mrb[0].mxu0
      %v4213 = vadd.f32 %v3896, %v4212
      %v4214 = vpop.f32.mrb[0].mxu0
      %v4215 = vpop.f32.mrb[0].mxu0
      %v4216 = vadd.f32 %v3896, %v4215
      %v4217 = vpop.f32.mrb[0].mxu0
      %4218 = vmatprep.mubr.bf16.mxu0 0
      %4219 = vmatmul.mubr.bf16.gmra.mrb[0].mxu0 %v3986
      %v4220 = vpop.f32.mrb[0].mxu0
      %v4221 = vadd.f32 %v3896, %v4220
      %v4222 = vpop.f32.mrb[0].mxu0
      %v4223 = vpop.f32.mrb[0].mxu0
      %v4224 = vadd.f32 %v3896, %v4223
      %v4225 = vpop.f32.mrb[0].mxu0
      %4226 = vmatprep.mubr.bf16.mxu0 0
      %4227 = vmatmul.mubr.bf16.gmra.mrb[0].mxu0 %v3989
      %v4228 = vpop.f32.mrb[0].mxu0
      %v4229 = vadd.f32 %v3896, %v4228
      %v4230 = vpop.f32.mrb[0].mxu0
      %v4231 = vpop.f32.mrb[0].mxu0
      %v4232 = vadd.f32 %v3896, %v4231
      %v4233 = vpop.f32.mrb[0].mxu0
      %4234 = vmatprep.mubr.bf16.mxu0 0
      %4235 = vmatmul.mubr.bf16.gmra.mrb[0].mxu0 %v3992
      %v4236 = vpop.f32.mrb[0].mxu0
      %v4237 = vadd.f32 %v3896, %v4236
      %v4238 = vpop.f32.mrb[0].mxu0
      %v4239 = vpop.f32.mrb[0].mxu0
      %v4240 = vadd.f32 %v3896, %v4239
      %v4241 = vpop.f32.mrb[0].mxu0
      %4242 = vmatprep.mubr.bf16.mxu0 0
      %4243 = vmatmul.mubr.bf16.gmra.mrb[0].mxu0 %v3995
      %v4244 = vpop.f32.mrb[0].mxu0
      %v4245 = vadd.f32 %v3896, %v4244
      %v4246 = vpop.f32.mrb[0].mxu0
      %v4247 = vpop.f32.mrb[0].mxu0
      %v4248 = vadd.f32 %v3896, %v4247
      %v4249 = vpop.f32.mrb[0].mxu0
      %4250 = vmatprep.mubr.bf16.mxu0 0
      %4251 = vmatmul.mubr.bf16.gmra.mrb[0].mxu0 %v3998
      %v4252 = vpop.f32.mrb[0].mxu0
      %v4253 = vadd.f32 %v3896, %v4252
      %v4254 = vpop.f32.mrb[0].mxu0
      %v4255 = vpop.f32.mrb[0].mxu0
      %v4256 = vadd.f32 %v3896, %v4255
      %v4257 = vpop.f32.mrb[0].mxu0
      %4258 = vmatprep.mubr.bf16.mxu0 0
      %4259 = vmatmul.mubr.bf16.gmra.mrb[0].mxu0 %v4001
      %v4260 = vpop.f32.mrb[0].mxu0
      %v4261 = vadd.f32 %v3896, %v4260
      %v4262 = vpop.f32.mrb[0].mxu0
      %v4263 = vpop.f32.mrb[0].mxu0
      %v4264 = vadd.f32 %v3896, %v4263
      %v4265 = vpop.f32.mrb[0].mxu0
      %4266 = vmatprep.mubr.bf16.mxu0 0
      %4267 = vmatmul.mubr.bf16.gmra.mrb[0].mxu0 %v4004
      %v4268 = vpop.f32.mrb[0].mxu0
      %v4269 = vadd.f32 %v3896, %v4268
      %v4270 = vpop.f32.mrb[0].mxu0
      %v4271 = vpop.f32.mrb[0].mxu0
      %v4272 = vadd.f32 %v3896, %v4271
      %v4273 = vpop.f32.mrb[0].mxu0
      %4274 = vmatprep.mubr.bf16.mxu0 0
      %4275 = vmatmul.mubr.bf16.gmra.mrb[0].mxu0 %v4007
      %v4276 = vpop.f32.mrb[0].mxu0
      %v4277 = vadd.f32 %v3896, %v4276
      %v4278 = vpop.f32.mrb[0].mxu0
      %v4279 = vpop.f32.mrb[0].mxu0
      %v4280 = vadd.f32 %v3896, %v4279
      %v4281 = vpop.f32.mrb[0].mxu0
      %4282 = vmatprep.mubr.bf16.mxu0 0
      %4283 = vmatmul.mubr.bf16.gmra.mrb[0].mxu0 %v4010
      %v4284 = vpop.f32.mrb[0].mxu0
      %v4285 = vadd.f32 %v3896, %v4284
      %v4286 = vpop.f32.mrb[0].mxu0
      %v4287 = vpop.f32.mrb[0].mxu0
      %v4288 = vadd.f32 %v3896, %v4287
      %v4289 = vpop.f32.mrb[0].mxu0
      %4290 = vmatprep.mubr.bf16.mxu0 0
      %4291 = vmatmul.mubr.bf16.gmra.mrb[0].mxu0 %v4013
      %v4292 = vpop.f32.mrb[0].mxu0
      %v4293 = vadd.f32 %v3896, %v4292
      %v4294 = vpop.f32.mrb[0].mxu0
      %v4295 = vpop.f32.mrb[0].mxu0
      %v4296 = vadd.f32 %v3896, %v4295
      %v4297 = vpop.f32.mrb[0].mxu0
      %4298 = vmatprep.mubr.bf16.mxu0 0
      %4299 = vmatmul.mubr.bf16.gmra.mrb[0].mxu0 %v4016
      %v4300 = vpop.f32.mrb[0].mxu0
      %v4301 = vadd.f32 %v3896, %v4300
      %v4302 = vpop.f32.mrb[0].mxu0
      %v4303 = vpop.f32.mrb[0].mxu0
      %v4304 = vpop.f32.mrb[0].mxu0
      %4305 = vdwg.mxu0
      %v4306 = vmax.f32 %v4053, 0.0
      %v4307 = vmax.f32 %v4056, 0.0
      %v4308 = vmax.f32 %v4061, 0.0
      %v4309 = vmax.f32 %v4064, 0.0
      %v4310 = vmax.f32 %v4069, 0.0
      %v4311 = vmax.f32 %v4072, 0.0
      %v4312 = vmax.f32 %v4077, 0.0
      %v4313 = vmax.f32 %v4080, 0.0
      %v4314 = vmax.f32 %v4085, 0.0
      %v4315 = vmax.f32 %v4088, 0.0
      %v4316 = vmax.f32 %v4093, 0.0
      %v4317 = vmax.f32 %v4096, 0.0
      %v4318 = vmax.f32 %v4101, 0.0
      %v4319 = vmax.f32 %v4104, 0.0
      %v4320 = vmax.f32 %v4109, 0.0
      %v4321 = vmax.f32 %v4112, 0.0
      %v4322 = vmax.f32 %v4117, 0.0
      %v4323 = vmax.f32 %v4120, 0.0
      %v4324 = vmax.f32 %v4125, 0.0
      %v4325 = vmax.f32 %v4128, 0.0
      %v4326 = vmax.f32 %v4133, 0.0
      %v4327 = vmax.f32 %v4136, 0.0
      %v4328 = vmax.f32 %v4141, 0.0
      %v4329 = vmax.f32 %v4144, 0.0
      %v4330 = vmax.f32 %v4149, 0.0
      %v4331 = vmax.f32 %v4152, 0.0
      %v4332 = vmax.f32 %v4157, 0.0
      %v4333 = vmax.f32 %v4160, 0.0
      %v4334 = vmax.f32 %v4165, 0.0
      %v4335 = vmax.f32 %v4168, 0.0
      %v4336 = vmax.f32 %v4173, 0.0
      %v4337 = vmax.f32 %v4176, 0.0
      %v4338 = vmax.f32 %v4181, 0.0
      %v4339 = vmax.f32 %v4184, 0.0
      %v4340 = vmax.f32 %v4189, 0.0
      %v4341 = vmax.f32 %v4192, 0.0
      %v4342 = vmax.f32 %v4197, 0.0
      %v4343 = vmax.f32 %v4200, 0.0
      %v4344 = vmax.f32 %v4205, 0.0
      %v4345 = vmax.f32 %v4208, 0.0
      %v4346 = vmax.f32 %v4213, 0.0
      %v4347 = vmax.f32 %v4216, 0.0
      %v4348 = vmax.f32 %v4221, 0.0
      %v4349 = vmax.f32 %v4224, 0.0
      %v4350 = vmax.f32 %v4229, 0.0
      %v4351 = vmax.f32 %v4232, 0.0
      %v4352 = vmax.f32 %v4237, 0.0
      %v4353 = vmax.f32 %v4240, 0.0
      %v4354 = vmax.f32 %v4245, 0.0
      %v4355 = vmax.f32 %v4248, 0.0
      %v4356 = vmax.f32 %v4253, 0.0
      %v4357 = vmax.f32 %v4256, 0.0
      %v4358 = vmax.f32 %v4261, 0.0
      %v4359 = vmax.f32 %v4264, 0.0
      %v4360 = vmax.f32 %v4269, 0.0
      %v4361 = vmax.f32 %v4272, 0.0
      %v4362 = vmax.f32 %v4277, 0.0
      %v4363 = vmax.f32 %v4280, 0.0
      %v4364 = vmax.f32 %v4285, 0.0
      %v4365 = vmax.f32 %v4288, 0.0
      %v4366 = vmax.f32 %v4293, 0.0
      %v4367 = vmax.f32 %v4296, 0.0
      %v4368 = vmax.f32 %v4301, 0.0
      %v4369 = vpack.c.bf16 %v4307, %v4306
      %v4370 = vpack.c.bf16 %v4309, %v4308
      %v4371 = vpack.c.bf16 %v4311, %v4310
      %v4372 = vpack.c.bf16 %v4313, %v4312
      %v4373 = vpack.c.bf16 %v4315, %v4314
      %v4374 = vpack.c.bf16 %v4317, %v4316
      %v4375 = vpack.c.bf16 %v4319, %v4318
      %v4376 = vpack.c.bf16 %v4321, %v4320
      %v4377 = vpack.c.bf16 %v4323, %v4322
      %v4378 = vpack.c.bf16 %v4325, %v4324
      %v4379 = vpack.c.bf16 %v4327, %v4326
      %v4380 = vpack.c.bf16 %v4329, %v4328
      %v4381 = vpack.c.bf16 %v4331, %v4330
      %v4382 = vpack.c.bf16 %v4333, %v4332
      %v4383 = vpack.c.bf16 %v4335, %v4334
      %v4384 = vpack.c.bf16 %v4337, %v4336
      %v4385 = vpack.c.bf16 %v4339, %v4338
      %v4386 = vpack.c.bf16 %v4341, %v4340
      %v4387 = vpack.c.bf16 %v4343, %v4342
      %v4388 = vpack.c.bf16 %v4345, %v4344
      %v4389 = vpack.c.bf16 %v4347, %v4346
      %v4390 = vpack.c.bf16 %v4349, %v4348
      %v4391 = vpack.c.bf16 %v4351, %v4350
      %v4392 = vpack.c.bf16 %v4353, %v4352
      %v4393 = vpack.c.bf16 %v4355, %v4354
      %v4394 = vpack.c.bf16 %v4357, %v4356
      %v4395 = vpack.c.bf16 %v4359, %v4358
      %v4396 = vpack.c.bf16 %v4361, %v4360
      %v4397 = vpack.c.bf16 %v4363, %v4362
      %v4398 = vpack.c.bf16 %v4365, %v4364
      %v4399 = vpack.c.bf16 %v4367, %v4366
      %v4400 = vpack.c.bf16 %v4368, %v4368
      %v4401 = vld [vmem:[%s13] sm:$0xf]
      %v4402 = vld [vmem:[%s13 + $0x4] sm:$0xf]
      %v4403 = vld [vmem:[%s13 + $0x8] sm:$0xf]
      %v4404 = vld [vmem:[%s13 + $0xc] sm:$0xf]
      %v4405 = vld [vmem:[%s13 + $0x10] sm:$0xf]
      %v4406 = vld [vmem:[%s13 + $0x14] sm:$0xf]
      %v4407 = vld [vmem:[%s13 + $0x18] sm:$0xf]
      %v4408 = vld [vmem:[%s13 + $0x1c] sm:$0xf]
      %v4409 = vld [vmem:[%s14] sm:$0x1]
      %v4411 = vlaneseq
      %v4412 = vshrl.u32 %v4411, 7
      %v4413 = vsub.s32 0, %v4412
      %v4414 = vrot.slane %v4409, %v4413
      %v4424 = vunpack.c.l.b16 %v4401
      %v4425 = vunpack.c.l.b16 %v4402
      %v4426 = vunpack.c.l.b16 %v4403
      %v4427 = vunpack.c.l.b16 %v4404
      %v4428 = vunpack.c.l.b16 %v4405
      %v4429 = vunpack.c.l.b16 %v4406
      %v4430 = vunpack.c.l.b16 %v4407
      %v4431 = vunpack.c.l.b16 %v4408
      %v4432 = vpack.c.b16 %v4425, %v4424
      %v4433 = vpack.c.b16 %v4427, %v4426
      %v4434 = vpack.c.b16 %v4429, %v4428
      %v4435 = vpack.c.b16 %v4431, %v4430
      %v4441 = vsel %vm3403, %v4369, 0
      %v4444 = vsel %vm3403, %v4370, 0
      %v4447 = vsel %vm3403, %v4371, 0
      %v4450 = vsel %vm3403, %v4372, 0
      %v4453 = vsel %vm3403, %v4373, 0
      %v4456 = vsel %vm3403, %v4374, 0
      %v4459 = vsel %vm3403, %v4375, 0
      %v4462 = vsel %vm3403, %v4376, 0
      %v4465 = vsel %vm3403, %v4377, 0
      %v4468 = vsel %vm3403, %v4378, 0
      %v4471 = vsel %vm3403, %v4379, 0
      %v4474 = vsel %vm3403, %v4380, 0
      %v4477 = vsel %vm3403, %v4381, 0
      %v4480 = vsel %vm3403, %v4382, 0
      %v4483 = vsel %vm3403, %v4383, 0
      %v4486 = vsel %vm3403, %v4384, 0
      %v4489 = vsel %vm3403, %v4385, 0
      %v4492 = vsel %vm3403, %v4386, 0
      %v4495 = vsel %vm3403, %v4387, 0
      %v4498 = vsel %vm3403, %v4388, 0
      %v4501 = vsel %vm3403, %v4389, 0
      %v4504 = vsel %vm3403, %v4390, 0
      %v4507 = vsel %vm3403, %v4391, 0
      %v4510 = vsel %vm3403, %v4392, 0
      %v4513 = vsel %vm3403, %v4393, 0
      %v4516 = vsel %vm3403, %v4394, 0
      %v4519 = vsel %vm3403, %v4395, 0
      %v4522 = vsel %vm3403, %v4396, 0
      %v4525 = vsel %vm3403, %v4397, 0
      %v4528 = vsel %vm3403, %v4398, 0
      %v4531 = vsel %vm3403, %v4399, 0
      %v4534 = vsel %vm3403, %v4400, 0
      %4536 = vmatprep.subr.bf16.mxu0 0
      %4537 = vmatpush1.bf16.msra.mxu0 %v4432
      %4538 = vmatprep.subr.bf16.mxu0 0
      %4539 = vmatpush1.bf16.msra.mxu0 %v4433
      %4540 = vmatprep.subr.bf16.mxu0 0
      %4541 = vmatpush1.bf16.msra.mxu0 %v4434
      %4542 = vmatprep.subr.bf16.mxu0 0
      %4543 = vmatpush1.bf16.msra.mxu0 %v4435
      %4544 = vmatprep.subr.bf16.mxu0 0
      %4545 = vmatpush1.bf16.msra.mxu0 0
      %4546 = vmatprep.subr.bf16.mxu0 0
      %4547 = vmatpush1.bf16.msra.mxu0 0
      %4548 = vmatprep.subr.bf16.mxu0 0
      %4549 = vmatpush1.bf16.msra.mxu0 0
      %4550 = vmatprep.subr.bf16.mxu0 0
      %4551 = vmatpush1.bf16.msra.mxu0 0
      %4552 = vmatprep.subr.bf16.mxu0 0
      %4553 = vmatpush1.bf16.msra.mxu0 0
      %4554 = vmatprep.subr.bf16.mxu0 0
      %4555 = vmatpush1.bf16.msra.mxu0 0
      %4556 = vmatprep.subr.bf16.mxu0 0
      %4557 = vmatpush1.bf16.msra.mxu0 0
      %4558 = vmatprep.subr.bf16.mxu0 0
      %4559 = vmatpush1.bf16.msra.mxu0 0
      %4560 = vmatprep.subr.bf16.mxu0 0
      %4561 = vmatpush1.bf16.msra.mxu0 0
      %4562 = vmatprep.subr.bf16.mxu0 0
      %4563 = vmatpush1.bf16.msra.mxu0 0
      %4564 = vmatprep.subr.bf16.mxu0 0
      %4565 = vmatpush1.bf16.msra.mxu0 0
      %4566 = vmatprep.subr.bf16.mxu0 0
      %4567 = vmatpush1.bf16.msra.mxu0 0
      %4568 = vmatprep.mubr.bf16.mxu0 0
      %4569 = vmatmul.mubr.bf16.gmra.mrb[0].mxu0 %v4441
      %v4570 = vpop.f32.mrb[0].mxu0
      %v4571 = vadd.f32 %v4414, %v4570
      %v4572 = vpop.f32.mrb[0].mxu0
      %v4573 = vpop.f32.mrb[0].mxu0
      %v4574 = vadd.f32 %v4414, %v4573
      %v4575 = vpop.f32.mrb[0].mxu0
      %4576 = vmatprep.mubr.bf16.mxu0 0
      %4577 = vmatmul.mubr.bf16.gmra.mrb[0].mxu0 %v4444
      %v4578 = vpop.f32.mrb[0].mxu0
      %v4579 = vadd.f32 %v4414, %v4578
      %v4580 = vpop.f32.mrb[0].mxu0
      %v4581 = vpop.f32.mrb[0].mxu0
      %v4582 = vadd.f32 %v4414, %v4581
      %v4583 = vpop.f32.mrb[0].mxu0
      %4584 = vmatprep.mubr.bf16.mxu0 0
      %4585 = vmatmul.mubr.bf16.gmra.mrb[0].mxu0 %v4447
      %v4586 = vpop.f32.mrb[0].mxu0
      %v4587 = vadd.f32 %v4414, %v4586
      %v4588 = vpop.f32.mrb[0].mxu0
      %v4589 = vpop.f32.mrb[0].mxu0
      %v4590 = vadd.f32 %v4414, %v4589
      %v4591 = vpop.f32.mrb[0].mxu0
      %4592 = vmatprep.mubr.bf16.mxu0 0
      %4593 = vmatmul.mubr.bf16.gmra.mrb[0].mxu0 %v4450
      %v4594 = vpop.f32.mrb[0].mxu0
      %v4595 = vadd.f32 %v4414, %v4594
      %v4596 = vpop.f32.mrb[0].mxu0
      %v4597 = vpop.f32.mrb[0].mxu0
      %v4598 = vadd.f32 %v4414, %v4597
      %v4599 = vpop.f32.mrb[0].mxu0
      %4600 = vmatprep.mubr.bf16.mxu0 0
      %4601 = vmatmul.mubr.bf16.gmra.mrb[0].mxu0 %v4453
      %v4602 = vpop.f32.mrb[0].mxu0
      %v4603 = vadd.f32 %v4414, %v4602
      %v4604 = vpop.f32.mrb[0].mxu0
      %v4605 = vpop.f32.mrb[0].mxu0
      %v4606 = vadd.f32 %v4414, %v4605
      %v4607 = vpop.f32.mrb[0].mxu0
      %4608 = vmatprep.mubr.bf16.mxu0 0
      %4609 = vmatmul.mubr.bf16.gmra.mrb[0].mxu0 %v4456
      %v4610 = vpop.f32.mrb[0].mxu0
      %v4611 = vadd.f32 %v4414, %v4610
      %v4612 = vpop.f32.mrb[0].mxu0
      %v4613 = vpop.f32.mrb[0].mxu0
      %v4614 = vadd.f32 %v4414, %v4613
      %v4615 = vpop.f32.mrb[0].mxu0
      %4616 = vmatprep.mubr.bf16.mxu0 0
      %4617 = vmatmul.mubr.bf16.gmra.mrb[0].mxu0 %v4459
      %v4618 = vpop.f32.mrb[0].mxu0
      %v4619 = vadd.f32 %v4414, %v4618
      %v4620 = vpop.f32.mrb[0].mxu0
      %v4621 = vpop.f32.mrb[0].mxu0
      %v4622 = vadd.f32 %v4414, %v4621
      %v4623 = vpop.f32.mrb[0].mxu0
      %4624 = vmatprep.mubr.bf16.mxu0 0
      %4625 = vmatmul.mubr.bf16.gmra.mrb[0].mxu0 %v4462
      %v4626 = vpop.f32.mrb[0].mxu0
      %v4627 = vadd.f32 %v4414, %v4626
      %v4628 = vpop.f32.mrb[0].mxu0
      %v4629 = vpop.f32.mrb[0].mxu0
      %v4630 = vadd.f32 %v4414, %v4629
      %v4631 = vpop.f32.mrb[0].mxu0
      %4632 = vmatprep.mubr.bf16.mxu0 0
      %4633 = vmatmul.mubr.bf16.gmra.mrb[0].mxu0 %v4465
      %v4634 = vpop.f32.mrb[0].mxu0
      %v4635 = vadd.f32 %v4414, %v4634
      %v4636 = vpop.f32.mrb[0].mxu0
      %v4637 = vpop.f32.mrb[0].mxu0
      %v4638 = vadd.f32 %v4414, %v4637
      %v4639 = vpop.f32.mrb[0].mxu0
      %4640 = vmatprep.mubr.bf16.mxu0 0
      %4641 = vmatmul.mubr.bf16.gmra.mrb[0].mxu0 %v4468
      %v4642 = vpop.f32.mrb[0].mxu0
      %v4643 = vadd.f32 %v4414, %v4642
      %v4644 = vpop.f32.mrb[0].mxu0
      %v4645 = vpop.f32.mrb[0].mxu0
      %v4646 = vadd.f32 %v4414, %v4645
      %v4647 = vpop.f32.mrb[0].mxu0
      %4648 = vmatprep.mubr.bf16.mxu0 0
      %4649 = vmatmul.mubr.bf16.gmra.mrb[0].mxu0 %v4471
      %v4650 = vpop.f32.mrb[0].mxu0
      %v4651 = vadd.f32 %v4414, %v4650
      %v4652 = vpop.f32.mrb[0].mxu0
      %v4653 = vpop.f32.mrb[0].mxu0
      %v4654 = vadd.f32 %v4414, %v4653
      %v4655 = vpop.f32.mrb[0].mxu0
      %4656 = vmatprep.mubr.bf16.mxu0 0
      %4657 = vmatmul.mubr.bf16.gmra.mrb[0].mxu0 %v4474
      %v4658 = vpop.f32.mrb[0].mxu0
      %v4659 = vadd.f32 %v4414, %v4658
      %v4660 = vpop.f32.mrb[0].mxu0
      %v4661 = vpop.f32.mrb[0].mxu0
      %v4662 = vadd.f32 %v4414, %v4661
      %v4663 = vpop.f32.mrb[0].mxu0
      %4664 = vmatprep.mubr.bf16.mxu0 0
      %4665 = vmatmul.mubr.bf16.gmra.mrb[0].mxu0 %v4477
      %v4666 = vpop.f32.mrb[0].mxu0
      %v4667 = vadd.f32 %v4414, %v4666
      %v4668 = vpop.f32.mrb[0].mxu0
      %v4669 = vpop.f32.mrb[0].mxu0
      %v4670 = vadd.f32 %v4414, %v4669
      %v4671 = vpop.f32.mrb[0].mxu0
      %4672 = vmatprep.mubr.bf16.mxu0 0
      %4673 = vmatmul.mubr.bf16.gmra.mrb[0].mxu0 %v4480
      %v4674 = vpop.f32.mrb[0].mxu0
      %v4675 = vadd.f32 %v4414, %v4674
      %v4676 = vpop.f32.mrb[0].mxu0
      %v4677 = vpop.f32.mrb[0].mxu0
      %v4678 = vadd.f32 %v4414, %v4677
      %v4679 = vpop.f32.mrb[0].mxu0
      %4680 = vmatprep.mubr.bf16.mxu0 0
      %4681 = vmatmul.mubr.bf16.gmra.mrb[0].mxu0 %v4483
      %v4682 = vpop.f32.mrb[0].mxu0
      %v4683 = vadd.f32 %v4414, %v4682
      %v4684 = vpop.f32.mrb[0].mxu0
      %v4685 = vpop.f32.mrb[0].mxu0
      %v4686 = vadd.f32 %v4414, %v4685
      %v4687 = vpop.f32.mrb[0].mxu0
      %4688 = vmatprep.mubr.bf16.mxu0 0
      %4689 = vmatmul.mubr.bf16.gmra.mrb[0].mxu0 %v4486
      %v4690 = vpop.f32.mrb[0].mxu0
      %v4691 = vadd.f32 %v4414, %v4690
      %v4692 = vpop.f32.mrb[0].mxu0
      %v4693 = vpop.f32.mrb[0].mxu0
      %v4694 = vadd.f32 %v4414, %v4693
      %v4695 = vpop.f32.mrb[0].mxu0
      %4696 = vmatprep.mubr.bf16.mxu0 0
      %4697 = vmatmul.mubr.bf16.gmra.mrb[0].mxu0 %v4489
      %v4698 = vpop.f32.mrb[0].mxu0
      %v4699 = vadd.f32 %v4414, %v4698
      %v4700 = vpop.f32.mrb[0].mxu0
      %v4701 = vpop.f32.mrb[0].mxu0
      %v4702 = vadd.f32 %v4414, %v4701
      %v4703 = vpop.f32.mrb[0].mxu0
      %4704 = vmatprep.mubr.bf16.mxu0 0
      %4705 = vmatmul.mubr.bf16.gmra.mrb[0].mxu0 %v4492
      %v4706 = vpop.f32.mrb[0].mxu0
      %v4707 = vadd.f32 %v4414, %v4706
      %v4708 = vpop.f32.mrb[0].mxu0
      %v4709 = vpop.f32.mrb[0].mxu0
      %v4710 = vadd.f32 %v4414, %v4709
      %v4711 = vpop.f32.mrb[0].mxu0
      %4712 = vmatprep.mubr.bf16.mxu0 0
      %4713 = vmatmul.mubr.bf16.gmra.mrb[0].mxu0 %v4495
      %v4714 = vpop.f32.mrb[0].mxu0
      %v4715 = vadd.f32 %v4414, %v4714
      %v4716 = vpop.f32.mrb[0].mxu0
      %v4717 = vpop.f32.mrb[0].mxu0
      %v4718 = vadd.f32 %v4414, %v4717
      %v4719 = vpop.f32.mrb[0].mxu0
      %4720 = vmatprep.mubr.bf16.mxu0 0
      %4721 = vmatmul.mubr.bf16.gmra.mrb[0].mxu0 %v4498
      %v4722 = vpop.f32.mrb[0].mxu0
      %v4723 = vadd.f32 %v4414, %v4722
      %v4724 = vpop.f32.mrb[0].mxu0
      %v4725 = vpop.f32.mrb[0].mxu0
      %v4726 = vadd.f32 %v4414, %v4725
      %v4727 = vpop.f32.mrb[0].mxu0
      %4728 = vmatprep.mubr.bf16.mxu0 0
      %4729 = vmatmul.mubr.bf16.gmra.mrb[0].mxu0 %v4501
      %v4730 = vpop.f32.mrb[0].mxu0
      %v4731 = vadd.f32 %v4414, %v4730
      %v4732 = vpop.f32.mrb[0].mxu0
      %v4733 = vpop.f32.mrb[0].mxu0
      %v4734 = vadd.f32 %v4414, %v4733
      %v4735 = vpop.f32.mrb[0].mxu0
      %4736 = vmatprep.mubr.bf16.mxu0 0
      %4737 = vmatmul.mubr.bf16.gmra.mrb[0].mxu0 %v4504
      %v4738 = vpop.f32.mrb[0].mxu0
      %v4739 = vadd.f32 %v4414, %v4738
      %v4740 = vpop.f32.mrb[0].mxu0
      %v4741 = vpop.f32.mrb[0].mxu0
      %v4742 = vadd.f32 %v4414, %v4741
      %v4743 = vpop.f32.mrb[0].mxu0
      %4744 = vmatprep.mubr.bf16.mxu0 0
      %4745 = vmatmul.mubr.bf16.gmra.mrb[0].mxu0 %v4507
      %v4746 = vpop.f32.mrb[0].mxu0
      %v4747 = vadd.f32 %v4414, %v4746
      %v4748 = vpop.f32.mrb[0].mxu0
      %v4749 = vpop.f32.mrb[0].mxu0
      %v4750 = vadd.f32 %v4414, %v4749
      %v4751 = vpop.f32.mrb[0].mxu0
      %4752 = vmatprep.mubr.bf16.mxu0 0
      %4753 = vmatmul.mubr.bf16.gmra.mrb[0].mxu0 %v4510
      %v4754 = vpop.f32.mrb[0].mxu0
      %v4755 = vadd.f32 %v4414, %v4754
      %v4756 = vpop.f32.mrb[0].mxu0
      %v4757 = vpop.f32.mrb[0].mxu0
      %v4758 = vadd.f32 %v4414, %v4757
      %v4759 = vpop.f32.mrb[0].mxu0
      %4760 = vmatprep.mubr.bf16.mxu0 0
      %4761 = vmatmul.mubr.bf16.gmra.mrb[0].mxu0 %v4513
      %v4762 = vpop.f32.mrb[0].mxu0
      %v4763 = vadd.f32 %v4414, %v4762
      %v4764 = vpop.f32.mrb[0].mxu0
      %v4765 = vpop.f32.mrb[0].mxu0
      %v4766 = vadd.f32 %v4414, %v4765
      %v4767 = vpop.f32.mrb[0].mxu0
      %4768 = vmatprep.mubr.bf16.mxu0 0
      %4769 = vmatmul.mubr.bf16.gmra.mrb[0].mxu0 %v4516
      %v4770 = vpop.f32.mrb[0].mxu0
      %v4771 = vadd.f32 %v4414, %v4770
      %v4772 = vpop.f32.mrb[0].mxu0
      %v4773 = vpop.f32.mrb[0].mxu0
      %v4774 = vadd.f32 %v4414, %v4773
      %v4775 = vpop.f32.mrb[0].mxu0
      %4776 = vmatprep.mubr.bf16.mxu0 0
      %4777 = vmatmul.mubr.bf16.gmra.mrb[0].mxu0 %v4519
      %v4778 = vpop.f32.mrb[0].mxu0
      %v4779 = vadd.f32 %v4414, %v4778
      %v4780 = vpop.f32.mrb[0].mxu0
      %v4781 = vpop.f32.mrb[0].mxu0
      %v4782 = vadd.f32 %v4414, %v4781
      %v4783 = vpop.f32.mrb[0].mxu0
      %4784 = vmatprep.mubr.bf16.mxu0 0
      %4785 = vmatmul.mubr.bf16.gmra.mrb[0].mxu0 %v4522
      %v4786 = vpop.f32.mrb[0].mxu0
      %v4787 = vadd.f32 %v4414, %v4786
      %v4788 = vpop.f32.mrb[0].mxu0
      %v4789 = vpop.f32.mrb[0].mxu0
      %v4790 = vadd.f32 %v4414, %v4789
      %v4791 = vpop.f32.mrb[0].mxu0
      %4792 = vmatprep.mubr.bf16.mxu0 0
      %4793 = vmatmul.mubr.bf16.gmra.mrb[0].mxu0 %v4525
      %v4794 = vpop.f32.mrb[0].mxu0
      %v4795 = vadd.f32 %v4414, %v4794
      %v4796 = vpop.f32.mrb[0].mxu0
      %v4797 = vpop.f32.mrb[0].mxu0
      %v4798 = vadd.f32 %v4414, %v4797
      %v4799 = vpop.f32.mrb[0].mxu0
      %4800 = vmatprep.mubr.bf16.mxu0 0
      %4801 = vmatmul.mubr.bf16.gmra.mrb[0].mxu0 %v4528
      %v4802 = vpop.f32.mrb[0].mxu0
      %v4803 = vadd.f32 %v4414, %v4802
      %v4804 = vpop.f32.mrb[0].mxu0
      %v4805 = vpop.f32.mrb[0].mxu0
      %v4806 = vadd.f32 %v4414, %v4805
      %v4807 = vpop.f32.mrb[0].mxu0
      %4808 = vmatprep.mubr.bf16.mxu0 0
      %4809 = vmatmul.mubr.bf16.gmra.mrb[0].mxu0 %v4531
      %v4810 = vpop.f32.mrb[0].mxu0
      %v4811 = vadd.f32 %v4414, %v4810
      %v4812 = vpop.f32.mrb[0].mxu0
      %v4813 = vpop.f32.mrb[0].mxu0
      %v4814 = vadd.f32 %v4414, %v4813
      %v4815 = vpop.f32.mrb[0].mxu0
      %4816 = vmatprep.mubr.bf16.mxu0 0
      %4817 = vmatmul.mubr.bf16.gmra.mrb[0].mxu0 %v4534
      %v4818 = vpop.f32.mrb[0].mxu0
      %v4819 = vadd.f32 %v4414, %v4818
      %v4820 = vpop.f32.mrb[0].mxu0
      %v4821 = vpop.f32.mrb[0].mxu0
      %v4822 = vpop.f32.mrb[0].mxu0
      %4823 = vdwg.mxu0
      %v4824 = vmax.f32 %v4571, 0.0
      %v4825 = vmax.f32 %v4574, 0.0
      %v4826 = vmax.f32 %v4579, 0.0
      %v4827 = vmax.f32 %v4582, 0.0
      %v4828 = vmax.f32 %v4587, 0.0
      %v4829 = vmax.f32 %v4590, 0.0
      %v4830 = vmax.f32 %v4595, 0.0
      %v4831 = vmax.f32 %v4598, 0.0
      %v4832 = vmax.f32 %v4603, 0.0
      %v4833 = vmax.f32 %v4606, 0.0
      %v4834 = vmax.f32 %v4611, 0.0
      %v4835 = vmax.f32 %v4614, 0.0
      %v4836 = vmax.f32 %v4619, 0.0
      %v4837 = vmax.f32 %v4622, 0.0
      %v4838 = vmax.f32 %v4627, 0.0
      %v4839 = vmax.f32 %v4630, 0.0
      %v4840 = vmax.f32 %v4635, 0.0
      %v4841 = vmax.f32 %v4638, 0.0
      %v4842 = vmax.f32 %v4643, 0.0
      %v4843 = vmax.f32 %v4646, 0.0
      %v4844 = vmax.f32 %v4651, 0.0
      %v4845 = vmax.f32 %v4654, 0.0
      %v4846 = vmax.f32 %v4659, 0.0
      %v4847 = vmax.f32 %v4662, 0.0
      %v4848 = vmax.f32 %v4667, 0.0
      %v4849 = vmax.f32 %v4670, 0.0
      %v4850 = vmax.f32 %v4675, 0.0
      %v4851 = vmax.f32 %v4678, 0.0
      %v4852 = vmax.f32 %v4683, 0.0
      %v4853 = vmax.f32 %v4686, 0.0
      %v4854 = vmax.f32 %v4691, 0.0
      %v4855 = vmax.f32 %v4694, 0.0
      %v4856 = vmax.f32 %v4699, 0.0
      %v4857 = vmax.f32 %v4702, 0.0
      %v4858 = vmax.f32 %v4707, 0.0
      %v4859 = vmax.f32 %v4710, 0.0
      %v4860 = vmax.f32 %v4715, 0.0
      %v4861 = vmax.f32 %v4718, 0.0
      %v4862 = vmax.f32 %v4723, 0.0
      %v4863 = vmax.f32 %v4726, 0.0
      %v4864 = vmax.f32 %v4731, 0.0
      %v4865 = vmax.f32 %v4734, 0.0
      %v4866 = vmax.f32 %v4739, 0.0
      %v4867 = vmax.f32 %v4742, 0.0
      %v4868 = vmax.f32 %v4747, 0.0
      %v4869 = vmax.f32 %v4750, 0.0
      %v4870 = vmax.f32 %v4755, 0.0
      %v4871 = vmax.f32 %v4758, 0.0
      %v4872 = vmax.f32 %v4763, 0.0
      %v4873 = vmax.f32 %v4766, 0.0
      %v4874 = vmax.f32 %v4771, 0.0
      %v4875 = vmax.f32 %v4774, 0.0
      %v4876 = vmax.f32 %v4779, 0.0
      %v4877 = vmax.f32 %v4782, 0.0
      %v4878 = vmax.f32 %v4787, 0.0
      %v4879 = vmax.f32 %v4790, 0.0
      %v4880 = vmax.f32 %v4795, 0.0
      %v4881 = vmax.f32 %v4798, 0.0
      %v4882 = vmax.f32 %v4803, 0.0
      %v4883 = vmax.f32 %v4806, 0.0
      %v4884 = vmax.f32 %v4811, 0.0
      %v4885 = vmax.f32 %v4814, 0.0
      %v4886 = vmax.f32 %v4819, 0.0
      %v4887 = vpack.c.bf16 %v4825, %v4824
      %v4888 = vpack.c.bf16 %v4827, %v4826
      %v4889 = vpack.c.bf16 %v4829, %v4828
      %v4890 = vpack.c.bf16 %v4831, %v4830
      %v4891 = vpack.c.bf16 %v4833, %v4832
      %v4892 = vpack.c.bf16 %v4835, %v4834
      %v4893 = vpack.c.bf16 %v4837, %v4836
      %v4894 = vpack.c.bf16 %v4839, %v4838
      %v4895 = vpack.c.bf16 %v4841, %v4840
      %v4896 = vpack.c.bf16 %v4843, %v4842
      %v4897 = vpack.c.bf16 %v4845, %v4844
      %v4898 = vpack.c.bf16 %v4847, %v4846
      %v4899 = vpack.c.bf16 %v4849, %v4848
      %v4900 = vpack.c.bf16 %v4851, %v4850
      %v4901 = vpack.c.bf16 %v4853, %v4852
      %v4902 = vpack.c.bf16 %v4855, %v4854
      %v4903 = vpack.c.bf16 %v4857, %v4856
      %v4904 = vpack.c.bf16 %v4859, %v4858
      %v4905 = vpack.c.bf16 %v4861, %v4860
      %v4906 = vpack.c.bf16 %v4863, %v4862
      %v4907 = vpack.c.bf16 %v4865, %v4864
      %v4908 = vpack.c.bf16 %v4867, %v4866
      %v4909 = vpack.c.bf16 %v4869, %v4868
      %v4910 = vpack.c.bf16 %v4871, %v4870
      %v4911 = vpack.c.bf16 %v4873, %v4872
      %v4912 = vpack.c.bf16 %v4875, %v4874
      %v4913 = vpack.c.bf16 %v4877, %v4876
      %v4914 = vpack.c.bf16 %v4879, %v4878
      %v4915 = vpack.c.bf16 %v4881, %v4880
      %v4916 = vpack.c.bf16 %v4883, %v4882
      %v4917 = vpack.c.bf16 %v4885, %v4884
      %v4918 = vpack.c.bf16 %v4886, %v4886
      %v4919 = vld [vmem:[%s15] sm:$0xf]
      %v4920 = vld [vmem:[%s15 + $0x4] sm:$0xf]
      %v4921 = vld [vmem:[%s15 + $0x8] sm:$0xf]
      %v4922 = vld [vmem:[%s15 + $0xc] sm:$0xf]
      %v4923 = vld [vmem:[%s15 + $0x10] sm:$0xf]
      %v4924 = vld [vmem:[%s15 + $0x14] sm:$0xf]
      %v4925 = vld [vmem:[%s15 + $0x18] sm:$0xf]
      %v4926 = vld [vmem:[%s15 + $0x1c] sm:$0xf]
      %v4927 = vld [vmem:[%s16] sm:$0x1]
      %v4929 = vlaneseq
      %v4930 = vshrl.u32 %v4929, 7
      %v4931 = vsub.s32 0, %v4930
      %v4932 = vrot.slane %v4927, %v4931
      %v4942 = vunpack.c.l.b16 %v4919
      %v4943 = vunpack.c.l.b16 %v4920
      %v4944 = vunpack.c.l.b16 %v4921
      %v4945 = vunpack.c.l.b16 %v4922
      %v4946 = vunpack.c.l.b16 %v4923
      %v4947 = vunpack.c.l.b16 %v4924
      %v4948 = vunpack.c.l.b16 %v4925
      %v4949 = vunpack.c.l.b16 %v4926
      %v4950 = vpack.c.b16 %v4943, %v4942
      %v4951 = vpack.c.b16 %v4945, %v4944
      %v4952 = vpack.c.b16 %v4947, %v4946
      %v4953 = vpack.c.b16 %v4949, %v4948
      %v4959 = vsel %vm3403, %v4887, 0
      %v4962 = vsel %vm3403, %v4888, 0
      %v4965 = vsel %vm3403, %v4889, 0
      %v4968 = vsel %vm3403, %v4890, 0
      %v4971 = vsel %vm3403, %v4891, 0
      %v4974 = vsel %vm3403, %v4892, 0
      %v4977 = vsel %vm3403, %v4893, 0
      %v4980 = vsel %vm3403, %v4894, 0
      %v4983 = vsel %vm3403, %v4895, 0
      %v4986 = vsel %vm3403, %v4896, 0
      %v4989 = vsel %vm3403, %v4897, 0
      %v4992 = vsel %vm3403, %v4898, 0
      %v4995 = vsel %vm3403, %v4899, 0
      %v4998 = vsel %vm3403, %v4900, 0
      %v5001 = vsel %vm3403, %v4901, 0
      %v5004 = vsel %vm3403, %v4902, 0
      %v5007 = vsel %vm3403, %v4903, 0
      %v5010 = vsel %vm3403, %v4904, 0
      %v5013 = vsel %vm3403, %v4905, 0
      %v5016 = vsel %vm3403, %v4906, 0
      %v5019 = vsel %vm3403, %v4907, 0
      %v5022 = vsel %vm3403, %v4908, 0
      %v5025 = vsel %vm3403, %v4909, 0
      %v5028 = vsel %vm3403, %v4910, 0
      %v5031 = vsel %vm3403, %v4911, 0
      %v5034 = vsel %vm3403, %v4912, 0
      %v5037 = vsel %vm3403, %v4913, 0
      %v5040 = vsel %vm3403, %v4914, 0
      %v5043 = vsel %vm3403, %v4915, 0
      %v5046 = vsel %vm3403, %v4916, 0
      %v5049 = vsel %vm3403, %v4917, 0
      %v5052 = vsel %vm3403, %v4918, 0
      %5054 = vmatprep.subr.bf16.mxu0 0
      %5055 = vmatpush1.bf16.msra.mxu0 %v4950
      %5056 = vmatprep.subr.bf16.mxu0 0
      %5057 = vmatpush1.bf16.msra.mxu0 %v4951
      %5058 = vmatprep.subr.bf16.mxu0 0
      %5059 = vmatpush1.bf16.msra.mxu0 %v4952
      %5060 = vmatprep.subr.bf16.mxu0 0
      %5061 = vmatpush1.bf16.msra.mxu0 %v4953
      %5062 = vmatprep.subr.bf16.mxu0 0
      %5063 = vmatpush1.bf16.msra.mxu0 0
      %5064 = vmatprep.subr.bf16.mxu0 0
      %5065 = vmatpush1.bf16.msra.mxu0 0
      %5066 = vmatprep.subr.bf16.mxu0 0
      %5067 = vmatpush1.bf16.msra.mxu0 0
      %5068 = vmatprep.subr.bf16.mxu0 0
      %5069 = vmatpush1.bf16.msra.mxu0 0
      %5070 = vmatprep.subr.bf16.mxu0 0
      %5071 = vmatpush1.bf16.msra.mxu0 0
      %5072 = vmatprep.subr.bf16.mxu0 0
      %5073 = vmatpush1.bf16.msra.mxu0 0
      %5074 = vmatprep.subr.bf16.mxu0 0
      %5075 = vmatpush1.bf16.msra.mxu0 0
      %5076 = vmatprep.subr.bf16.mxu0 0
      %5077 = vmatpush1.bf16.msra.mxu0 0
      %5078 = vmatprep.subr.bf16.mxu0 0
      %5079 = vmatpush1.bf16.msra.mxu0 0
      %5080 = vmatprep.subr.bf16.mxu0 0
      %5081 = vmatpush1.bf16.msra.mxu0 0
      %5082 = vmatprep.subr.bf16.mxu0 0
      %5083 = vmatpush1.bf16.msra.mxu0 0
      %5084 = vmatprep.subr.bf16.mxu0 0
      %5085 = vmatpush1.bf16.msra.mxu0 0
      %5086 = vmatprep.mubr.bf16.mxu0 0
      %5087 = vmatmul.mubr.bf16.gmra.mrb[0].mxu0 %v4959
      %v5088 = vpop.f32.mrb[0].mxu0
      %v5089 = vadd.f32 %v4932, %v5088
      %v5090 = vpop.f32.mrb[0].mxu0
      %v5091 = vpop.f32.mrb[0].mxu0
      %v5092 = vadd.f32 %v4932, %v5091
      %v5093 = vpop.f32.mrb[0].mxu0
      %5094 = vmatprep.mubr.bf16.mxu0 0
      %5095 = vmatmul.mubr.bf16.gmra.mrb[0].mxu0 %v4962
      %v5096 = vpop.f32.mrb[0].mxu0
      %v5097 = vadd.f32 %v4932, %v5096
      %v5098 = vpop.f32.mrb[0].mxu0
      %v5099 = vpop.f32.mrb[0].mxu0
      %v5100 = vadd.f32 %v4932, %v5099
      %v5101 = vpop.f32.mrb[0].mxu0
      %5102 = vmatprep.mubr.bf16.mxu0 0
      %5103 = vmatmul.mubr.bf16.gmra.mrb[0].mxu0 %v4965
      %v5104 = vpop.f32.mrb[0].mxu0
      %v5105 = vadd.f32 %v4932, %v5104
      %v5106 = vpop.f32.mrb[0].mxu0
      %v5107 = vpop.f32.mrb[0].mxu0
      %v5108 = vadd.f32 %v4932, %v5107
      %v5109 = vpop.f32.mrb[0].mxu0
      %5110 = vmatprep.mubr.bf16.mxu0 0
      %5111 = vmatmul.mubr.bf16.gmra.mrb[0].mxu0 %v4968
      %v5112 = vpop.f32.mrb[0].mxu0
      %v5113 = vadd.f32 %v4932, %v5112
      %v5114 = vpop.f32.mrb[0].mxu0
      %v5115 = vpop.f32.mrb[0].mxu0
      %v5116 = vadd.f32 %v4932, %v5115
      %v5117 = vpop.f32.mrb[0].mxu0
      %5118 = vmatprep.mubr.bf16.mxu0 0
      %5119 = vmatmul.mubr.bf16.gmra.mrb[0].mxu0 %v4971
      %v5120 = vpop.f32.mrb[0].mxu0
      %v5121 = vadd.f32 %v4932, %v5120
      %v5122 = vpop.f32.mrb[0].mxu0
      %v5123 = vpop.f32.mrb[0].mxu0
      %v5124 = vadd.f32 %v4932, %v5123
      %v5125 = vpop.f32.mrb[0].mxu0
      %5126 = vmatprep.mubr.bf16.mxu0 0
      %5127 = vmatmul.mubr.bf16.gmra.mrb[0].mxu0 %v4974
      %v5128 = vpop.f32.mrb[0].mxu0
      %v5129 = vadd.f32 %v4932, %v5128
      %v5130 = vpop.f32.mrb[0].mxu0
      %v5131 = vpop.f32.mrb[0].mxu0
      %v5132 = vadd.f32 %v4932, %v5131
      %v5133 = vpop.f32.mrb[0].mxu0
      %5134 = vmatprep.mubr.bf16.mxu0 0
      %5135 = vmatmul.mubr.bf16.gmra.mrb[0].mxu0 %v4977
      %v5136 = vpop.f32.mrb[0].mxu0
      %v5137 = vadd.f32 %v4932, %v5136
      %v5138 = vpop.f32.mrb[0].mxu0
      %v5139 = vpop.f32.mrb[0].mxu0
      %v5140 = vadd.f32 %v4932, %v5139
      %v5141 = vpop.f32.mrb[0].mxu0
      %5142 = vmatprep.mubr.bf16.mxu0 0
      %5143 = vmatmul.mubr.bf16.gmra.mrb[0].mxu0 %v4980
      %v5144 = vpop.f32.mrb[0].mxu0
      %v5145 = vadd.f32 %v4932, %v5144
      %v5146 = vpop.f32.mrb[0].mxu0
      %v5147 = vpop.f32.mrb[0].mxu0
      %v5148 = vadd.f32 %v4932, %v5147
      %v5149 = vpop.f32.mrb[0].mxu0
      %5150 = vmatprep.mubr.bf16.mxu0 0
      %5151 = vmatmul.mubr.bf16.gmra.mrb[0].mxu0 %v4983
      %v5152 = vpop.f32.mrb[0].mxu0
      %v5153 = vadd.f32 %v4932, %v5152
      %v5154 = vpop.f32.mrb[0].mxu0
      %v5155 = vpop.f32.mrb[0].mxu0
      %v5156 = vadd.f32 %v4932, %v5155
      %v5157 = vpop.f32.mrb[0].mxu0
      %5158 = vmatprep.mubr.bf16.mxu0 0
      %5159 = vmatmul.mubr.bf16.gmra.mrb[0].mxu0 %v4986
      %v5160 = vpop.f32.mrb[0].mxu0
      %v5161 = vadd.f32 %v4932, %v5160
      %v5162 = vpop.f32.mrb[0].mxu0
      %v5163 = vpop.f32.mrb[0].mxu0
      %v5164 = vadd.f32 %v4932, %v5163
      %v5165 = vpop.f32.mrb[0].mxu0
      %5166 = vmatprep.mubr.bf16.mxu0 0
      %5167 = vmatmul.mubr.bf16.gmra.mrb[0].mxu0 %v4989
      %v5168 = vpop.f32.mrb[0].mxu0
      %v5169 = vadd.f32 %v4932, %v5168
      %v5170 = vpop.f32.mrb[0].mxu0
      %v5171 = vpop.f32.mrb[0].mxu0
      %v5172 = vadd.f32 %v4932, %v5171
      %v5173 = vpop.f32.mrb[0].mxu0
      %5174 = vmatprep.mubr.bf16.mxu0 0
      %5175 = vmatmul.mubr.bf16.gmra.mrb[0].mxu0 %v4992
      %v5176 = vpop.f32.mrb[0].mxu0
      %v5177 = vadd.f32 %v4932, %v5176
      %v5178 = vpop.f32.mrb[0].mxu0
      %v5179 = vpop.f32.mrb[0].mxu0
      %v5180 = vadd.f32 %v4932, %v5179
      %v5181 = vpop.f32.mrb[0].mxu0
      %5182 = vmatprep.mubr.bf16.mxu0 0
      %5183 = vmatmul.mubr.bf16.gmra.mrb[0].mxu0 %v4995
      %v5184 = vpop.f32.mrb[0].mxu0
      %v5185 = vadd.f32 %v4932, %v5184
      %v5186 = vpop.f32.mrb[0].mxu0
      %v5187 = vpop.f32.mrb[0].mxu0
      %v5188 = vadd.f32 %v4932, %v5187
      %v5189 = vpop.f32.mrb[0].mxu0
      %5190 = vmatprep.mubr.bf16.mxu0 0
      %5191 = vmatmul.mubr.bf16.gmra.mrb[0].mxu0 %v4998
      %v5192 = vpop.f32.mrb[0].mxu0
      %v5193 = vadd.f32 %v4932, %v5192
      %v5194 = vpop.f32.mrb[0].mxu0
      %v5195 = vpop.f32.mrb[0].mxu0
      %v5196 = vadd.f32 %v4932, %v5195
      %v5197 = vpop.f32.mrb[0].mxu0
      %5198 = vmatprep.mubr.bf16.mxu0 0
      %5199 = vmatmul.mubr.bf16.gmra.mrb[0].mxu0 %v5001
      %v5200 = vpop.f32.mrb[0].mxu0
      %v5201 = vadd.f32 %v4932, %v5200
      %v5202 = vpop.f32.mrb[0].mxu0
      %v5203 = vpop.f32.mrb[0].mxu0
      %v5204 = vadd.f32 %v4932, %v5203
      %v5205 = vpop.f32.mrb[0].mxu0
      %5206 = vmatprep.mubr.bf16.mxu0 0
      %5207 = vmatmul.mubr.bf16.gmra.mrb[0].mxu0 %v5004
      %v5208 = vpop.f32.mrb[0].mxu0
      %v5209 = vadd.f32 %v4932, %v5208
      %v5210 = vpop.f32.mrb[0].mxu0
      %v5211 = vpop.f32.mrb[0].mxu0
      %v5212 = vadd.f32 %v4932, %v5211
      %v5213 = vpop.f32.mrb[0].mxu0
      %5214 = vmatprep.mubr.bf16.mxu0 0
      %5215 = vmatmul.mubr.bf16.gmra.mrb[0].mxu0 %v5007
      %v5216 = vpop.f32.mrb[0].mxu0
      %v5217 = vadd.f32 %v4932, %v5216
      %v5218 = vpop.f32.mrb[0].mxu0
      %v5219 = vpop.f32.mrb[0].mxu0
      %v5220 = vadd.f32 %v4932, %v5219
      %v5221 = vpop.f32.mrb[0].mxu0
      %5222 = vmatprep.mubr.bf16.mxu0 0
      %5223 = vmatmul.mubr.bf16.gmra.mrb[0].mxu0 %v5010
      %v5224 = vpop.f32.mrb[0].mxu0
      %v5225 = vadd.f32 %v4932, %v5224
      %v5226 = vpop.f32.mrb[0].mxu0
      %v5227 = vpop.f32.mrb[0].mxu0
      %v5228 = vadd.f32 %v4932, %v5227
      %v5229 = vpop.f32.mrb[0].mxu0
      %5230 = vmatprep.mubr.bf16.mxu0 0
      %5231 = vmatmul.mubr.bf16.gmra.mrb[0].mxu0 %v5013
      %v5232 = vpop.f32.mrb[0].mxu0
      %v5233 = vadd.f32 %v4932, %v5232
      %v5234 = vpop.f32.mrb[0].mxu0
      %v5235 = vpop.f32.mrb[0].mxu0
      %v5236 = vadd.f32 %v4932, %v5235
      %v5237 = vpop.f32.mrb[0].mxu0
      %5238 = vmatprep.mubr.bf16.mxu0 0
      %5239 = vmatmul.mubr.bf16.gmra.mrb[0].mxu0 %v5016
      %v5240 = vpop.f32.mrb[0].mxu0
      %v5241 = vadd.f32 %v4932, %v5240
      %v5242 = vpop.f32.mrb[0].mxu0
      %v5243 = vpop.f32.mrb[0].mxu0
      %v5244 = vadd.f32 %v4932, %v5243
      %v5245 = vpop.f32.mrb[0].mxu0
      %5246 = vmatprep.mubr.bf16.mxu0 0
      %5247 = vmatmul.mubr.bf16.gmra.mrb[0].mxu0 %v5019
      %v5248 = vpop.f32.mrb[0].mxu0
      %v5249 = vadd.f32 %v4932, %v5248
      %v5250 = vpop.f32.mrb[0].mxu0
      %v5251 = vpop.f32.mrb[0].mxu0
      %v5252 = vadd.f32 %v4932, %v5251
      %v5253 = vpop.f32.mrb[0].mxu0
      %5254 = vmatprep.mubr.bf16.mxu0 0
      %5255 = vmatmul.mubr.bf16.gmra.mrb[0].mxu0 %v5022
      %v5256 = vpop.f32.mrb[0].mxu0
      %v5257 = vadd.f32 %v4932, %v5256
      %v5258 = vpop.f32.mrb[0].mxu0
      %v5259 = vpop.f32.mrb[0].mxu0
      %v5260 = vadd.f32 %v4932, %v5259
      %v5261 = vpop.f32.mrb[0].mxu0
      %5262 = vmatprep.mubr.bf16.mxu0 0
      %5263 = vmatmul.mubr.bf16.gmra.mrb[0].mxu0 %v5025
      %v5264 = vpop.f32.mrb[0].mxu0
      %v5265 = vadd.f32 %v4932, %v5264
      %v5266 = vpop.f32.mrb[0].mxu0
      %v5267 = vpop.f32.mrb[0].mxu0
      %v5268 = vadd.f32 %v4932, %v5267
      %v5269 = vpop.f32.mrb[0].mxu0
      %5270 = vmatprep.mubr.bf16.mxu0 0
      %5271 = vmatmul.mubr.bf16.gmra.mrb[0].mxu0 %v5028
      %v5272 = vpop.f32.mrb[0].mxu0
      %v5273 = vadd.f32 %v4932, %v5272
      %v5274 = vpop.f32.mrb[0].mxu0
      %v5275 = vpop.f32.mrb[0].mxu0
      %v5276 = vadd.f32 %v4932, %v5275
      %v5277 = vpop.f32.mrb[0].mxu0
      %5278 = vmatprep.mubr.bf16.mxu0 0
      %5279 = vmatmul.mubr.bf16.gmra.mrb[0].mxu0 %v5031
      %v5280 = vpop.f32.mrb[0].mxu0
      %v5281 = vadd.f32 %v4932, %v5280
      %v5282 = vpop.f32.mrb[0].mxu0
      %v5283 = vpop.f32.mrb[0].mxu0
      %v5284 = vadd.f32 %v4932, %v5283
      %v5285 = vpop.f32.mrb[0].mxu0
      %5286 = vmatprep.mubr.bf16.mxu0 0
      %5287 = vmatmul.mubr.bf16.gmra.mrb[0].mxu0 %v5034
      %v5288 = vpop.f32.mrb[0].mxu0
      %v5289 = vadd.f32 %v4932, %v5288
      %v5290 = vpop.f32.mrb[0].mxu0
      %v5291 = vpop.f32.mrb[0].mxu0
      %v5292 = vadd.f32 %v4932, %v5291
      %v5293 = vpop.f32.mrb[0].mxu0
      %5294 = vmatprep.mubr.bf16.mxu0 0
      %5295 = vmatmul.mubr.bf16.gmra.mrb[0].mxu0 %v5037
      %v5296 = vpop.f32.mrb[0].mxu0
      %v5297 = vadd.f32 %v4932, %v5296
      %v5298 = vpop.f32.mrb[0].mxu0
      %v5299 = vpop.f32.mrb[0].mxu0
      %v5300 = vadd.f32 %v4932, %v5299
      %v5301 = vpop.f32.mrb[0].mxu0
      %5302 = vmatprep.mubr.bf16.mxu0 0
      %5303 = vmatmul.mubr.bf16.gmra.mrb[0].mxu0 %v5040
      %v5304 = vpop.f32.mrb[0].mxu0
      %v5305 = vadd.f32 %v4932, %v5304
      %v5306 = vpop.f32.mrb[0].mxu0
      %v5307 = vpop.f32.mrb[0].mxu0
      %v5308 = vadd.f32 %v4932, %v5307
      %v5309 = vpop.f32.mrb[0].mxu0
      %5310 = vmatprep.mubr.bf16.mxu0 0
      %5311 = vmatmul.mubr.bf16.gmra.mrb[0].mxu0 %v5043
      %v5312 = vpop.f32.mrb[0].mxu0
      %v5313 = vadd.f32 %v4932, %v5312
      %v5314 = vpop.f32.mrb[0].mxu0
      %v5315 = vpop.f32.mrb[0].mxu0
      %v5316 = vadd.f32 %v4932, %v5315
      %v5317 = vpop.f32.mrb[0].mxu0
      %5318 = vmatprep.mubr.bf16.mxu0 0
      %5319 = vmatmul.mubr.bf16.gmra.mrb[0].mxu0 %v5046
      %v5320 = vpop.f32.mrb[0].mxu0
      %v5321 = vadd.f32 %v4932, %v5320
      %v5322 = vpop.f32.mrb[0].mxu0
      %v5323 = vpop.f32.mrb[0].mxu0
      %v5324 = vadd.f32 %v4932, %v5323
      %v5325 = vpop.f32.mrb[0].mxu0
      %5326 = vmatprep.mubr.bf16.mxu0 0
      %5327 = vmatmul.mubr.bf16.gmra.mrb[0].mxu0 %v5049
      %v5328 = vpop.f32.mrb[0].mxu0
      %v5329 = vadd.f32 %v4932, %v5328
      %v5330 = vpop.f32.mrb[0].mxu0
      %v5331 = vpop.f32.mrb[0].mxu0
      %v5332 = vadd.f32 %v4932, %v5331
      %v5333 = vpop.f32.mrb[0].mxu0
      %5334 = vmatprep.mubr.bf16.mxu0 0
      %5335 = vmatmul.mubr.bf16.gmra.mrb[0].mxu0 %v5052
      %v5336 = vpop.f32.mrb[0].mxu0
      %v5337 = vadd.f32 %v4932, %v5336
      %v5338 = vpop.f32.mrb[0].mxu0
      %v5339 = vpop.f32.mrb[0].mxu0
      %v5340 = vpop.f32.mrb[0].mxu0
      %5341 = vdwg.mxu0
      %v5342 = vadd.f32 %v5089, 0.0
      %v5343 = vadd.f32 %v5092, 0.0
      %v5344 = vadd.f32 %v5097, 0.0
      %v5345 = vadd.f32 %v5100, 0.0
      %v5346 = vadd.f32 %v5105, 0.0
      %v5347 = vadd.f32 %v5108, 0.0
      %v5348 = vadd.f32 %v5113, 0.0
      %v5349 = vadd.f32 %v5116, 0.0
      %v5350 = vadd.f32 %v5121, 0.0
      %v5351 = vadd.f32 %v5124, 0.0
      %v5352 = vadd.f32 %v5129, 0.0
      %v5353 = vadd.f32 %v5132, 0.0
      %v5354 = vadd.f32 %v5137, 0.0
      %v5355 = vadd.f32 %v5140, 0.0
      %v5356 = vadd.f32 %v5145, 0.0
      %v5357 = vadd.f32 %v5148, 0.0
      %v5358 = vadd.f32 %v5153, 0.0
      %v5359 = vadd.f32 %v5156, 0.0
      %v5360 = vadd.f32 %v5161, 0.0
      %v5361 = vadd.f32 %v5164, 0.0
      %v5362 = vadd.f32 %v5169, 0.0
      %v5363 = vadd.f32 %v5172, 0.0
      %v5364 = vadd.f32 %v5177, 0.0
      %v5365 = vadd.f32 %v5180, 0.0
      %v5366 = vadd.f32 %v5185, 0.0
      %v5367 = vadd.f32 %v5188, 0.0
      %v5368 = vadd.f32 %v5193, 0.0
      %v5369 = vadd.f32 %v5196, 0.0
      %v5370 = vadd.f32 %v5201, 0.0
      %v5371 = vadd.f32 %v5204, 0.0
      %v5372 = vadd.f32 %v5209, 0.0
      %v5373 = vadd.f32 %v5212, 0.0
      %v5374 = vadd.f32 %v5217, 0.0
      %v5375 = vadd.f32 %v5220, 0.0
      %v5376 = vadd.f32 %v5225, 0.0
      %v5377 = vadd.f32 %v5228, 0.0
      %v5378 = vadd.f32 %v5233, 0.0
      %v5379 = vadd.f32 %v5236, 0.0
      %v5380 = vadd.f32 %v5241, 0.0
      %v5381 = vadd.f32 %v5244, 0.0
      %v5382 = vadd.f32 %v5249, 0.0
      %v5383 = vadd.f32 %v5252, 0.0
      %v5384 = vadd.f32 %v5257, 0.0
      %v5385 = vadd.f32 %v5260, 0.0
      %v5386 = vadd.f32 %v5265, 0.0
      %v5387 = vadd.f32 %v5268, 0.0
      %v5388 = vadd.f32 %v5273, 0.0
      %v5389 = vadd.f32 %v5276, 0.0
      %v5390 = vadd.f32 %v5281, 0.0
      %v5391 = vadd.f32 %v5284, 0.0
      %v5392 = vadd.f32 %v5289, 0.0
      %v5393 = vadd.f32 %v5292, 0.0
      %v5394 = vadd.f32 %v5297, 0.0
      %v5395 = vadd.f32 %v5300, 0.0
      %v5396 = vadd.f32 %v5305, 0.0
      %v5397 = vadd.f32 %v5308, 0.0
      %v5398 = vadd.f32 %v5313, 0.0
      %v5399 = vadd.f32 %v5316, 0.0
      %v5400 = vadd.f32 %v5321, 0.0
      %v5401 = vadd.f32 %v5324, 0.0
      %v5402 = vadd.f32 %v5329, 0.0
      %v5403 = vadd.f32 %v5332, 0.0
      %v5404 = vadd.f32 %v5337, 0.0
      %v5405 = vxor.u32 %v5342, 2147483648
      %v5406 = vxor.u32 %v5343, 2147483648
      %v5407 = vxor.u32 %v5344, 2147483648
      %v5408 = vxor.u32 %v5345, 2147483648
      %v5409 = vxor.u32 %v5346, 2147483648
      %v5410 = vxor.u32 %v5347, 2147483648
      %v5411 = vxor.u32 %v5348, 2147483648
      %v5412 = vxor.u32 %v5349, 2147483648
      %v5413 = vxor.u32 %v5350, 2147483648
      %v5414 = vxor.u32 %v5351, 2147483648
      %v5415 = vxor.u32 %v5352, 2147483648
      %v5416 = vxor.u32 %v5353, 2147483648
      %v5417 = vxor.u32 %v5354, 2147483648
      %v5418 = vxor.u32 %v5355, 2147483648
      %v5419 = vxor.u32 %v5356, 2147483648
      %v5420 = vxor.u32 %v5357, 2147483648
      %v5421 = vxor.u32 %v5358, 2147483648
      %v5422 = vxor.u32 %v5359, 2147483648
      %v5423 = vxor.u32 %v5360, 2147483648
      %v5424 = vxor.u32 %v5361, 2147483648
      %v5425 = vxor.u32 %v5362, 2147483648
      %v5426 = vxor.u32 %v5363, 2147483648
      %v5427 = vxor.u32 %v5364, 2147483648
      %v5428 = vxor.u32 %v5365, 2147483648
      %v5429 = vxor.u32 %v5366, 2147483648
      %v5430 = vxor.u32 %v5367, 2147483648
      %v5431 = vxor.u32 %v5368, 2147483648
      %v5432 = vxor.u32 %v5369, 2147483648
      %v5433 = vxor.u32 %v5370, 2147483648
      %v5434 = vxor.u32 %v5371, 2147483648
      %v5435 = vxor.u32 %v5372, 2147483648
      %v5436 = vxor.u32 %v5373, 2147483648
      %v5437 = vxor.u32 %v5374, 2147483648
      %v5438 = vxor.u32 %v5375, 2147483648
      %v5439 = vxor.u32 %v5376, 2147483648
      %v5440 = vxor.u32 %v5377, 2147483648
      %v5441 = vxor.u32 %v5378, 2147483648
      %v5442 = vxor.u32 %v5379, 2147483648
      %v5443 = vxor.u32 %v5380, 2147483648
      %v5444 = vxor.u32 %v5381, 2147483648
      %v5445 = vxor.u32 %v5382, 2147483648
      %v5446 = vxor.u32 %v5383, 2147483648
      %v5447 = vxor.u32 %v5384, 2147483648
      %v5448 = vxor.u32 %v5385, 2147483648
      %v5449 = vxor.u32 %v5386, 2147483648
      %v5450 = vxor.u32 %v5387, 2147483648
      %v5451 = vxor.u32 %v5388, 2147483648
      %v5452 = vxor.u32 %v5389, 2147483648
      %v5453 = vxor.u32 %v5390, 2147483648
      %v5454 = vxor.u32 %v5391, 2147483648
      %v5455 = vxor.u32 %v5392, 2147483648
      %v5456 = vxor.u32 %v5393, 2147483648
      %v5457 = vxor.u32 %v5394, 2147483648
      %v5458 = vxor.u32 %v5395, 2147483648
      %v5459 = vxor.u32 %v5396, 2147483648
      %v5460 = vxor.u32 %v5397, 2147483648
      %v5461 = vxor.u32 %v5398, 2147483648
      %v5462 = vxor.u32 %v5399, 2147483648
      %v5463 = vxor.u32 %v5400, 2147483648
      %v5464 = vxor.u32 %v5401, 2147483648
      %v5465 = vxor.u32 %v5402, 2147483648
      %v5466 = vxor.u32 %v5403, 2147483648
      %v5467 = vxor.u32 %v5404, 2147483648
      %v5468 = vmul.f32 %v5405, 1.442695
      %v5469 = vpow.pop %v5468
      %v5470 = vmul.f32 %v5406, 1.442695
      %v5471 = vpow.pop %v5470
      %v5472 = vmul.f32 %v5407, 1.442695
      %v5473 = vpow.pop %v5472
      %v5474 = vmul.f32 %v5408, 1.442695
      %v5475 = vpow.pop %v5474
      %v5476 = vmul.f32 %v5409, 1.442695
      %v5477 = vpow.pop %v5476
      %v5478 = vmul.f32 %v5410, 1.442695
      %v5479 = vpow.pop %v5478
      %v5480 = vmul.f32 %v5411, 1.442695
      %v5481 = vpow.pop %v5480
      %v5482 = vmul.f32 %v5412, 1.442695
      %v5483 = vpow.pop %v5482
      %v5484 = vmul.f32 %v5413, 1.442695
      %v5485 = vpow.pop %v5484
      %v5486 = vmul.f32 %v5414, 1.442695
      %v5487 = vpow.pop %v5486
      %v5488 = vmul.f32 %v5415, 1.442695
      %v5489 = vpow.pop %v5488
      %v5490 = vmul.f32 %v5416, 1.442695
      %v5491 = vpow.pop %v5490
      %v5492 = vmul.f32 %v5417, 1.442695
      %v5493 = vpow.pop %v5492
      %v5494 = vmul.f32 %v5418, 1.442695
      %v5495 = vpow.pop %v5494
      %v5496 = vmul.f32 %v5419, 1.442695
      %v5497 = vpow.pop %v5496
      %v5498 = vmul.f32 %v5420, 1.442695
      %v5499 = vpow.pop %v5498
      %v5500 = vmul.f32 %v5421, 1.442695
      %v5501 = vpow.pop %v5500
      %v5502 = vmul.f32 %v5422, 1.442695
      %v5503 = vpow.pop %v5502
      %v5504 = vmul.f32 %v5423, 1.442695
      %v5505 = vpow.pop %v5504
      %v5506 = vmul.f32 %v5424, 1.442695
      %v5507 = vpow.pop %v5506
      %v5508 = vmul.f32 %v5425, 1.442695
      %v5509 = vpow.pop %v5508
      %v5510 = vmul.f32 %v5426, 1.442695
      %v5511 = vpow.pop %v5510
      %v5512 = vmul.f32 %v5427, 1.442695
      %v5513 = vpow.pop %v5512
      %v5514 = vmul.f32 %v5428, 1.442695
      %v5515 = vpow.pop %v5514
      %v5516 = vmul.f32 %v5429, 1.442695
      %v5517 = vpow.pop %v5516
      %v5518 = vmul.f32 %v5430, 1.442695
      %v5519 = vpow.pop %v5518
      %v5520 = vmul.f32 %v5431, 1.442695
      %v5521 = vpow.pop %v5520
      %v5522 = vmul.f32 %v5432, 1.442695
      %v5523 = vpow.pop %v5522
      %v5524 = vmul.f32 %v5433, 1.442695
      %v5525 = vpow.pop %v5524
      %v5526 = vmul.f32 %v5434, 1.442695
      %v5527 = vpow.pop %v5526
      %v5528 = vmul.f32 %v5435, 1.442695
      %v5529 = vpow.pop %v5528
      %v5530 = vmul.f32 %v5436, 1.442695
      %v5531 = vpow.pop %v5530
      %v5532 = vmul.f32 %v5437, 1.442695
      %v5533 = vpow.pop %v5532
      %v5534 = vmul.f32 %v5438, 1.442695
      %v5535 = vpow.pop %v5534
      %v5536 = vmul.f32 %v5439, 1.442695
      %v5537 = vpow.pop %v5536
      %v5538 = vmul.f32 %v5440, 1.442695
      %v5539 = vpow.pop %v5538
      %v5540 = vmul.f32 %v5441, 1.442695
      %v5541 = vpow.pop %v5540
      %v5542 = vmul.f32 %v5442, 1.442695
      %v5543 = vpow.pop %v5542
      %v5544 = vmul.f32 %v5443, 1.442695
      %v5545 = vpow.pop %v5544
      %v5546 = vmul.f32 %v5444, 1.442695
      %v5547 = vpow.pop %v5546
      %v5548 = vmul.f32 %v5445, 1.442695
      %v5549 = vpow.pop %v5548
      %v5550 = vmul.f32 %v5446, 1.442695
      %v5551 = vpow.pop %v5550
      %v5552 = vmul.f32 %v5447, 1.442695
      %v5553 = vpow.pop %v5552
      %v5554 = vmul.f32 %v5448, 1.442695
      %v5555 = vpow.pop %v5554
      %v5556 = vmul.f32 %v5449, 1.442695
      %v5557 = vpow.pop %v5556
      %v5558 = vmul.f32 %v5450, 1.442695
      %v5559 = vpow.pop %v5558
      %v5560 = vmul.f32 %v5451, 1.442695
      %v5561 = vpow.pop %v5560
      %v5562 = vmul.f32 %v5452, 1.442695
      %v5563 = vpow.pop %v5562
      %v5564 = vmul.f32 %v5453, 1.442695
      %v5565 = vpow.pop %v5564
      %v5566 = vmul.f32 %v5454, 1.442695
      %v5567 = vpow.pop %v5566
      %v5568 = vmul.f32 %v5455, 1.442695
      %v5569 = vpow.pop %v5568
      %v5570 = vmul.f32 %v5456, 1.442695
      %v5571 = vpow.pop %v5570
      %v5572 = vmul.f32 %v5457, 1.442695
      %v5573 = vpow.pop %v5572
      %v5574 = vmul.f32 %v5458, 1.442695
      %v5575 = vpow.pop %v5574
      %v5576 = vmul.f32 %v5459, 1.442695
      %v5577 = vpow.pop %v5576
      %v5578 = vmul.f32 %v5460, 1.442695
      %v5579 = vpow.pop %v5578
      %v5580 = vmul.f32 %v5461, 1.442695
      %v5581 = vpow.pop %v5580
      %v5582 = vmul.f32 %v5462, 1.442695
      %v5583 = vpow.pop %v5582
      %v5584 = vmul.f32 %v5463, 1.442695
      %v5585 = vpow.pop %v5584
      %v5586 = vmul.f32 %v5464, 1.442695
      %v5587 = vpow.pop %v5586
      %v5588 = vmul.f32 %v5465, 1.442695
      %v5589 = vpow.pop %v5588
      %v5590 = vmul.f32 %v5466, 1.442695
      %v5591 = vpow.pop %v5590
      %v5592 = vmul.f32 %v5467, 1.442695
      %v5593 = vpow.pop %v5592
      %v5594 = vadd.f32 %v5469, 1.0
      %v5595 = vadd.f32 %v5471, 1.0
      %v5596 = vadd.f32 %v5473, 1.0
      %v5597 = vadd.f32 %v5475, 1.0
      %v5598 = vadd.f32 %v5477, 1.0
      %v5599 = vadd.f32 %v5479, 1.0
      %v5600 = vadd.f32 %v5481, 1.0
      %v5601 = vadd.f32 %v5483, 1.0
      %v5602 = vadd.f32 %v5485, 1.0
      %v5603 = vadd.f32 %v5487, 1.0
      %v5604 = vadd.f32 %v5489, 1.0
      %v5605 = vadd.f32 %v5491, 1.0
      %v5606 = vadd.f32 %v5493, 1.0
      %v5607 = vadd.f32 %v5495, 1.0
      %v5608 = vadd.f32 %v5497, 1.0
      %v5609 = vadd.f32 %v5499, 1.0
      %v5610 = vadd.f32 %v5501, 1.0
      %v5611 = vadd.f32 %v5503, 1.0
      %v5612 = vadd.f32 %v5505, 1.0
      %v5613 = vadd.f32 %v5507, 1.0
      %v5614 = vadd.f32 %v5509, 1.0
      %v5615 = vadd.f32 %v5511, 1.0
      %v5616 = vadd.f32 %v5513, 1.0
      %v5617 = vadd.f32 %v5515, 1.0
      %v5618 = vadd.f32 %v5517, 1.0
      %v5619 = vadd.f32 %v5519, 1.0
      %v5620 = vadd.f32 %v5521, 1.0
      %v5621 = vadd.f32 %v5523, 1.0
      %v5622 = vadd.f32 %v5525, 1.0
      %v5623 = vadd.f32 %v5527, 1.0
      %v5624 = vadd.f32 %v5529, 1.0
      %v5625 = vadd.f32 %v5531, 1.0
      %v5626 = vadd.f32 %v5533, 1.0
      %v5627 = vadd.f32 %v5535, 1.0
      %v5628 = vadd.f32 %v5537, 1.0
      %v5629 = vadd.f32 %v5539, 1.0
      %v5630 = vadd.f32 %v5541, 1.0
      %v5631 = vadd.f32 %v5543, 1.0
      %v5632 = vadd.f32 %v5545, 1.0
      %v5633 = vadd.f32 %v5547, 1.0
      %v5634 = vadd.f32 %v5549, 1.0
      %v5635 = vadd.f32 %v5551, 1.0
      %v5636 = vadd.f32 %v5553, 1.0
      %v5637 = vadd.f32 %v5555, 1.0
      %v5638 = vadd.f32 %v5557, 1.0
      %v5639 = vadd.f32 %v5559, 1.0
      %v5640 = vadd.f32 %v5561, 1.0
      %v5641 = vadd.f32 %v5563, 1.0
      %v5642 = vadd.f32 %v5565, 1.0
      %v5643 = vadd.f32 %v5567, 1.0
      %v5644 = vadd.f32 %v5569, 1.0
      %v5645 = vadd.f32 %v5571, 1.0
      %v5646 = vadd.f32 %v5573, 1.0
      %v5647 = vadd.f32 %v5575, 1.0
      %v5648 = vadd.f32 %v5577, 1.0
      %v5649 = vadd.f32 %v5579, 1.0
      %v5650 = vadd.f32 %v5581, 1.0
      %v5651 = vadd.f32 %v5583, 1.0
      %v5652 = vadd.f32 %v5585, 1.0
      %v5653 = vadd.f32 %v5587, 1.0
      %v5654 = vadd.f32 %v5589, 1.0
      %v5655 = vadd.f32 %v5591, 1.0
      %v5656 = vadd.f32 %v5593, 1.0
      %v5657 = vrcp.pop %v5594
      %v5658 = vmul.f32 1.0, %v5657
      %v5659 = vrcp.pop %v5595
      %v5660 = vmul.f32 1.0, %v5659
      %v5661 = vrcp.pop %v5596
      %v5662 = vmul.f32 1.0, %v5661
      %v5663 = vrcp.pop %v5597
      %v5664 = vmul.f32 1.0, %v5663
      %v5665 = vrcp.pop %v5598
      %v5666 = vmul.f32 1.0, %v5665
      %v5667 = vrcp.pop %v5599
      %v5668 = vmul.f32 1.0, %v5667
      %v5669 = vrcp.pop %v5600
      %v5670 = vmul.f32 1.0, %v5669
      %v5671 = vrcp.pop %v5601
      %v5672 = vmul.f32 1.0, %v5671
      %v5673 = vrcp.pop %v5602
      %v5674 = vmul.f32 1.0, %v5673
      %v5675 = vrcp.pop %v5603
      %v5676 = vmul.f32 1.0, %v5675
      %v5677 = vrcp.pop %v5604
      %v5678 = vmul.f32 1.0, %v5677
      %v5679 = vrcp.pop %v5605
      %v5680 = vmul.f32 1.0, %v5679
      %v5681 = vrcp.pop %v5606
      %v5682 = vmul.f32 1.0, %v5681
      %v5683 = vrcp.pop %v5607
      %v5684 = vmul.f32 1.0, %v5683
      %v5685 = vrcp.pop %v5608
      %v5686 = vmul.f32 1.0, %v5685
      %v5687 = vrcp.pop %v5609
      %v5688 = vmul.f32 1.0, %v5687
      %v5689 = vrcp.pop %v5610
      %v5690 = vmul.f32 1.0, %v5689
      %v5691 = vrcp.pop %v5611
      %v5692 = vmul.f32 1.0, %v5691
      %v5693 = vrcp.pop %v5612
      %v5694 = vmul.f32 1.0, %v5693
      %v5695 = vrcp.pop %v5613
      %v5696 = vmul.f32 1.0, %v5695
      %v5697 = vrcp.pop %v5614
      %v5698 = vmul.f32 1.0, %v5697
      %v5699 = vrcp.pop %v5615
      %v5700 = vmul.f32 1.0, %v5699
      %v5701 = vrcp.pop %v5616
      %v5702 = vmul.f32 1.0, %v5701
      %v5703 = vrcp.pop %v5617
      %v5704 = vmul.f32 1.0, %v5703
      %v5705 = vrcp.pop %v5618
      %v5706 = vmul.f32 1.0, %v5705
      %v5707 = vrcp.pop %v5619
      %v5708 = vmul.f32 1.0, %v5707
      %v5709 = vrcp.pop %v5620
      %v5710 = vmul.f32 1.0, %v5709
      %v5711 = vrcp.pop %v5621
      %v5712 = vmul.f32 1.0, %v5711
      %v5713 = vrcp.pop %v5622
      %v5714 = vmul.f32 1.0, %v5713
      %v5715 = vrcp.pop %v5623
      %v5716 = vmul.f32 1.0, %v5715
      %v5717 = vrcp.pop %v5624
      %v5718 = vmul.f32 1.0, %v5717
      %v5719 = vrcp.pop %v5625
      %v5720 = vmul.f32 1.0, %v5719
      %v5721 = vrcp.pop %v5626
      %v5722 = vmul.f32 1.0, %v5721
      %v5723 = vrcp.pop %v5627
      %v5724 = vmul.f32 1.0, %v5723
      %v5725 = vrcp.pop %v5628
      %v5726 = vmul.f32 1.0, %v5725
      %v5727 = vrcp.pop %v5629
      %v5728 = vmul.f32 1.0, %v5727
      %v5729 = vrcp.pop %v5630
      %v5730 = vmul.f32 1.0, %v5729
      %v5731 = vrcp.pop %v5631
      %v5732 = vmul.f32 1.0, %v5731
      %v5733 = vrcp.pop %v5632
      %v5734 = vmul.f32 1.0, %v5733
      %v5735 = vrcp.pop %v5633
      %v5736 = vmul.f32 1.0, %v5735
      %v5737 = vrcp.pop %v5634
      %v5738 = vmul.f32 1.0, %v5737
      %v5739 = vrcp.pop %v5635
      %v5740 = vmul.f32 1.0, %v5739
      %v5741 = vrcp.pop %v5636
      %v5742 = vmul.f32 1.0, %v5741
      %v5743 = vrcp.pop %v5637
      %v5744 = vmul.f32 1.0, %v5743
      %v5745 = vrcp.pop %v5638
      %v5746 = vmul.f32 1.0, %v5745
      %v5747 = vrcp.pop %v5639
      %v5748 = vmul.f32 1.0, %v5747
      %v5749 = vrcp.pop %v5640
      %v5750 = vmul.f32 1.0, %v5749
      %v5751 = vrcp.pop %v5641
      %v5752 = vmul.f32 1.0, %v5751
      %v5753 = vrcp.pop %v5642
      %v5754 = vmul.f32 1.0, %v5753
      %v5755 = vrcp.pop %v5643
      %v5756 = vmul.f32 1.0, %v5755
      %v5757 = vrcp.pop %v5644
      %v5758 = vmul.f32 1.0, %v5757
      %v5759 = vrcp.pop %v5645
      %v5760 = vmul.f32 1.0, %v5759
      %v5761 = vrcp.pop %v5646
      %v5762 = vmul.f32 1.0, %v5761
      %v5763 = vrcp.pop %v5647
      %v5764 = vmul.f32 1.0, %v5763
      %v5765 = vrcp.pop %v5648
      %v5766 = vmul.f32 1.0, %v5765
      %v5767 = vrcp.pop %v5649
      %v5768 = vmul.f32 1.0, %v5767
      %v5769 = vrcp.pop %v5650
      %v5770 = vmul.f32 1.0, %v5769
      %v5771 = vrcp.pop %v5651
      %v5772 = vmul.f32 1.0, %v5771
      %v5773 = vrcp.pop %v5652
      %v5774 = vmul.f32 1.0, %v5773
      %v5775 = vrcp.pop %v5653
      %v5776 = vmul.f32 1.0, %v5775
      %v5777 = vrcp.pop %v5654
      %v5778 = vmul.f32 1.0, %v5777
      %v5779 = vrcp.pop %v5655
      %v5780 = vmul.f32 1.0, %v5779
      %v5781 = vrcp.pop %v5656
      %v5782 = vmul.f32 1.0, %v5781
      %5783 = vst.msk [vmem:[%s616] sm:$0xff] %vm905, %v5658
      %5784 = vst.msk [vmem:[%s616 + $0x8] sm:$0xff] %vm905, %v5660
      %5785 = vst.msk [vmem:[%s616 + $0x10] sm:$0xff] %vm905, %v5662
      %5786 = vst.msk [vmem:[%s616 + $0x18] sm:$0xff] %vm905, %v5664
      %5787 = vst.msk [vmem:[%s616 + $0x20] sm:$0xff] %vm905, %v5666
      %5788 = vst.msk [vmem:[%s616 + $0x28] sm:$0xff] %vm905, %v5668
      %5789 = vst.msk [vmem:[%s616 + $0x30] sm:$0xff] %vm905, %v5670
      %5790 = vst.msk [vmem:[%s616 + $0x38] sm:$0xff] %vm905, %v5672
      %5791 = vst.msk [vmem:[%s616 + $0x40] sm:$0xff] %vm905, %v5674
      %5792 = vst.msk [vmem:[%s616 + $0x48] sm:$0xff] %vm905, %v5676
      %5793 = vst.msk [vmem:[%s616 + $0x50] sm:$0xff] %vm905, %v5678
      %5794 = vst.msk [vmem:[%s616 + $0x58] sm:$0xff] %vm905, %v5680
      %5795 = vst.msk [vmem:[%s616 + $0x60] sm:$0xff] %vm905, %v5682
      %5796 = vst.msk [vmem:[%s616 + $0x68] sm:$0xff] %vm905, %v5684
      %5797 = vst.msk [vmem:[%s616 + $0x70] sm:$0xff] %vm905, %v5686
      %5798 = vst.msk [vmem:[%s616 + $0x78] sm:$0xff] %vm905, %v5688
      %5799 = vst.msk [vmem:[%s616 + $0x80] sm:$0xff] %vm905, %v5690
      %5800 = vst.msk [vmem:[%s616 + $0x88] sm:$0xff] %vm905, %v5692
      %5801 = vst.msk [vmem:[%s616 + $0x90] sm:$0xff] %vm905, %v5694
      %5802 = vst.msk [vmem:[%s616 + $0x98] sm:$0xff] %vm905, %v5696
      %5803 = vst.msk [vmem:[%s616 + $0xa0] sm:$0xff] %vm905, %v5698
      %5804 = vst.msk [vmem:[%s616 + $0xa8] sm:$0xff] %vm905, %v5700
      %5805 = vst.msk [vmem:[%s616 + $0xb0] sm:$0xff] %vm905, %v5702
      %5806 = vst.msk [vmem:[%s616 + $0xb8] sm:$0xff] %vm905, %v5704
      %5807 = vst.msk [vmem:[%s616 + $0xc0] sm:$0xff] %vm905, %v5706
      %5808 = vst.msk [vmem:[%s616 + $0xc8] sm:$0xff] %vm905, %v5708
      %5809 = vst.msk [vmem:[%s616 + $0xd0] sm:$0xff] %vm905, %v5710
      %5810 = vst.msk [vmem:[%s616 + $0xd8] sm:$0xff] %vm905, %v5712
      %5811 = vst.msk [vmem:[%s616 + $0xe0] sm:$0xff] %vm905, %v5714
      %5812 = vst.msk [vmem:[%s616 + $0xe8] sm:$0xff] %vm905, %v5716
      %5813 = vst.msk [vmem:[%s616 + $0xf0] sm:$0xff] %vm905, %v5718
      %5814 = vst.msk [vmem:[%s616 + $0xf8] sm:$0xff] %vm905, %v5720
      %5815 = vst.msk [vmem:[%s616 + $0x100] sm:$0xff] %vm905, %v5722
      %5816 = vst.msk [vmem:[%s616 + $0x108] sm:$0xff] %vm905, %v5724
      %5817 = vst.msk [vmem:[%s616 + $0x110] sm:$0xff] %vm905, %v5726
      %5818 = vst.msk [vmem:[%s616 + $0x118] sm:$0xff] %vm905, %v5728
      %5819 = vst.msk [vmem:[%s616 + $0x120] sm:$0xff] %vm905, %v5730
      %5820 = vst.msk [vmem:[%s616 + $0x128] sm:$0xff] %vm905, %v5732
      %5821 = vst.msk [vmem:[%s616 + $0x130] sm:$0xff] %vm905, %v5734
      %5822 = vst.msk [vmem:[%s616 + $0x138] sm:$0xff] %vm905, %v5736
      %5823 = vst.msk [vmem:[%s616 + $0x140] sm:$0xff] %vm905, %v5738
      %5824 = vst.msk [vmem:[%s616 + $0x148] sm:$0xff] %vm905, %v5740
      %5825 = vst.msk [vmem:[%s616 + $0x150] sm:$0xff] %vm905, %v5742
      %5826 = vst.msk [vmem:[%s616 + $0x158] sm:$0xff] %vm905, %v5744
      %5827 = vst.msk [vmem:[%s616 + $0x160] sm:$0xff] %vm905, %v5746
      %5828 = vst.msk [vmem:[%s616 + $0x168] sm:$0xff] %vm905, %v5748
      %5829 = vst.msk [vmem:[%s616 + $0x170] sm:$0xff] %vm905, %v5750
      %5830 = vst.msk [vmem:[%s616 + $0x178] sm:$0xff] %vm905, %v5752
      %5831 = vst.msk [vmem:[%s616 + $0x180] sm:$0xff] %vm905, %v5754
      %5832 = vst.msk [vmem:[%s616 + $0x188] sm:$0xff] %vm905, %v5756
      %5833 = vst.msk [vmem:[%s616 + $0x190] sm:$0xff] %vm905, %v5758
      %5834 = vst.msk [vmem:[%s616 + $0x198] sm:$0xff] %vm905, %v5760
      %5835 = vst.msk [vmem:[%s616 + $0x1a0] sm:$0xff] %vm905, %v5762
      %5836 = vst.msk [vmem:[%s616 + $0x1a8] sm:$0xff] %vm905, %v5764
      %5837 = vst.msk [vmem:[%s616 + $0x1b0] sm:$0xff] %vm905, %v5766
      %5838 = vst.msk [vmem:[%s616 + $0x1b8] sm:$0xff] %vm905, %v5768
      %5839 = vst.msk [vmem:[%s616 + $0x1c0] sm:$0xff] %vm905, %v5770
      %5840 = vst.msk [vmem:[%s616 + $0x1c8] sm:$0xff] %vm905, %v5772
      %5841 = vst.msk [vmem:[%s616 + $0x1d0] sm:$0xff] %vm905, %v5774
      %5842 = vst.msk [vmem:[%s616 + $0x1d8] sm:$0xff] %vm905, %v5776
      %5843 = vst.msk [vmem:[%s616 + $0x1e0] sm:$0xff] %vm905, %v5778
      %5844 = vst.msk [vmem:[%s616 + $0x1e8] sm:$0xff] %vm905, %v5780
      %5845 = vst.msk [vmem:[%s616 + $0x1f0] sm:$0xff] %vm905, %v5782
      %s5846 = smul.u32 63, %s28
      %p5847 = scmp.lt.s32.totalorder %s5846, 125
      %s5848 = scalar_select %p5847, %s5846, 125
      %s5849 = smul.addr %s5848, 8
      %s5850 = scalar_lea.vmem %s17, %s5849
      // Predicated region
      $region89: #{tpu_custom_call.1} parent=87 // pred_check
        %p5851 = pneg %p423
      $region90: #{tpu_custom_call.1} parent=87 // pred_check_branch
        %5853 = sbr.rel (%p5851) target = $region92
      $region91: #{tpu_custom_call.1} parent=87 // pred_region
        %s5854 = smul.u32 63, %s28
      $region92: #{tpu_custom_call.1} parent=87 // pred_fallthru
        _
    $region88: #{tpu_custom_call.1} parent=5 // pred_fallthru
      _
    %p5855 = scmp.le.s32.totalorder 2, %s23
    // Predicated region
    $region93: #{tpu_custom_call.1} parent=5 // pred_check
      %p5856 = pneg %p5855
    $region94: #{tpu_custom_call.1} parent=5 // pred_check_branch
      %5858 = sbr.rel (%p5856) target = $region96
    $region95: #{tpu_custom_call.1} parent=5 // pred_region
      %s5859 = ssub.s32 %s23, 2
      // Predicated region
      $region97: #{tpu_custom_call.1} parent=95 // pred_check
        %p5860 = pneg %p429
      $region98: #{tpu_custom_call.1} parent=95 // pred_check_branch
        %5862 = sbr.rel (%p5860) target = $region100
      $region99: #{tpu_custom_call.1} parent=95 // pred_region
        %s5863 = smul.u32 63, %s29
        %p5864 = scmp.lt.s32.totalorder %s5863, 125
        %s5865 = scalar_select %p5864, %s5863, 125
        %s5866 = smul.addr %s5865, 8
        %s5867 = scalar_lea.vmem %s17, %s5866
      $region100: #{tpu_custom_call.1} parent=95 // pred_fallthru
        _
    $region96: #{tpu_custom_call.1} parent=5 // pred_fallthru
      _
  $region6: #{tpu_custom_call.1} parent=0 // loop_footer
    %s27 = sadd.s32 1, %s23
  $region7: #{tpu_custom_call.1} parent=0 // loop_footer_branch
    %22 = sbr.rel target = $region3
  $region8: #{tpu_custom_call.1} parent=0 // loop_exit
    _

</llo_original>
